<compile_context>
chip_gen: v5e
topology: v5e:2x2
jax: 0.10.0
libtpu: 0.0.40
codegen_flags: <defaults>
</compile_context>

<pallas_src>
import collections
import functools

import jax
import jax.numpy as jnp
from jax import lax
from jax.experimental import pallas as pl
from jax.experimental.pallas import tpu as pltpu


LayerCfg = collections.namedtuple(
    "LayerCfg", ["stride", "padding", "has_bias", "has_bn", "has_lrelu"])

_BN_EPS = 1e-5
_NEG_SLOPE = 0.2
_VMEM_LIMIT = 32 * 1024 * 1024


def _round_up(x, m):
    return ((x + m - 1) // m) * m


def _pick_tile_m(m, kp, coutp, budget_bytes=12 * 1024 * 1024):
    """Largest M-tile (multiple of 128) whose double-buffered set fits VMEM budget."""
    tm = 128
    for cand in (1024, 512, 256, 128):
        vmem = (2 * cand * kp * 2        # double-buffered bf16 activation tile
                + 2 * cand * coutp * 4   # double-buffered f32 output tile
                + kp * coutp * 2         # VMEM-resident bf16 weights
                + 8 * coutp * 4)         # bias / per-tile stats blocks
        if vmem <= budget_bytes:
            tm = cand
            break
    return min(tm, _round_up(m, 128))


# ---------------------------------------------------------------------------
# Pallas kernel 1: M-tiled matmul (+ optional bias / LeakyReLU / BN partial sums)
# ---------------------------------------------------------------------------
def _make_matmul_kernel(has_bias, has_lrelu, has_stats):
    def kernel(*refs):
        idx = 0
        p_ref = refs[idx]; idx += 1
        w_ref = refs[idx]; idx += 1
        b_ref = None
        if has_bias:
            b_ref = refs[idx]; idx += 1
        o_ref = refs[idx]; idx += 1
        stats_ref = refs[idx] if has_stats else None

        # bf16 x bf16 on the MXU, f32 accumulation.
        acc = jnp.dot(p_ref[...], w_ref[...], preferred_element_type=jnp.float32)
        if has_bias:
            acc = acc + b_ref[...]
        if has_stats:
            # Per-tile partial sums for BatchNorm (pre-activation); reduced
            # across tiles outside the kernel. (BN layers here have no bias, so
            # zero-padded M rows contribute exactly zero to the statistics.)
            s1 = jnp.sum(acc, axis=0, keepdims=True)
            s2 = jnp.sum(acc * acc, axis=0, keepdims=True)
            stats_ref[...] = jnp.concatenate([s1, s2], axis=0)[None]
        if has_lrelu:
            acc = jnp.where(acc >= 0, acc, acc * _NEG_SLOPE)
        o_ref[...] = acc

    return kernel


def _conv_matmul_pallas(patches, wmat, bias, *, has_lrelu, has_stats, tm):
    mp, kp = patches.shape
    coutp = wmat.shape[1]
    grid_m = mp // tm
    has_bias = bias is not None

    in_specs = [
        pl.BlockSpec((tm, kp), lambda i: (i, 0)),      # streamed activation tiles
        pl.BlockSpec((kp, coutp), lambda i: (0, 0)),   # weights stay VMEM-resident
    ]
    args = [patches, wmat]
    if has_bias:
        in_specs.append(pl.BlockSpec((1, coutp), lambda i: (0, 0)))
        args.append(bias)

    out_shape = jax.ShapeDtypeStruct((mp, coutp), jnp.float32)
    out_specs = pl.BlockSpec((tm, coutp), lambda i: (i, 0))
    if has_stats:
        out_shape = (out_shape,
                     jax.ShapeDtypeStruct((grid_m, 2, coutp), jnp.float32))
        out_specs = (out_specs, pl.BlockSpec((1, 2, coutp), lambda i: (i, 0, 0)))

    cost = pl.CostEstimate(
        flops=2 * mp * kp * coutp,
        transcendentals=0,
        bytes_accessed=patches.size * 2 + wmat.size * 2 + mp * coutp * 4)

    return pl.pallas_call(
        _make_matmul_kernel(has_bias, has_lrelu, has_stats),
        out_shape=out_shape,
        grid=(grid_m,),
        in_specs=in_specs,
        out_specs=out_specs,
        compiler_params=pltpu.CompilerParams(
            dimension_semantics=("parallel",),
            vmem_limit_bytes=_VMEM_LIMIT),
        cost_estimate=cost,
    )(*args)


# ---------------------------------------------------------------------------
# Pallas kernel 2: elementwise BatchNorm apply (scale/shift) + LeakyReLU
# ---------------------------------------------------------------------------
def _make_bn_act_kernel(has_lrelu):
    def kernel(x_ref, scale_ref, shift_ref, o_ref):
        y = x_ref[...] * scale_ref[...] + shift_ref[...]
        if has_lrelu:
            y = jnp.where(y >= 0, y, y * _NEG_SLOPE)
        o_ref[...] = y

    return kernel


def _bn_act_pallas(x, scale, shift, *, has_lrelu, tm):
    mp, coutp = x.shape
    grid_m = mp // tm
    cost = pl.CostEstimate(flops=3 * mp * coutp, transcendentals=0,
                           bytes_accessed=2 * mp * coutp * 4)
    return pl.pallas_call(
        _make_bn_act_kernel(has_lrelu),
        out_shape=jax.ShapeDtypeStruct((mp, coutp), jnp.float32),
        grid=(grid_m,),
        in_specs=[pl.BlockSpec((tm, coutp), lambda i: (i, 0)),
                  pl.BlockSpec((1, coutp), lambda i: (0, 0)),
                  pl.BlockSpec((1, coutp), lambda i: (0, 0))],
        out_specs=pl.BlockSpec((tm, coutp), lambda i: (i, 0)),
        compiler_params=pltpu.CompilerParams(
            dimension_semantics=("parallel",),
            vmem_limit_bytes=_VMEM_LIMIT),
        cost_estimate=cost,
    )(x, scale, shift)


# ---------------------------------------------------------------------------
# Glue: padding / im2col / weight reshaping (plain JAX)
# ---------------------------------------------------------------------------
def _im2col(x_nhwc, kh, kw, stride):
    n, hp, wp, c = x_nhwc.shape
    ho = (hp - kh) // stride + 1
    wo = (wp - kw) // stride + 1
    cols = []
    for i in range(kh):
        for j in range(kw):
            cols.append(x_nhwc[:, i:i + stride * ho:stride,
                               j:j + stride * wo:stride, :])      # (N, Ho, Wo, C)
    patches = jnp.stack(cols, axis=3)                             # (N, Ho, Wo, kh*kw, C)
    return patches.reshape(n * ho * wo, kh * kw * c), (n, ho, wo)


def _conv_block(x_nhwc, params, cfg):
    w = params["w"]                                # (Cout, Cin, KH, KW), PyTorch layout
    cout, cin, kh, kw = w.shape
    pad, stride = cfg.padding, cfg.stride

    xp = jnp.pad(x_nhwc, ((0, 0), (pad, pad), (pad, pad), (0, 0)))
    # bf16 im2col patches halve the dominant HBM byte stream; f32 accum in-kernel.
    patches, (n, ho, wo) = _im2col(xp.astype(jnp.bfloat16), kh, kw, stride)
    m, k = patches.shape

    kp = _round_up(k, 128)         # lane-dense contraction dim for the MXU
    coutp = _round_up(cout, 128)   # lane-dense output dim (no masked vst)
    tm = _pick_tile_m(m, kp, coutp)
    mp = _round_up(m, tm)

    patches = jnp.pad(patches, ((0, mp - m), (0, kp - k)))
    wmat = jnp.transpose(w, (2, 3, 1, 0)).reshape(k, cout)
    wmat = jnp.pad(wmat, ((0, kp - k), (0, coutp - cout))).astype(jnp.bfloat16)

    bias = None
    if cfg.has_bias:
        bias = jnp.pad(params["b"].astype(jnp.float32),
                       (0, coutp - cout)).reshape(1, coutp)

    if cfg.has_bn:
        # NOTE: training-mode batch statistics (biased variance over N,H,W),
        # matching the reference; PyTorch eval-mode running stats would differ.
        conv, stats = _conv_matmul_pallas(
            patches, wmat, bias, has_lrelu=False, has_stats=True, tm=tm)
        s1 = jnp.sum(stats[:, 0, :], axis=0)       # (Coutp,)
        s2 = jnp.sum(stats[:, 1, :], axis=0)
        mean = s1 / m
        var = jnp.maximum(s2 / m - mean * mean, 0.0)
        gamma = jnp.pad(params["gamma"].astype(jnp.float32), (0, coutp - cout))
        beta = jnp.pad(params["beta"].astype(jnp.float32), (0, coutp - cout))
        scale = gamma * lax.rsqrt(var + _BN_EPS)
        shift = beta - mean * scale
        out = _bn_act_pallas(conv, scale.reshape(1, coutp), shift.reshape(1, coutp),
                             has_lrelu=cfg.has_lrelu, tm=tm)
    else:
        out = _conv_matmul_pallas(
            patches, wmat, bias, has_lrelu=cfg.has_lrelu, has_stats=False, tm=tm)

    return out[:m, :cout].reshape(n, ho, wo, cout)


# ---------------------------------------------------------------------------
# NLayerDiscriminator: parameter setup + forward
# ---------------------------------------------------------------------------
def init_nlayer_discriminator(key, input_nc, ndf=64, n_layers=3):
    """Deterministic synthetic params + static (hashable) per-layer configs."""
    kw = 4
    keys = iter(jax.random.split(key, 4 * (n_layers + 2)))

    def conv_w(cout, cin):
        return 0.05 * jax.random.normal(next(keys), (cout, cin, kw, kw), jnp.float32)

    cfgs, params = [], []

    # First conv: bias=True, no norm, LeakyReLU(0.2)
    params.append({"w": conv_w(ndf, input_nc),
                   "b": 0.05 * jax.random.normal(next(keys), (ndf,), jnp.float32)})
    cfgs.append(LayerCfg(stride=2, padding=1, has_bias=True, has_bn=False, has_lrelu=True))

    nf_mult = 1
    for nl in range(1, n_layers):
        nf_mult_prev, nf_mult = nf_mult, min(2 ** nl, 8)
        co = ndf * nf_mult
        params.append({"w": conv_w(co, ndf * nf_mult_prev),
                       "gamma": 1.0 + 0.1 * jax.random.normal(next(keys), (co,), jnp.float32),
                       "beta": 0.1 * jax.random.normal(next(keys), (co,), jnp.float32)})
        cfgs.append(LayerCfg(stride=2, padding=1, has_bias=False, has_bn=True, has_lrelu=True))

    nf_mult_prev, nf_mult = nf_mult, min(2 ** n_layers, 8)
    co = ndf * nf_mult
    params.append({"w": conv_w(co, ndf * nf_mult_prev),
                   "gamma": 1.0 + 0.1 * jax.random.normal(next(keys), (co,), jnp.float32),
                   "beta": 0.1 * jax.random.normal(next(keys), (co,), jnp.float32)})
    cfgs.append(LayerCfg(stride=1, padding=1, has_bias=False, has_bn=True, has_lrelu=True))

    # Final conv to 1 channel: bias=True, no norm, no activation
    params.append({"w": conv_w(1, co),
                   "b": 0.05 * jax.random.normal(next(keys), (1,), jnp.float32)})
    cfgs.append(LayerCfg(stride=1, padding=1, has_bias=True, has_bn=False, has_lrelu=False))

    return tuple(cfgs), params


@functools.partial(jax.jit, static_argnums=(2,))
def nlayer_discriminator_forward(x_nchw, params, cfgs):
    x = jnp.transpose(x_nchw.astype(jnp.float32), (0, 2, 3, 1))    # NCHW -> NHWC
    for p, cfg in zip(params, cfgs):
        x = _conv_block(x, p, cfg)
    return jnp.transpose(x, (0, 3, 1, 2))                           # NHWC -> NCHW


# ---------------------------------------------------------------------------
# Pure-JAX f32 reference (for correctness check of the Pallas path)
# ---------------------------------------------------------------------------
def _reference_forward(x_nchw, params, cfgs, eps=_BN_EPS):
    x = x_nchw.astype(jnp.float32)
    for p, cfg in zip(params, cfgs):
        x = lax.conv_general_dilated(
            x, p["w"], window_strides=(cfg.stride, cfg.stride),
            padding=[(cfg.padding, cfg.padding)] * 2,
            dimension_numbers=("NCHW", "OIHW", "NCHW"))
        if cfg.has_bias:
            x = x + p["b"][None, :, None, None]
        if cfg.has_bn:
            mean = jnp.mean(x, axis=(0, 2, 3), keepdims=True)
            var = jnp.mean((x - mean) ** 2, axis=(0, 2, 3), keepdims=True)
            x = (x - mean) * lax.rsqrt(var + eps)
            x = x * p["gamma"][None, :, None, None] + p["beta"][None, :, None, None]
        if cfg.has_lrelu:
            x = jnp.where(x >= 0, x, _NEG_SLOPE * x)
    return x


if __name__ == "__main__":
    key = jax.random.PRNGKey(0)
    k_param, k_input = jax.random.split(key)

    # Small config consistent with the module: input_nc=4, ndf=8, n_layers=3.
    # Spatial must survive 3 stride-2 convs + 2 stride-1 k=4 convs -> use 32.
    N, C, H, W = 2, 4, 32, 32
    x = jax.random.normal(k_input, (N, C, H, W), jnp.float32)

    cfgs, params = init_nlayer_discriminator(k_param, input_nc=C, ndf=8, n_layers=3)

    out = jax.block_until_ready(nlayer_discriminator_forward(x, params, cfgs))
    ref = jax.block_until_ready(_reference_forward(x, params, cfgs))

    assert out.shape == ref.shape, (out.shape, ref.shape)
    # bf16 MXU inputs vs the f32 reference -> relaxed tolerance (f32 accumulation).
    max_err = float(jnp.max(jnp.abs(out - ref)))
    assert jnp.allclose(out, ref, atol=1e-1, rtol=1e-1), max_err

    print("KERNEL_OK")
</pallas_src>

<mosaic_0001>
module attributes {stable_mosaic.version = 11 : i64} {
  func.func @kernel(%arg0: i32, %arg1: memref<512x128xbf16, #tpu.memory_space<vmem>>, %arg2: memref<128x128xbf16, #tpu.memory_space<vmem>>, %arg3: memref<1x128xf32, #tpu.memory_space<vmem>>, %arg4: memref<512x128xf32, #tpu.memory_space<vmem>>) attributes {dimension_semantics = [#tpu.dimension_semantics<parallel>], iteration_bounds = array<i64: 1>, scalar_prefetch = 0 : i64, scratch_operands = 0 : i64, tpu.core_type = #tpu.core_type<tc>, window_params = [{transform_indices = @transform_0, window_bounds = array<i64: 512, 128>}, {pipeline_mode = #tpu.pipeline_mode<synchronous>, transform_indices = @transform_1, window_bounds = array<i64: 128, 128>}, {pipeline_mode = #tpu.pipeline_mode<synchronous>, transform_indices = @transform_2, window_bounds = array<i64: 1, 128>}, {transform_indices = @transform_3, window_bounds = array<i64: 512, 128>}]} {
    %c0 = arith.constant 0 : index
    %c0_0 = arith.constant 0 : index
    %0 = vector.load %arg1[%c0, %c0_0] : memref<512x128xbf16, #tpu.memory_space<vmem>>, vector<512x128xbf16>
    %c0_1 = arith.constant 0 : index
    %c0_2 = arith.constant 0 : index
    %1 = vector.load %arg2[%c0_1, %c0_2] : memref<128x128xbf16, #tpu.memory_space<vmem>>, vector<128x128xbf16>
    %cst = arith.constant dense<0.000000e+00> : vector<512x128xf32>
    %2 = tpu.matmul %0, %1, %cst {dimension_numbers = #tpu.dot_dimension_numbers<[1], [0], [0], [1], [0, 0, 1, 1], [], []>} : vector<512x128xbf16>, vector<128x128xbf16>, vector<512x128xf32> -> vector<512x128xf32>
    %c0_3 = arith.constant 0 : index
    %c0_4 = arith.constant 0 : index
    %3 = vector.load %arg3[%c0_3, %c0_4] : memref<1x128xf32, #tpu.memory_space<vmem>>, vector<1x128xf32>
    %4 = vector.broadcast %3 : vector<1x128xf32> to vector<512x128xf32>
    %5 = arith.addf %2, %4 : vector<512x128xf32>
    %cst_5 = arith.constant 0.000000e+00 : f32
    %6 = vector.broadcast %cst_5 : f32 to vector<512x128xf32>
    %7 = arith.cmpf oge, %5, %6 : vector<512x128xf32>
    %cst_6 = arith.constant 2.000000e-01 : f32
    %8 = vector.broadcast %cst_6 : f32 to vector<512x128xf32>
    %9 = arith.mulf %5, %8 : vector<512x128xf32>
    %10 = arith.select %7, %5, %9 : vector<512x128xi1>, vector<512x128xf32>
    %c0_7 = arith.constant 0 : index
    %c0_8 = arith.constant 0 : index
    %11 = vector.load %arg4[%c0_7, %c0_8] : memref<512x128xf32, #tpu.memory_space<vmem>>, vector<512x128xf32>
    tpu.vector_store %arg4[%c0_7, %c0_8], %10 {strides = array<i32>} : memref<512x128xf32, #tpu.memory_space<vmem>>, vector<512x128xf32>,
    return
  }
  func.func @transform_0(%arg0: i32) -> (i32, i32) {
    %c0_i32 = arith.constant 0 : i32
    %c0_i32_0 = arith.constant 0 : i32
    return %arg0, %c0_i32 : i32, i32
  }
  func.func @transform_1(%arg0: i32) -> (i32, i32) {
    %c0_i32 = arith.constant 0 : i32
    %c0_i32_0 = arith.constant 0 : i32
    %c0_i32_1 = arith.constant 0 : i32
    return %c0_i32, %c0_i32_0 : i32, i32
  }
  func.func @transform_2(%arg0: i32) -> (i32, i32) {
    %c0_i32 = arith.constant 0 : i32
    %c0_i32_0 = arith.constant 0 : i32
    %c0_i32_1 = arith.constant 0 : i32
    return %c0_i32, %c0_i32_0 : i32, i32
  }
  func.func @transform_3(%arg0: i32) -> (i32, i32) {
    %c0_i32 = arith.constant 0 : i32
    %c0_i32_0 = arith.constant 0 : i32
    return %arg0, %c0_i32 : i32, i32
  }
}

module attributes {stable_mosaic.version = 11 : i64} {
  func.func @kernel(%arg0: i32, %arg1: memref<128x128xbf16, #tpu.memory_space<vmem>>, %arg2: memref<128x128xbf16, #tpu.memory_space<vmem>>, %arg3: memref<128x128xf32, #tpu.memory_space<vmem>>, %arg4: memref<1x2x128xf32, #tpu.memory_space<vmem>>) attributes {dimension_semantics = [#tpu.dimension_semantics<parallel>], iteration_bounds = array<i64: 1>, scalar_prefetch = 0 : i64, scratch_operands = 0 : i64, tpu.core_type = #tpu.core_type<tc>, window_params = [{transform_indices = @transform_0, window_bounds = array<i64: 128, 128>}, {pipeline_mode = #tpu.pipeline_mode<synchronous>, transform_indices = @transform_1, window_bounds = array<i64: 128, 128>}, {transform_indices = @transform_2, window_bounds = array<i64: 128, 128>}, {transform_indices = @transform_3, window_bounds = array<i64: 1, 2, 128>}]} {
    %c0 = arith.constant 0 : index
    %c0_0 = arith.constant 0 : index
    %0 = vector.load %arg1[%c0, %c0_0] : memref<128x128xbf16, #tpu.memory_space<vmem>>, vector<128x128xbf16>
    %c0_1 = arith.constant 0 : index
    %c0_2 = arith.constant 0 : index
    %1 = vector.load %arg2[%c0_1, %c0_2] : memref<128x128xbf16, #tpu.memory_space<vmem>>, vector<128x128xbf16>
    %cst = arith.constant dense<0.000000e+00> : vector<128x128xf32>
    %2 = tpu.matmul %0, %1, %cst {dimension_numbers = #tpu.dot_dimension_numbers<[1], [0], [0], [1], [0, 0, 1, 1], [], []>} : vector<128x128xbf16>, vector<128x128xbf16>, vector<128x128xf32> -> vector<128x128xf32>
    %cst_3 = arith.constant dense<0.000000e+00> : vector<128xf32>
    %3 = vector.multi_reduction <add>, %2, %cst_3 [0] : vector<128x128xf32> to vector<128xf32>
    %4 = vector.shape_cast %3 : vector<128xf32> to vector<1x128xf32>
    %5 = arith.mulf %2, %2 : vector<128x128xf32>
    %cst_4 = arith.constant dense<0.000000e+00> : vector<128xf32>
    %6 = vector.multi_reduction <add>, %5, %cst_4 [0] : vector<128x128xf32> to vector<128xf32>
    %7 = vector.shape_cast %6 : vector<128xf32> to vector<1x128xf32>
    %8 = tpu.concatenate %4, %7 in 0 : vector<1x128xf32>, vector<1x128xf32> -> vector<2x128xf32>
    %9 = vector.shape_cast %8 : vector<2x128xf32> to vector<1x2x128xf32>
    %c0_5 = arith.constant 0 : index
    %c0_6 = arith.constant 0 : index
    %c0_7 = arith.constant 0 : index
    %10 = vector.load %arg4[%c0_5, %c0_6, %c0_7] : memref<1x2x128xf32, #tpu.memory_space<vmem>>, vector<1x2x128xf32>
    tpu.vector_store %arg4[%c0_5, %c0_6, %c0_7], %9 {strides = array<i32>} : memref<1x2x128xf32, #tpu.memory_space<vmem>>, vector<1x2x128xf32>,
    %c0_8 = arith.constant 0 : index
    %c0_9 = arith.constant 0 : index
    %11 = vector.load %arg3[%c0_8, %c0_9] : memref<128x128xf32, #tpu.memory_space<vmem>>, vector<128x128xf32>
    tpu.vector_store %arg3[%c0_8, %c0_9], %2 {strides = array<i32>} : memref<128x128xf32, #tpu.memory_space<vmem>>, vector<128x128xf32>,
    return
  }
  func.func @transform_0(%arg0: i32) -> (i32, i32) {
    %c0_i32 = arith.constant 0 : i32
    %c0_i32_0 = arith.constant 0 : i32
    return %arg0, %c0_i32 : i32, i32
  }
  func.func @transform_1(%arg0: i32) -> (i32, i32) {
    %c0_i32 = arith.constant 0 : i32
    %c0_i32_0 = arith.constant 0 : i32
    %c0_i32_1 = arith.constant 0 : i32
    return %c0_i32, %c0_i32_0 : i32, i32
  }
  func.func @transform_2(%arg0: i32) -> (i32, i32) {
    %c0_i32 = arith.constant 0 : i32
    %c0_i32_0 = arith.constant 0 : i32
    return %arg0, %c0_i32 : i32, i32
  }
  func.func @transform_3(%arg0: i32) -> (i32, i32, i32) {
    %c0_i32 = arith.constant 0 : i32
    %c0_i32_0 = arith.constant 0 : i32
    %c0_i32_1 = arith.constant 0 : i32
    return %arg0, %c0_i32, %c0_i32_0 : i32, i32, i32
  }
}

module attributes {stable_mosaic.version = 11 : i64} {
  func.func @kernel(%arg0: i32, %arg1: memref<128x128xf32, #tpu.memory_space<vmem>>, %arg2: memref<1x128xf32, #tpu.memory_space<vmem>>, %arg3: memref<1x128xf32, #tpu.memory_space<vmem>>, %arg4: memref<128x128xf32, #tpu.memory_space<vmem>>) attributes {dimension_semantics = [#tpu.dimension_semantics<parallel>], iteration_bounds = array<i64: 1>, scalar_prefetch = 0 : i64, scratch_operands = 0 : i64, tpu.core_type = #tpu.core_type<tc>, window_params = [{transform_indices = @transform_0, window_bounds = array<i64: 128, 128>}, {pipeline_mode = #tpu.pipeline_mode<synchronous>, transform_indices = @transform_1, window_bounds = array<i64: 1, 128>}, {pipeline_mode = #tpu.pipeline_mode<synchronous>, transform_indices = @transform_2, window_bounds = array<i64: 1, 128>}, {transform_indices = @transform_3, window_bounds = array<i64: 128, 128>}]} {
    %c0 = arith.constant 0 : index
    %c0_0 = arith.constant 0 : index
    %0 = vector.load %arg1[%c0, %c0_0] : memref<128x128xf32, #tpu.memory_space<vmem>>, vector<128x128xf32>
    %c0_1 = arith.constant 0 : index
    %c0_2 = arith.constant 0 : index
    %1 = vector.load %arg2[%c0_1, %c0_2] : memref<1x128xf32, #tpu.memory_space<vmem>>, vector<1x128xf32>
    %2 = vector.broadcast %1 : vector<1x128xf32> to vector<128x128xf32>
    %3 = arith.mulf %0, %2 : vector<128x128xf32>
    %c0_3 = arith.constant 0 : index
    %c0_4 = arith.constant 0 : index
    %4 = vector.load %arg3[%c0_3, %c0_4] : memref<1x128xf32, #tpu.memory_space<vmem>>, vector<1x128xf32>
    %5 = vector.broadcast %4 : vector<1x128xf32> to vector<128x128xf32>
    %6 = arith.addf %3, %5 : vector<128x128xf32>
    %cst = arith.constant 0.000000e+00 : f32
    %7 = vector.broadcast %cst : f32 to vector<128x128xf32>
    %8 = arith.cmpf oge, %6, %7 : vector<128x128xf32>
    %cst_5 = arith.constant 2.000000e-01 : f32
    %9 = vector.broadcast %cst_5 : f32 to vector<128x128xf32>
    %10 = arith.mulf %6, %9 : vector<128x128xf32>
    %11 = arith.select %8, %6, %10 : vector<128x128xi1>, vector<128x128xf32>
    %c0_6 = arith.constant 0 : index
    %c0_7 = arith.constant 0 : index
    %12 = vector.load %arg4[%c0_6, %c0_7] : memref<128x128xf32, #tpu.memory_space<vmem>>, vector<128x128xf32>
    tpu.vector_store %arg4[%c0_6, %c0_7], %11 {strides = array<i32>} : memref<128x128xf32, #tpu.memory_space<vmem>>, vector<128x128xf32>,
    return
  }
  func.func @transform_0(%arg0: i32) -> (i32, i32) {
    %c0_i32 = arith.constant 0 : i32
    %c0_i32_0 = arith.constant 0 : i32
    return %arg0, %c0_i32 : i32, i32
  }
  func.func @transform_1(%arg0: i32) -> (i32, i32) {
    %c0_i32 = arith.constant 0 : i32
    %c0_i32_0 = arith.constant 0 : i32
    %c0_i32_1 = arith.constant 0 : i32
    return %c0_i32, %c0_i32_0 : i32, i32
  }
  func.func @transform_2(%arg0: i32) -> (i32, i32) {
    %c0_i32 = arith.constant 0 : i32
    %c0_i32_0 = arith.constant 0 : i32
    %c0_i32_1 = arith.constant 0 : i32
    return %c0_i32, %c0_i32_0 : i32, i32
  }
  func.func @transform_3(%arg0: i32) -> (i32, i32) {
    %c0_i32 = arith.constant 0 : i32
    %c0_i32_0 = arith.constant 0 : i32
    return %arg0, %c0_i32 : i32, i32
  }
}

module attributes {stable_mosaic.version = 11 : i64} {
  func.func @kernel(%arg0: i32, %arg1: memref<128x256xbf16, #tpu.memory_space<vmem>>, %arg2: memref<256x128xbf16, #tpu.memory_space<vmem>>, %arg3: memref<128x128xf32, #tpu.memory_space<vmem>>, %arg4: memref<1x2x128xf32, #tpu.memory_space<vmem>>) attributes {dimension_semantics = [#tpu.dimension_semantics<parallel>], iteration_bounds = array<i64: 1>, scalar_prefetch = 0 : i64, scratch_operands = 0 : i64, tpu.core_type = #tpu.core_type<tc>, window_params = [{transform_indices = @transform_0, window_bounds = array<i64: 128, 256>}, {pipeline_mode = #tpu.pipeline_mode<synchronous>, transform_indices = @transform_1, window_bounds = array<i64: 256, 128>}, {transform_indices = @transform_2, window_bounds = array<i64: 128, 128>}, {transform_indices = @transform_3, window_bounds = array<i64: 1, 2, 128>}]} {
    %c0 = arith.constant 0 : index
    %c0_0 = arith.constant 0 : index
    %0 = vector.load %arg1[%c0, %c0_0] : memref<128x256xbf16, #tpu.memory_space<vmem>>, vector<128x256xbf16>
    %c0_1 = arith.constant 0 : index
    %c0_2 = arith.constant 0 : index
    %1 = vector.load %arg2[%c0_1, %c0_2] : memref<256x128xbf16, #tpu.memory_space<vmem>>, vector<256x128xbf16>
    %cst = arith.constant dense<0.000000e+00> : vector<128x128xf32>
    %2 = tpu.matmul %0, %1, %cst {dimension_numbers = #tpu.dot_dimension_numbers<[1], [0], [0], [1], [0, 0, 1, 1], [], []>} : vector<128x256xbf16>, vector<256x128xbf16>, vector<128x128xf32> -> vector<128x128xf32>
    %cst_3 = arith.constant dense<0.000000e+00> : vector<128xf32>
    %3 = vector.multi_reduction <add>, %2, %cst_3 [0] : vector<128x128xf32> to vector<128xf32>
    %4 = vector.shape_cast %3 : vector<128xf32> to vector<1x128xf32>
    %5 = arith.mulf %2, %2 : vector<128x128xf32>
    %cst_4 = arith.constant dense<0.000000e+00> : vector<128xf32>
    %6 = vector.multi_reduction <add>, %5, %cst_4 [0] : vector<128x128xf32> to vector<128xf32>
    %7 = vector.shape_cast %6 : vector<128xf32> to vector<1x128xf32>
    %8 = tpu.concatenate %4, %7 in 0 : vector<1x128xf32>, vector<1x128xf32> -> vector<2x128xf32>
    %9 = vector.shape_cast %8 : vector<2x128xf32> to vector<1x2x128xf32>
    %c0_5 = arith.constant 0 : index
    %c0_6 = arith.constant 0 : index
    %c0_7 = arith.constant 0 : index
    %10 = vector.load %arg4[%c0_5, %c0_6, %c0_7] : memref<1x2x128xf32, #tpu.memory_space<vmem>>, vector<1x2x128xf32>
    tpu.vector_store %arg4[%c0_5, %c0_6, %c0_7], %9 {strides = array<i32>} : memref<1x2x128xf32, #tpu.memory_space<vmem>>, vector<1x2x128xf32>,
    %c0_8 = arith.constant 0 : index
    %c0_9 = arith.constant 0 : index
    %11 = vector.load %arg3[%c0_8, %c0_9] : memref<128x128xf32, #tpu.memory_space<vmem>>, vector<128x128xf32>
    tpu.vector_store %arg3[%c0_8, %c0_9], %2 {strides = array<i32>} : memref<128x128xf32, #tpu.memory_space<vmem>>, vector<128x128xf32>,
    return
  }
  func.func @transform_0(%arg0: i32) -> (i32, i32) {
    %c0_i32 = arith.constant 0 : i32
    %c0_i32_0 = arith.constant 0 : i32
    return %arg0, %c0_i32 : i32, i32
  }
  func.func @transform_1(%arg0: i32) -> (i32, i32) {
    %c0_i32 = arith.constant 0 : i32
    %c0_i32_0 = arith.constant 0 : i32
    %c0_i32_1 = arith.constant 0 : i32
    return %c0_i32, %c0_i32_0 : i32, i32
  }
  func.func @transform_2(%arg0: i32) -> (i32, i32) {
    %c0_i32 = arith.constant 0 : i32
    %c0_i32_0 = arith.constant 0 : i32
    return %arg0, %c0_i32 : i32, i32
  }
  func.func @transform_3(%arg0: i32) -> (i32, i32, i32) {
    %c0_i32 = arith.constant 0 : i32
    %c0_i32_0 = arith.constant 0 : i32
    %c0_i32_1 = arith.constant 0 : i32
    return %arg0, %c0_i32, %c0_i32_0 : i32, i32, i32
  }
}

module attributes {stable_mosaic.version = 11 : i64} {
  func.func @kernel(%arg0: i32, %arg1: memref<128x512xbf16, #tpu.memory_space<vmem>>, %arg2: memref<512x128xbf16, #tpu.memory_space<vmem>>, %arg3: memref<128x128xf32, #tpu.memory_space<vmem>>, %arg4: memref<1x2x128xf32, #tpu.memory_space<vmem>>) attributes {dimension_semantics = [#tpu.dimension_semantics<parallel>], iteration_bounds = array<i64: 1>, scalar_prefetch = 0 : i64, scratch_operands = 0 : i64, tpu.core_type = #tpu.core_type<tc>, window_params = [{transform_indices = @transform_0, window_bounds = array<i64: 128, 512>}, {pipeline_mode = #tpu.pipeline_mode<synchronous>, transform_indices = @transform_1, window_bounds = array<i64: 512, 128>}, {transform_indices = @transform_2, window_bounds = array<i64: 128, 128>}, {transform_indices = @transform_3, window_bounds = array<i64: 1, 2, 128>}]} {
    %c0 = arith.constant 0 : index
    %c0_0 = arith.constant 0 : index
    %0 = vector.load %arg1[%c0, %c0_0] : memref<128x512xbf16, #tpu.memory_space<vmem>>, vector<128x512xbf16>
    %c0_1 = arith.constant 0 : index
    %c0_2 = arith.constant 0 : index
    %1 = vector.load %arg2[%c0_1, %c0_2] : memref<512x128xbf16, #tpu.memory_space<vmem>>, vector<512x128xbf16>
    %cst = arith.constant dense<0.000000e+00> : vector<128x128xf32>
    %2 = tpu.matmul %0, %1, %cst {dimension_numbers = #tpu.dot_dimension_numbers<[1], [0], [0], [1], [0, 0, 1, 1], [], []>} : vector<128x512xbf16>, vector<512x128xbf16>, vector<128x128xf32> -> vector<128x128xf32>
    %cst_3 = arith.constant dense<0.000000e+00> : vector<128xf32>
    %3 = vector.multi_reduction <add>, %2, %cst_3 [0] : vector<128x128xf32> to vector<128xf32>
    %4 = vector.shape_cast %3 : vector<128xf32> to vector<1x128xf32>
    %5 = arith.mulf %2, %2 : vector<128x128xf32>
    %cst_4 = arith.constant dense<0.000000e+00> : vector<128xf32>
    %6 = vector.multi_reduction <add>, %5, %cst_4 [0] : vector<128x128xf32> to vector<128xf32>
    %7 = vector.shape_cast %6 : vector<128xf32> to vector<1x128xf32>
    %8 = tpu.concatenate %4, %7 in 0 : vector<1x128xf32>, vector<1x128xf32> -> vector<2x128xf32>
    %9 = vector.shape_cast %8 : vector<2x128xf32> to vector<1x2x128xf32>
    %c0_5 = arith.constant 0 : index
    %c0_6 = arith.constant 0 : index
    %c0_7 = arith.constant 0 : index
    %10 = vector.load %arg4[%c0_5, %c0_6, %c0_7] : memref<1x2x128xf32, #tpu.memory_space<vmem>>, vector<1x2x128xf32>
    tpu.vector_store %arg4[%c0_5, %c0_6, %c0_7], %9 {strides = array<i32>} : memref<1x2x128xf32, #tpu.memory_space<vmem>>, vector<1x2x128xf32>,
    %c0_8 = arith.constant 0 : index
    %c0_9 = arith.constant 0 : index
    %11 = vector.load %arg3[%c0_8, %c0_9] : memref<128x128xf32, #tpu.memory_space<vmem>>, vector<128x128xf32>
    tpu.vector_store %arg3[%c0_8, %c0_9], %2 {strides = array<i32>} : memref<128x128xf32, #tpu.memory_space<vmem>>, vector<128x128xf32>,
    return
  }
  func.func @transform_0(%arg0: i32) -> (i32, i32) {
    %c0_i32 = arith.constant 0 : i32
    %c0_i32_0 = arith.constant 0 : i32
    return %arg0, %c0_i32 : i32, i32
  }
  func.func @transform_1(%arg0: i32) -> (i32, i32) {
    %c0_i32 = arith.constant 0 : i32
    %c0_i32_0 = arith.constant 0 : i32
    %c0_i32_1 = arith.constant 0 : i32
    return %c0_i32, %c0_i32_0 : i32, i32
  }
  func.func @transform_2(%arg0: i32) -> (i32, i32) {
    %c0_i32 = arith.constant 0 : i32
    %c0_i32_0 = arith.constant 0 : i32
    return %arg0, %c0_i32 : i32, i32
  }
  func.func @transform_3(%arg0: i32) -> (i32, i32, i32) {
    %c0_i32 = arith.constant 0 : i32
    %c0_i32_0 = arith.constant 0 : i32
    %c0_i32_1 = arith.constant 0 : i32
    return %arg0, %c0_i32, %c0_i32_0 : i32, i32, i32
  }
}

module attributes {stable_mosaic.version = 11 : i64} {
  func.func @kernel(%arg0: i32, %arg1: memref<128x1024xbf16, #tpu.memory_space<vmem>>, %arg2: memref<1024x128xbf16, #tpu.memory_space<vmem>>, %arg3: memref<1x128xf32, #tpu.memory_space<vmem>>, %arg4: memref<128x128xf32, #tpu.memory_space<vmem>>) attributes {dimension_semantics = [#tpu.dimension_semantics<parallel>], iteration_bounds = array<i64: 1>, scalar_prefetch = 0 : i64, scratch_operands = 0 : i64, tpu.core_type = #tpu.core_type<tc>, window_params = [{transform_indices = @transform_0, window_bounds = array<i64: 128, 1024>}, {pipeline_mode = #tpu.pipeline_mode<synchronous>, transform_indices = @transform_1, window_bounds = array<i64: 1024, 128>}, {pipeline_mode = #tpu.pipeline_mode<synchronous>, transform_indices = @transform_2, window_bounds = array<i64: 1, 128>}, {transform_indices = @transform_3, window_bounds = array<i64: 128, 128>}]} {
    %c0 = arith.constant 0 : index
    %c0_0 = arith.constant 0 : index
    %0 = vector.load %arg1[%c0, %c0_0] : memref<128x1024xbf16, #tpu.memory_space<vmem>>, vector<128x1024xbf16>
    %c0_1 = arith.constant 0 : index
    %c0_2 = arith.constant 0 : index
    %1 = vector.load %arg2[%c0_1, %c0_2] : memref<1024x128xbf16, #tpu.memory_space<vmem>>, vector<1024x128xbf16>
    %cst = arith.constant dense<0.000000e+00> : vector<128x128xf32>
    %2 = tpu.matmul %0, %1, %cst {dimension_numbers = #tpu.dot_dimension_numbers<[1], [0], [0], [1], [0, 0, 1, 1], [], []>} : vector<128x1024xbf16>, vector<1024x128xbf16>, vector<128x128xf32> -> vector<128x128xf32>
    %c0_3 = arith.constant 0 : index
    %c0_4 = arith.constant 0 : index
    %3 = vector.load %arg3[%c0_3, %c0_4] : memref<1x128xf32, #tpu.memory_space<vmem>>, vector<1x128xf32>
    %4 = vector.broadcast %3 : vector<1x128xf32> to vector<128x128xf32>
    %5 = arith.addf %2, %4 : vector<128x128xf32>
    %c0_5 = arith.constant 0 : index
    %c0_6 = arith.constant 0 : index
    %6 = vector.load %arg4[%c0_5, %c0_6] : memref<128x128xf32, #tpu.memory_space<vmem>>, vector<128x128xf32>
    tpu.vector_store %arg4[%c0_5, %c0_6], %5 {strides = array<i32>} : memref<128x128xf32, #tpu.memory_space<vmem>>, vector<128x128xf32>,
    return
  }
  func.func @transform_0(%arg0: i32) -> (i32, i32) {
    %c0_i32 = arith.constant 0 : i32
    %c0_i32_0 = arith.constant 0 : i32
    return %arg0, %c0_i32 : i32, i32
  }
  func.func @transform_1(%arg0: i32) -> (i32, i32) {
    %c0_i32 = arith.constant 0 : i32
    %c0_i32_0 = arith.constant 0 : i32
    %c0_i32_1 = arith.constant 0 : i32
    return %c0_i32, %c0_i32_0 : i32, i32
  }
  func.func @transform_2(%arg0: i32) -> (i32, i32) {
    %c0_i32 = arith.constant 0 : i32
    %c0_i32_0 = arith.constant 0 : i32
    %c0_i32_1 = arith.constant 0 : i32
    return %c0_i32, %c0_i32_0 : i32, i32
  }
  func.func @transform_3(%arg0: i32) -> (i32, i32) {
    %c0_i32 = arith.constant 0 : i32
    %c0_i32_0 = arith.constant 0 : i32
    return %arg0, %c0_i32 : i32, i32
  }
}

</mosaic_0001>

<llo_original>
// kernel: nlayer_discriminator_forward.8
$region0: #{nlayer_discriminator_forward.8}
  #allocation0 [shape = 'u32[]', space=smem, size = 0x4, offset = 0x4, fixed_abs, tag = 'smem constant byte address 0x4 - core index']
  #allocation1 [shape = 'u32[72,128]{1,0:T(1,128)}', space=vmem, size = 0x9000, scoped, tag = 'internal scratch']
  %s0 = inlined_call_operand.vmem [shape: bf16[512,128], index: 0, kind: input, shape index: {}]
  %s1 = inlined_call_operand.vmem [shape: bf16[128,128], index: 1, kind: input, shape index: {}]
  %s2 = inlined_call_operand.vmem [shape: f32[1,128], index: 2, kind: input, shape index: {}]
  %s3 = inlined_call_operand.vmem [shape: f32[512,128], index: 3, kind: output, shape index: {}]
  %s4 = sld [smem:[#allocation0]]
  $region22: #{nlayer_discriminator_forward.8} parent=0
    _
  %s6 = ssub.s32 1, %s4
  %s7 = scalar_select 0, %s6, %s4
  // Predicated region
  $region2: #{nlayer_discriminator_forward.8} parent=0 // pred_check
    _
  $region3: #{nlayer_discriminator_forward.8} parent=0 // pred_check_branch
    %9 = sbr.rel (0) target = $region5
  $region4: #{nlayer_discriminator_forward.8} parent=0 // pred_region
    _
  $region5: #{nlayer_discriminator_forward.8} parent=0 // pred_fallthru
    _
  // Predicated region
  $region6: #{nlayer_discriminator_forward.8} parent=0 // pred_check
    _
  $region7: #{nlayer_discriminator_forward.8} parent=0 // pred_check_branch
    %11 = sbr.rel (0) target = $region9
  $region8: #{nlayer_discriminator_forward.8} parent=0 // pred_region
    _
  $region9: #{nlayer_discriminator_forward.8} parent=0 // pred_fallthru
    _
  // Predicated region
  $region10: #{nlayer_discriminator_forward.8} parent=0 // pred_check
    _
  $region11: #{nlayer_discriminator_forward.8} parent=0 // pred_check_branch
    %13 = sbr.rel (0) target = $region13
  $region12: #{nlayer_discriminator_forward.8} parent=0 // pred_region
    _
  $region13: #{nlayer_discriminator_forward.8} parent=0 // pred_fallthru
    _
  %v14 = vld [vmem:[%s0] sm:$0xf]
  %v15 = vld [vmem:[%s0 + $0x4] sm:$0xf]
  %v16 = vld [vmem:[%s0 + $0x8] sm:$0xf]
  %v17 = vld [vmem:[%s0 + $0xc] sm:$0xf]
  %v18 = vld [vmem:[%s0 + $0x10] sm:$0xf]
  %v19 = vld [vmem:[%s0 + $0x14] sm:$0xf]
  %v20 = vld [vmem:[%s0 + $0x18] sm:$0xf]
  %v21 = vld [vmem:[%s0 + $0x1c] sm:$0xf]
  %v22 = vld [vmem:[%s0 + $0x20] sm:$0xf]
  %v23 = vld [vmem:[%s0 + $0x24] sm:$0xf]
  %v24 = vld [vmem:[%s0 + $0x28] sm:$0xf]
  %v25 = vld [vmem:[%s0 + $0x2c] sm:$0xf]
  %v26 = vld [vmem:[%s0 + $0x30] sm:$0xf]
  %v27 = vld [vmem:[%s0 + $0x34] sm:$0xf]
  %v28 = vld [vmem:[%s0 + $0x38] sm:$0xf]
  %v29 = vld [vmem:[%s0 + $0x3c] sm:$0xf]
  %v30 = vld [vmem:[%s0 + $0x40] sm:$0xf]
  %v31 = vld [vmem:[%s0 + $0x44] sm:$0xf]
  %v32 = vld [vmem:[%s0 + $0x48] sm:$0xf]
  %v33 = vld [vmem:[%s0 + $0x4c] sm:$0xf]
  %v34 = vld [vmem:[%s0 + $0x50] sm:$0xf]
  %v35 = vld [vmem:[%s0 + $0x54] sm:$0xf]
  %v36 = vld [vmem:[%s0 + $0x58] sm:$0xf]
  %v37 = vld [vmem:[%s0 + $0x5c] sm:$0xf]
  %v38 = vld [vmem:[%s0 + $0x60] sm:$0xf]
  %v39 = vld [vmem:[%s0 + $0x64] sm:$0xf]
  %v40 = vld [vmem:[%s0 + $0x68] sm:$0xf]
  %v41 = vld [vmem:[%s0 + $0x6c] sm:$0xf]
  %v42 = vld [vmem:[%s0 + $0x70] sm:$0xf]
  %v43 = vld [vmem:[%s0 + $0x74] sm:$0xf]
  %v44 = vld [vmem:[%s0 + $0x78] sm:$0xf]
  %v45 = vld [vmem:[%s0 + $0x7c] sm:$0xf]
  %v46 = vld [vmem:[%s0 + $0x80] sm:$0xf]
  %v47 = vld [vmem:[%s0 + $0x84] sm:$0xf]
  %v48 = vld [vmem:[%s0 + $0x88] sm:$0xf]
  %v49 = vld [vmem:[%s0 + $0x8c] sm:$0xf]
  %v50 = vld [vmem:[%s0 + $0x90] sm:$0xf]
  %v51 = vld [vmem:[%s0 + $0x94] sm:$0xf]
  %v52 = vld [vmem:[%s0 + $0x98] sm:$0xf]
  %v53 = vld [vmem:[%s0 + $0x9c] sm:$0xf]
  %v54 = vld [vmem:[%s0 + $0xa0] sm:$0xf]
  %v55 = vld [vmem:[%s0 + $0xa4] sm:$0xf]
  %v56 = vld [vmem:[%s0 + $0xa8] sm:$0xf]
  %v57 = vld [vmem:[%s0 + $0xac] sm:$0xf]
  %v58 = vld [vmem:[%s0 + $0xb0] sm:$0xf]
  %v59 = vld [vmem:[%s0 + $0xb4] sm:$0xf]
  %v60 = vld [vmem:[%s0 + $0xb8] sm:$0xf]
  %v61 = vld [vmem:[%s0 + $0xbc] sm:$0xf]
  %v62 = vld [vmem:[%s0 + $0xc0] sm:$0xf]
  %v63 = vld [vmem:[%s0 + $0xc4] sm:$0xf]
  %v64 = vld [vmem:[%s0 + $0xc8] sm:$0xf]
  %v65 = vld [vmem:[%s0 + $0xcc] sm:$0xf]
  %v66 = vld [vmem:[%s0 + $0xd0] sm:$0xf]
  %v67 = vld [vmem:[%s0 + $0xd4] sm:$0xf]
  %v68 = vld [vmem:[%s0 + $0xd8] sm:$0xf]
  %v69 = vld [vmem:[%s0 + $0xdc] sm:$0xf]
  %v70 = vld [vmem:[%s0 + $0xe0] sm:$0xf]
  %v71 = vld [vmem:[%s0 + $0xe4] sm:$0xf]
  %v72 = vld [vmem:[%s0 + $0xe8] sm:$0xf]
  %v73 = vld [vmem:[%s0 + $0xec] sm:$0xf]
  %v74 = vld [vmem:[%s0 + $0xf0] sm:$0xf]
  %v75 = vld [vmem:[%s0 + $0xf4] sm:$0xf]
  %v76 = vld [vmem:[%s0 + $0xf8] sm:$0xf]
  %v77 = vld [vmem:[%s0 + $0xfc] sm:$0xf]
  %v78 = vld [vmem:[%s1] sm:$0xf]
  %v79 = vld [vmem:[%s1 + $0x4] sm:$0xf]
  %v80 = vld [vmem:[%s1 + $0x8] sm:$0xf]
  %v81 = vld [vmem:[%s1 + $0xc] sm:$0xf]
  %v82 = vld [vmem:[%s1 + $0x10] sm:$0xf]
  %v83 = vld [vmem:[%s1 + $0x14] sm:$0xf]
  %v84 = vld [vmem:[%s1 + $0x18] sm:$0xf]
  %v85 = vld [vmem:[%s1 + $0x1c] sm:$0xf]
  %v86 = vld [vmem:[%s1 + $0x20] sm:$0xf]
  %v87 = vld [vmem:[%s1 + $0x24] sm:$0xf]
  %v88 = vld [vmem:[%s1 + $0x28] sm:$0xf]
  %v89 = vld [vmem:[%s1 + $0x2c] sm:$0xf]
  %v90 = vld [vmem:[%s1 + $0x30] sm:$0xf]
  %v91 = vld [vmem:[%s1 + $0x34] sm:$0xf]
  %v92 = vld [vmem:[%s1 + $0x38] sm:$0xf]
  %v93 = vld [vmem:[%s1 + $0x3c] sm:$0xf]
  %v94 = vld [vmem:[%s2] sm:$0x1]
  %v96 = vperm.slane %v94, 0
  %v162 = vunpack.c.l.b16 %v14
  %v163 = vunpack.c.l.b16 %v15
  %v164 = vunpack.c.l.b16 %v16
  %v165 = vunpack.c.l.b16 %v17
  %v166 = vunpack.c.l.b16 %v18
  %v167 = vunpack.c.l.b16 %v19
  %v168 = vunpack.c.l.b16 %v20
  %v169 = vunpack.c.l.b16 %v21
  %v170 = vunpack.c.l.b16 %v22
  %v171 = vunpack.c.l.b16 %v23
  %v172 = vunpack.c.l.b16 %v24
  %v173 = vunpack.c.l.b16 %v25
  %v174 = vunpack.c.l.b16 %v26
  %v175 = vunpack.c.l.b16 %v27
  %v176 = vunpack.c.l.b16 %v28
  %v177 = vunpack.c.l.b16 %v29
  %v178 = vunpack.c.l.b16 %v30
  %v179 = vunpack.c.l.b16 %v31
  %v180 = vunpack.c.l.b16 %v32
  %v181 = vunpack.c.l.b16 %v33
  %v182 = vunpack.c.l.b16 %v34
  %v183 = vunpack.c.l.b16 %v35
  %v184 = vunpack.c.l.b16 %v36
  %v185 = vunpack.c.l.b16 %v37
  %v186 = vunpack.c.l.b16 %v38
  %v187 = vunpack.c.l.b16 %v39
  %v188 = vunpack.c.l.b16 %v40
  %v189 = vunpack.c.l.b16 %v41
  %v190 = vunpack.c.l.b16 %v42
  %v191 = vunpack.c.l.b16 %v43
  %v192 = vunpack.c.l.b16 %v44
  %v193 = vunpack.c.l.b16 %v45
  %v194 = vunpack.c.l.b16 %v46
  %v195 = vunpack.c.l.b16 %v47
  %v196 = vunpack.c.l.b16 %v48
  %v197 = vunpack.c.l.b16 %v49
  %v198 = vunpack.c.l.b16 %v50
  %v199 = vunpack.c.l.b16 %v51
  %v200 = vunpack.c.l.b16 %v52
  %v201 = vunpack.c.l.b16 %v53
  %v202 = vunpack.c.l.b16 %v54
  %v203 = vunpack.c.l.b16 %v55
  %v204 = vunpack.c.l.b16 %v56
  %v205 = vunpack.c.l.b16 %v57
  %v206 = vunpack.c.l.b16 %v58
  %v207 = vunpack.c.l.b16 %v59
  %v208 = vunpack.c.l.b16 %v60
  %v209 = vunpack.c.l.b16 %v61
  %v210 = vunpack.c.l.b16 %v62
  %v211 = vunpack.c.l.b16 %v63
  %v212 = vunpack.c.l.b16 %v64
  %v213 = vunpack.c.l.b16 %v65
  %v214 = vunpack.c.l.b16 %v66
  %v215 = vunpack.c.l.b16 %v67
  %v216 = vunpack.c.l.b16 %v68
  %v217 = vunpack.c.l.b16 %v69
  %v218 = vunpack.c.l.b16 %v70
  %v219 = vunpack.c.l.b16 %v71
  %v220 = vunpack.c.l.b16 %v72
  %v221 = vunpack.c.l.b16 %v73
  %v222 = vunpack.c.l.b16 %v74
  %v223 = vunpack.c.l.b16 %v75
  %v224 = vunpack.c.l.b16 %v76
  %v225 = vunpack.c.l.b16 %v77
  %v226 = vpack.c.b16 %v163, %v162
  %v227 = vpack.c.b16 %v165, %v164
  %v228 = vpack.c.b16 %v167, %v166
  %v229 = vpack.c.b16 %v169, %v168
  %v230 = vpack.c.b16 %v171, %v170
  %v231 = vpack.c.b16 %v173, %v172
  %v232 = vpack.c.b16 %v175, %v174
  %v233 = vpack.c.b16 %v177, %v176
  %v234 = vpack.c.b16 %v179, %v178
  %v235 = vpack.c.b16 %v181, %v180
  %v236 = vpack.c.b16 %v183, %v182
  %v237 = vpack.c.b16 %v185, %v184
  %v238 = vpack.c.b16 %v187, %v186
  %v239 = vpack.c.b16 %v189, %v188
  %v240 = vpack.c.b16 %v191, %v190
  %v241 = vpack.c.b16 %v193, %v192
  %v242 = vpack.c.b16 %v195, %v194
  %v243 = vpack.c.b16 %v197, %v196
  %v244 = vpack.c.b16 %v199, %v198
  %v245 = vpack.c.b16 %v201, %v200
  %v246 = vpack.c.b16 %v203, %v202
  %v247 = vpack.c.b16 %v205, %v204
  %v248 = vpack.c.b16 %v207, %v206
  %v249 = vpack.c.b16 %v209, %v208
  %v250 = vpack.c.b16 %v211, %v210
  %v251 = vpack.c.b16 %v213, %v212
  %v252 = vpack.c.b16 %v215, %v214
  %v253 = vpack.c.b16 %v217, %v216
  %v254 = vpack.c.b16 %v219, %v218
  %v255 = vpack.c.b16 %v221, %v220
  %v256 = vpack.c.b16 %v223, %v222
  %v257 = vpack.c.b16 %v225, %v224
  %v306 = vunpack.c.l.b16 %v78
  %v307 = vunpack.c.l.b16 %v79
  %v308 = vunpack.c.l.b16 %v80
  %v309 = vunpack.c.l.b16 %v81
  %v310 = vunpack.c.l.b16 %v82
  %v311 = vunpack.c.l.b16 %v83
  %v312 = vunpack.c.l.b16 %v84
  %v313 = vunpack.c.l.b16 %v85
  %v314 = vunpack.c.l.b16 %v86
  %v315 = vunpack.c.l.b16 %v87
  %v316 = vunpack.c.l.b16 %v88
  %v317 = vunpack.c.l.b16 %v89
  %v318 = vunpack.c.l.b16 %v90
  %v319 = vunpack.c.l.b16 %v91
  %v320 = vunpack.c.l.b16 %v92
  %v321 = vunpack.c.l.b16 %v93
  %v322 = vpack.c.b16 %v307, %v306
  %v323 = vpack.c.b16 %v309, %v308
  %v324 = vpack.c.b16 %v311, %v310
  %v325 = vpack.c.b16 %v313, %v312
  %v326 = vpack.c.b16 %v315, %v314
  %v327 = vpack.c.b16 %v317, %v316
  %v328 = vpack.c.b16 %v319, %v318
  %v329 = vpack.c.b16 %v321, %v320
  %338 = vmatpush.bf16.msra.mxu0 %v329
  %339 = vmatpush.bf16.msra.mxu0 %v328
  %340 = vmatpush.bf16.msra.mxu0 %v327
  %341 = vmatpush.bf16.msra.mxu0 %v326
  %342 = vmatpush.bf16.msra.mxu0 %v325
  %343 = vmatpush.bf16.msra.mxu0 %v324
  %344 = vmatpush.bf16.msra.mxu0 %v323
  %345 = vmatpush.bf16.msra.mxu0 %v322
  %346 = vmatmul.bf16.gmra.mxu0 %v226
  %v347 = vpop.f32.mrf.mxu0
  %v348 = vadd.f32 %v96, %v347
  %v349 = vpop.f32.mrf.mxu0
  %v350 = vadd.f32 %v96, %v349
  %351 = vmatmul.bf16.gmra.mxu0 %v227
  %v352 = vpop.f32.mrf.mxu0
  %v353 = vadd.f32 %v96, %v352
  %v354 = vpop.f32.mrf.mxu0
  %v355 = vadd.f32 %v96, %v354
  %356 = vmatmul.bf16.gmra.mxu0 %v228
  %v357 = vpop.f32.mrf.mxu0
  %v358 = vadd.f32 %v96, %v357
  %v359 = vpop.f32.mrf.mxu0
  %v360 = vadd.f32 %v96, %v359
  %361 = vmatmul.bf16.gmra.mxu0 %v229
  %v362 = vpop.f32.mrf.mxu0
  %v363 = vadd.f32 %v96, %v362
  %v364 = vpop.f32.mrf.mxu0
  %v365 = vadd.f32 %v96, %v364
  %366 = vmatmul.bf16.gmra.mxu0 %v230
  %v367 = vpop.f32.mrf.mxu0
  %v368 = vadd.f32 %v96, %v367
  %v369 = vpop.f32.mrf.mxu0
  %v370 = vadd.f32 %v96, %v369
  %371 = vmatmul.bf16.gmra.mxu0 %v231
  %v372 = vpop.f32.mrf.mxu0
  %v373 = vadd.f32 %v96, %v372
  %v374 = vpop.f32.mrf.mxu0
  %v375 = vadd.f32 %v96, %v374
  %376 = vmatmul.bf16.gmra.mxu0 %v232
  %v377 = vpop.f32.mrf.mxu0
  %v378 = vadd.f32 %v96, %v377
  %v379 = vpop.f32.mrf.mxu0
  %v380 = vadd.f32 %v96, %v379
  %381 = vmatmul.bf16.gmra.mxu0 %v233
  %v382 = vpop.f32.mrf.mxu0
  %v383 = vadd.f32 %v96, %v382
  %v384 = vpop.f32.mrf.mxu0
  %v385 = vadd.f32 %v96, %v384
  %386 = vmatmul.bf16.gmra.mxu0 %v234
  %v387 = vpop.f32.mrf.mxu0
  %v388 = vadd.f32 %v96, %v387
  %v389 = vpop.f32.mrf.mxu0
  %v390 = vadd.f32 %v96, %v389
  %391 = vmatmul.bf16.gmra.mxu0 %v235
  %v392 = vpop.f32.mrf.mxu0
  %v393 = vadd.f32 %v96, %v392
  %v394 = vpop.f32.mrf.mxu0
  %v395 = vadd.f32 %v96, %v394
  %396 = vmatmul.bf16.gmra.mxu0 %v236
  %v397 = vpop.f32.mrf.mxu0
  %v398 = vadd.f32 %v96, %v397
  %v399 = vpop.f32.mrf.mxu0
  %v400 = vadd.f32 %v96, %v399
  %401 = vmatmul.bf16.gmra.mxu0 %v237
  %v402 = vpop.f32.mrf.mxu0
  %v403 = vadd.f32 %v96, %v402
  %v404 = vpop.f32.mrf.mxu0
  %v405 = vadd.f32 %v96, %v404
  %406 = vmatmul.bf16.gmra.mxu0 %v238
  %v407 = vpop.f32.mrf.mxu0
  %v408 = vadd.f32 %v96, %v407
  %v409 = vpop.f32.mrf.mxu0
  %v410 = vadd.f32 %v96, %v409
  %411 = vmatmul.bf16.gmra.mxu0 %v239
  %v412 = vpop.f32.mrf.mxu0
  %v413 = vadd.f32 %v96, %v412
  %v414 = vpop.f32.mrf.mxu0
  %v415 = vadd.f32 %v96, %v414
  %416 = vmatmul.bf16.gmra.mxu0 %v240
  %v417 = vpop.f32.mrf.mxu0
  %v418 = vadd.f32 %v96, %v417
  %v419 = vpop.f32.mrf.mxu0
  %v420 = vadd.f32 %v96, %v419
  %421 = vmatmul.bf16.gmra.mxu0 %v241
  %v422 = vpop.f32.mrf.mxu0
  %v423 = vadd.f32 %v96, %v422
  %v424 = vpop.f32.mrf.mxu0
  %v425 = vadd.f32 %v96, %v424
  %426 = vmatmul.bf16.gmra.mxu0 %v242
  %v427 = vpop.f32.mrf.mxu0
  %v428 = vadd.f32 %v96, %v427
  %v429 = vpop.f32.mrf.mxu0
  %v430 = vadd.f32 %v96, %v429
  %431 = vmatmul.bf16.gmra.mxu0 %v243
  %v432 = vpop.f32.mrf.mxu0
  %v433 = vadd.f32 %v96, %v432
  %v434 = vpop.f32.mrf.mxu0
  %v435 = vadd.f32 %v96, %v434
  %436 = vmatmul.bf16.gmra.mxu0 %v244
  %v437 = vpop.f32.mrf.mxu0
  %v438 = vadd.f32 %v96, %v437
  %v439 = vpop.f32.mrf.mxu0
  %v440 = vadd.f32 %v96, %v439
  %441 = vmatmul.bf16.gmra.mxu0 %v245
  %v442 = vpop.f32.mrf.mxu0
  %v443 = vadd.f32 %v96, %v442
  %v444 = vpop.f32.mrf.mxu0
  %v445 = vadd.f32 %v96, %v444
  %446 = vmatmul.bf16.gmra.mxu0 %v246
  %v447 = vpop.f32.mrf.mxu0
  %v448 = vadd.f32 %v96, %v447
  %v449 = vpop.f32.mrf.mxu0
  %v450 = vadd.f32 %v96, %v449
  %451 = vmatmul.bf16.gmra.mxu0 %v247
  %v452 = vpop.f32.mrf.mxu0
  %v453 = vadd.f32 %v96, %v452
  %v454 = vpop.f32.mrf.mxu0
  %v455 = vadd.f32 %v96, %v454
  %456 = vmatmul.bf16.gmra.mxu0 %v248
  %v457 = vpop.f32.mrf.mxu0
  %v458 = vadd.f32 %v96, %v457
  %v459 = vpop.f32.mrf.mxu0
  %v460 = vadd.f32 %v96, %v459
  %461 = vmatmul.bf16.gmra.mxu0 %v249
  %v462 = vpop.f32.mrf.mxu0
  %v463 = vadd.f32 %v96, %v462
  %v464 = vpop.f32.mrf.mxu0
  %v465 = vadd.f32 %v96, %v464
  %466 = vmatmul.bf16.gmra.mxu0 %v250
  %v467 = vpop.f32.mrf.mxu0
  %v468 = vadd.f32 %v96, %v467
  %v469 = vpop.f32.mrf.mxu0
  %v470 = vadd.f32 %v96, %v469
  %471 = vmatmul.bf16.gmra.mxu0 %v251
  %v472 = vpop.f32.mrf.mxu0
  %v473 = vadd.f32 %v96, %v472
  %v474 = vpop.f32.mrf.mxu0
  %v475 = vadd.f32 %v96, %v474
  %476 = vmatmul.bf16.gmra.mxu0 %v252
  %v477 = vpop.f32.mrf.mxu0
  %v478 = vadd.f32 %v96, %v477
  %v479 = vpop.f32.mrf.mxu0
  %v480 = vadd.f32 %v96, %v479
  %481 = vmatmul.bf16.gmra.mxu0 %v253
  %v482 = vpop.f32.mrf.mxu0
  %v483 = vadd.f32 %v96, %v482
  %v484 = vpop.f32.mrf.mxu0
  %v485 = vadd.f32 %v96, %v484
  %486 = vmatmul.bf16.gmra.mxu0 %v254
  %v487 = vpop.f32.mrf.mxu0
  %v488 = vadd.f32 %v96, %v487
  %v489 = vpop.f32.mrf.mxu0
  %v490 = vadd.f32 %v96, %v489
  %491 = vmatmul.bf16.gmra.mxu0 %v255
  %v492 = vpop.f32.mrf.mxu0
  %v493 = vadd.f32 %v96, %v492
  %v494 = vpop.f32.mrf.mxu0
  %v495 = vadd.f32 %v96, %v494
  %496 = vmatmul.bf16.gmra.mxu0 %v256
  %v497 = vpop.f32.mrf.mxu0
  %v498 = vadd.f32 %v96, %v497
  %v499 = vpop.f32.mrf.mxu0
  %v500 = vadd.f32 %v96, %v499
  %501 = vmatmul.bf16.gmra.mxu0 %v257
  %v502 = vpop.f32.mrf.mxu0
  %v503 = vadd.f32 %v96, %v502
  %v504 = vpop.f32.mrf.mxu0
  %v505 = vadd.f32 %v96, %v504
  %506 = vdwg.mxu0
  %vm507 = vcmp.ge.f32.partialorder %v348, 0.0
  %vm508 = vcmp.ge.f32.partialorder %v350, 0.0
  %vm509 = vcmp.ge.f32.partialorder %v353, 0.0
  %vm510 = vcmp.ge.f32.partialorder %v355, 0.0
  %vm511 = vcmp.ge.f32.partialorder %v358, 0.0
  %vm512 = vcmp.ge.f32.partialorder %v360, 0.0
  %vm513 = vcmp.ge.f32.partialorder %v363, 0.0
  %vm514 = vcmp.ge.f32.partialorder %v365, 0.0
  %vm515 = vcmp.ge.f32.partialorder %v368, 0.0
  %vm516 = vcmp.ge.f32.partialorder %v370, 0.0
  %vm517 = vcmp.ge.f32.partialorder %v373, 0.0
  %vm518 = vcmp.ge.f32.partialorder %v375, 0.0
  %vm519 = vcmp.ge.f32.partialorder %v378, 0.0
  %vm520 = vcmp.ge.f32.partialorder %v380, 0.0
  %vm521 = vcmp.ge.f32.partialorder %v383, 0.0
  %vm522 = vcmp.ge.f32.partialorder %v385, 0.0
  %vm523 = vcmp.ge.f32.partialorder %v388, 0.0
  %vm524 = vcmp.ge.f32.partialorder %v390, 0.0
  %vm525 = vcmp.ge.f32.partialorder %v393, 0.0
  %vm526 = vcmp.ge.f32.partialorder %v395, 0.0
  %vm527 = vcmp.ge.f32.partialorder %v398, 0.0
  %vm528 = vcmp.ge.f32.partialorder %v400, 0.0
  %vm529 = vcmp.ge.f32.partialorder %v403, 0.0
  %vm530 = vcmp.ge.f32.partialorder %v405, 0.0
  %vm531 = vcmp.ge.f32.partialorder %v408, 0.0
  %vm532 = vcmp.ge.f32.partialorder %v410, 0.0
  %vm533 = vcmp.ge.f32.partialorder %v413, 0.0
  %vm534 = vcmp.ge.f32.partialorder %v415, 0.0
  %vm535 = vcmp.ge.f32.partialorder %v418, 0.0
  %vm536 = vcmp.ge.f32.partialorder %v420, 0.0
  %vm537 = vcmp.ge.f32.partialorder %v423, 0.0
  %vm538 = vcmp.ge.f32.partialorder %v425, 0.0
  %vm539 = vcmp.ge.f32.partialorder %v428, 0.0
  %vm540 = vcmp.ge.f32.partialorder %v430, 0.0
  %vm541 = vcmp.ge.f32.partialorder %v433, 0.0
  %vm542 = vcmp.ge.f32.partialorder %v435, 0.0
  %vm543 = vcmp.ge.f32.partialorder %v438, 0.0
  %vm544 = vcmp.ge.f32.partialorder %v440, 0.0
  %vm545 = vcmp.ge.f32.partialorder %v443, 0.0
  %vm546 = vcmp.ge.f32.partialorder %v445, 0.0
  %vm547 = vcmp.ge.f32.partialorder %v448, 0.0
  %vm548 = vcmp.ge.f32.partialorder %v450, 0.0
  %vm549 = vcmp.ge.f32.partialorder %v453, 0.0
  %vm550 = vcmp.ge.f32.partialorder %v455, 0.0
  %vm551 = vcmp.ge.f32.partialorder %v458, 0.0
  %vm552 = vcmp.ge.f32.partialorder %v460, 0.0
  %vm553 = vcmp.ge.f32.partialorder %v463, 0.0
  %vm554 = vcmp.ge.f32.partialorder %v465, 0.0
  %vm555 = vcmp.ge.f32.partialorder %v468, 0.0
  %vm556 = vcmp.ge.f32.partialorder %v470, 0.0
  %vm557 = vcmp.ge.f32.partialorder %v473, 0.0
  %vm558 = vcmp.ge.f32.partialorder %v475, 0.0
  %vm559 = vcmp.ge.f32.partialorder %v478, 0.0
  %vm560 = vcmp.ge.f32.partialorder %v480, 0.0
  %vm561 = vcmp.ge.f32.partialorder %v483, 0.0
  %vm562 = vcmp.ge.f32.partialorder %v485, 0.0
  %vm563 = vcmp.ge.f32.partialorder %v488, 0.0
  %vm564 = vcmp.ge.f32.partialorder %v490, 0.0
  %vm565 = vcmp.ge.f32.partialorder %v493, 0.0
  %vm566 = vcmp.ge.f32.partialorder %v495, 0.0
  %vm567 = vcmp.ge.f32.partialorder %v498, 0.0
  %vm568 = vcmp.ge.f32.partialorder %v500, 0.0
  %vm569 = vcmp.ge.f32.partialorder %v503, 0.0
  %vm570 = vcmp.ge.f32.partialorder %v505, 0.0
  %v571 = vmul.f32 %v348, 0.2
  %v572 = vmul.f32 %v350, 0.2
  %v573 = vmul.f32 %v353, 0.2
  %v574 = vmul.f32 %v355, 0.2
  %v575 = vmul.f32 %v358, 0.2
  %v576 = vmul.f32 %v360, 0.2
  %v577 = vmul.f32 %v363, 0.2
  %v578 = vmul.f32 %v365, 0.2
  %v579 = vmul.f32 %v368, 0.2
  %v580 = vmul.f32 %v370, 0.2
  %v581 = vmul.f32 %v373, 0.2
  %v582 = vmul.f32 %v375, 0.2
  %v583 = vmul.f32 %v378, 0.2
  %v584 = vmul.f32 %v380, 0.2
  %v585 = vmul.f32 %v383, 0.2
  %v586 = vmul.f32 %v385, 0.2
  %v587 = vmul.f32 %v388, 0.2
  %v588 = vmul.f32 %v390, 0.2
  %v589 = vmul.f32 %v393, 0.2
  %v590 = vmul.f32 %v395, 0.2
  %v591 = vmul.f32 %v398, 0.2
  %v592 = vmul.f32 %v400, 0.2
  %v593 = vmul.f32 %v403, 0.2
  %v594 = vmul.f32 %v405, 0.2
  %v595 = vmul.f32 %v408, 0.2
  %v596 = vmul.f32 %v410, 0.2
  %v597 = vmul.f32 %v413, 0.2
  %v598 = vmul.f32 %v415, 0.2
  %v599 = vmul.f32 %v418, 0.2
  %v600 = vmul.f32 %v420, 0.2
  %v601 = vmul.f32 %v423, 0.2
  %v602 = vmul.f32 %v425, 0.2
  %v603 = vmul.f32 %v428, 0.2
  %v604 = vmul.f32 %v430, 0.2
  %v605 = vmul.f32 %v433, 0.2
  %v606 = vmul.f32 %v435, 0.2
  %v607 = vmul.f32 %v438, 0.2
  %v608 = vmul.f32 %v440, 0.2
  %v609 = vmul.f32 %v443, 0.2
  %v610 = vmul.f32 %v445, 0.2
  %v611 = vmul.f32 %v448, 0.2
  %v612 = vmul.f32 %v450, 0.2
  %v613 = vmul.f32 %v453, 0.2
  %v614 = vmul.f32 %v455, 0.2
  %v615 = vmul.f32 %v458, 0.2
  %v616 = vmul.f32 %v460, 0.2
  %v617 = vmul.f32 %v463, 0.2
  %v618 = vmul.f32 %v465, 0.2
  %v619 = vmul.f32 %v468, 0.2
  %v620 = vmul.f32 %v470, 0.2
  %v621 = vmul.f32 %v473, 0.2
  %v622 = vmul.f32 %v475, 0.2
  %v623 = vmul.f32 %v478, 0.2
  %v624 = vmul.f32 %v480, 0.2
  %v625 = vmul.f32 %v483, 0.2
  %v626 = vmul.f32 %v485, 0.2
  %v627 = vmul.f32 %v488, 0.2
  %v628 = vmul.f32 %v490, 0.2
  %v629 = vmul.f32 %v493, 0.2
  %v630 = vmul.f32 %v495, 0.2
  %v631 = vmul.f32 %v498, 0.2
  %v632 = vmul.f32 %v500, 0.2
  %v633 = vmul.f32 %v503, 0.2
  %v634 = vmul.f32 %v505, 0.2
  %v635 = vsel %vm507, %v348, %v571
  %v636 = vsel %vm508, %v350, %v572
  %v637 = vsel %vm509, %v353, %v573
  %v638 = vsel %vm510, %v355, %v574
  %v639 = vsel %vm511, %v358, %v575
  %v640 = vsel %vm512, %v360, %v576
  %v641 = vsel %vm513, %v363, %v577
  %v642 = vsel %vm514, %v365, %v578
  %v643 = vsel %vm515, %v368, %v579
  %v644 = vsel %vm516, %v370, %v580
  %v645 = vsel %vm517, %v373, %v581
  %v646 = vsel %vm518, %v375, %v582
  %v647 = vsel %vm519, %v378, %v583
  %v648 = vsel %vm520, %v380, %v584
  %v649 = vsel %vm521, %v383, %v585
  %v650 = vsel %vm522, %v385, %v586
  %v651 = vsel %vm523, %v388, %v587
  %v652 = vsel %vm524, %v390, %v588
  %v653 = vsel %vm525, %v393, %v589
  %v654 = vsel %vm526, %v395, %v590
  %v655 = vsel %vm527, %v398, %v591
  %v656 = vsel %vm528, %v400, %v592
  %v657 = vsel %vm529, %v403, %v593
  %v658 = vsel %vm530, %v405, %v594
  %v659 = vsel %vm531, %v408, %v595
  %v660 = vsel %vm532, %v410, %v596
  %v661 = vsel %vm533, %v413, %v597
  %v662 = vsel %vm534, %v415, %v598
  %v663 = vsel %vm535, %v418, %v599
  %v664 = vsel %vm536, %v420, %v600
  %v665 = vsel %vm537, %v423, %v601
  %v666 = vsel %vm538, %v425, %v602
  %v667 = vsel %vm539, %v428, %v603
  %v668 = vsel %vm540, %v430, %v604
  %v669 = vsel %vm541, %v433, %v605
  %v670 = vsel %vm542, %v435, %v606
  %v671 = vsel %vm543, %v438, %v607
  %v672 = vsel %vm544, %v440, %v608
  %v673 = vsel %vm545, %v443, %v609
  %v674 = vsel %vm546, %v445, %v610
  %v675 = vsel %vm547, %v448, %v611
  %v676 = vsel %vm548, %v450, %v612
  %v677 = vsel %vm549, %v453, %v613
  %v678 = vsel %vm550, %v455, %v614
  %v679 = vsel %vm551, %v458, %v615
  %v680 = vsel %vm552, %v460, %v616
  %v681 = vsel %vm553, %v463, %v617
  %v682 = vsel %vm554, %v465, %v618
  %v683 = vsel %vm555, %v468, %v619
  %v684 = vsel %vm556, %v470, %v620
  %v685 = vsel %vm557, %v473, %v621
  %v686 = vsel %vm558, %v475, %v622
  %v687 = vsel %vm559, %v478, %v623
  %v688 = vsel %vm560, %v480, %v624
  %v689 = vsel %vm561, %v483, %v625
  %v690 = vsel %vm562, %v485, %v626
  %v691 = vsel %vm563, %v488, %v627
  %v692 = vsel %vm564, %v490, %v628
  %v693 = vsel %vm565, %v493, %v629
  %v694 = vsel %vm566, %v495, %v630
  %v695 = vsel %vm567, %v498, %v631
  %v696 = vsel %vm568, %v500, %v632
  %v697 = vsel %vm569, %v503, %v633
  %v698 = vsel %vm570, %v505, %v634
  %699 = vst [vmem:[%s3] sm:$0xff] %v635
  %700 = vst [vmem:[%s3 + $0x8] sm:$0xff] %v636
  %701 = vst [vmem:[%s3 + $0x10] sm:$0xff] %v637
  %702 = vst [vmem:[%s3 + $0x18] sm:$0xff] %v638
  %703 = vst [vmem:[%s3 + $0x20] sm:$0xff] %v639
  %704 = vst [vmem:[%s3 + $0x28] sm:$0xff] %v640
  %705 = vst [vmem:[%s3 + $0x30] sm:$0xff] %v641
  %706 = vst [vmem:[%s3 + $0x38] sm:$0xff] %v642
  %707 = vst [vmem:[%s3 + $0x40] sm:$0xff] %v643
  %708 = vst [vmem:[%s3 + $0x48] sm:$0xff] %v644
  %709 = vst [vmem:[%s3 + $0x50] sm:$0xff] %v645
  %710 = vst [vmem:[%s3 + $0x58] sm:$0xff] %v646
  %711 = vst [vmem:[%s3 + $0x60] sm:$0xff] %v647
  %712 = vst [vmem:[%s3 + $0x68] sm:$0xff] %v648
  %713 = vst [vmem:[%s3 + $0x70] sm:$0xff] %v649
  %714 = vst [vmem:[%s3 + $0x78] sm:$0xff] %v650
  %715 = vst [vmem:[%s3 + $0x80] sm:$0xff] %v651
  %716 = vst [vmem:[%s3 + $0x88] sm:$0xff] %v652
  %717 = vst [vmem:[%s3 + $0x90] sm:$0xff] %v653
  %718 = vst [vmem:[%s3 + $0x98] sm:$0xff] %v654
  %719 = vst [vmem:[%s3 + $0xa0] sm:$0xff] %v655
  %720 = vst [vmem:[%s3 + $0xa8] sm:$0xff] %v656
  %721 = vst [vmem:[%s3 + $0xb0] sm:$0xff] %v657
  %722 = vst [vmem:[%s3 + $0xb8] sm:$0xff] %v658
  %723 = vst [vmem:[%s3 + $0xc0] sm:$0xff] %v659
  %724 = vst [vmem:[%s3 + $0xc8] sm:$0xff] %v660
  %725 = vst [vmem:[%s3 + $0xd0] sm:$0xff] %v661
  %726 = vst [vmem:[%s3 + $0xd8] sm:$0xff] %v662
  %727 = vst [vmem:[%s3 + $0xe0] sm:$0xff] %v663
  %728 = vst [vmem:[%s3 + $0xe8] sm:$0xff] %v664
  %729 = vst [vmem:[%s3 + $0xf0] sm:$0xff] %v665
  %730 = vst [vmem:[%s3 + $0xf8] sm:$0xff] %v666
  %731 = vst [vmem:[%s3 + $0x100] sm:$0xff] %v667
  %732 = vst [vmem:[%s3 + $0x108] sm:$0xff] %v668
  %733 = vst [vmem:[%s3 + $0x110] sm:$0xff] %v669
  %734 = vst [vmem:[%s3 + $0x118] sm:$0xff] %v670
  %735 = vst [vmem:[%s3 + $0x120] sm:$0xff] %v671
  %736 = vst [vmem:[%s3 + $0x128] sm:$0xff] %v672
  %737 = vst [vmem:[%s3 + $0x130] sm:$0xff] %v673
  %738 = vst [vmem:[%s3 + $0x138] sm:$0xff] %v674
  %739 = vst [vmem:[%s3 + $0x140] sm:$0xff] %v675
  %740 = vst [vmem:[%s3 + $0x148] sm:$0xff] %v676
  %741 = vst [vmem:[%s3 + $0x150] sm:$0xff] %v677
  %742 = vst [vmem:[%s3 + $0x158] sm:$0xff] %v678
  %743 = vst [vmem:[%s3 + $0x160] sm:$0xff] %v679
  %744 = vst [vmem:[%s3 + $0x168] sm:$0xff] %v680
  %745 = vst [vmem:[%s3 + $0x170] sm:$0xff] %v681
  %746 = vst [vmem:[%s3 + $0x178] sm:$0xff] %v682
  %747 = vst [vmem:[%s3 + $0x180] sm:$0xff] %v683
  %748 = vst [vmem:[%s3 + $0x188] sm:$0xff] %v684
  %749 = vst [vmem:[%s3 + $0x190] sm:$0xff] %v685
  %750 = vst [vmem:[%s3 + $0x198] sm:$0xff] %v686
  %751 = vst [vmem:[%s3 + $0x1a0] sm:$0xff] %v687
  %752 = vst [vmem:[%s3 + $0x1a8] sm:$0xff] %v688
  %753 = vst [vmem:[%s3 + $0x1b0] sm:$0xff] %v689
  %754 = vst [vmem:[%s3 + $0x1b8] sm:$0xff] %v690
  %755 = vst [vmem:[%s3 + $0x1c0] sm:$0xff] %v691
  %756 = vst [vmem:[%s3 + $0x1c8] sm:$0xff] %v692
  %757 = vst [vmem:[%s3 + $0x1d0] sm:$0xff] %v693
  %758 = vst [vmem:[%s3 + $0x1d8] sm:$0xff] %v694
  %759 = vst [vmem:[%s3 + $0x1e0] sm:$0xff] %v695
  %760 = vst [vmem:[%s3 + $0x1e8] sm:$0xff] %v696
  %761 = vst [vmem:[%s3 + $0x1f0] sm:$0xff] %v697
  %762 = vst [vmem:[%s3 + $0x1f8] sm:$0xff] %v698
  // Predicated region
  $region14: #{nlayer_discriminator_forward.8} parent=0 // pred_check
    _
  $region15: #{nlayer_discriminator_forward.8} parent=0 // pred_check_branch
    %764 = sbr.rel (0) target = $region17
  $region16: #{nlayer_discriminator_forward.8} parent=0 // pred_region
    _
  $region17: #{nlayer_discriminator_forward.8} parent=0 // pred_fallthru
    _
  // Predicated region
  $region18: #{nlayer_discriminator_forward.8} parent=0 // pred_check
    _
  $region19: #{nlayer_discriminator_forward.8} parent=0 // pred_check_branch
    %766 = sbr.rel (0) target = $region21
  $region20: #{nlayer_discriminator_forward.8} parent=0 // pred_region
    _
  $region21: #{nlayer_discriminator_forward.8} parent=0 // pred_fallthru
    _

// kernel: nlayer_discriminator_forward.9
$region0: #{nlayer_discriminator_forward.9}
  #allocation0 [shape = 'u32[]', space=smem, size = 0x4, offset = 0x4, fixed_abs, tag = 'smem constant byte address 0x4 - core index']
  #allocation1 [shape = 'u32[72,128]{1,0:T(1,128)}', space=vmem, size = 0x9000, scoped, tag = 'internal scratch']
  %s0 = inlined_call_operand.vmem [shape: bf16[128,128], index: 0, kind: input, shape index: {}]
  %s1 = inlined_call_operand.vmem [shape: bf16[128,128], index: 1, kind: input, shape index: {}]
  %s2 = inlined_call_operand.vmem [shape: f32[128,128], index: 2, kind: output, shape index: {0}]
  %s3 = inlined_call_operand.vmem [shape: f32[1,2,128], index: 3, kind: output, shape index: {1}]
  %4 = xla_tuple %s2, %s3
  %s5 = sld [smem:[#allocation0]]
  $region26: #{nlayer_discriminator_forward.9} parent=0
    _
  %s7 = ssub.s32 1, %s5
  %s8 = scalar_select 0, %s7, %s5
  // Predicated region
  $region2: #{nlayer_discriminator_forward.9} parent=0 // pred_check
    _
  $region3: #{nlayer_discriminator_forward.9} parent=0 // pred_check_branch
    %10 = sbr.rel (0) target = $region5
  $region4: #{nlayer_discriminator_forward.9} parent=0 // pred_region
    _
  $region5: #{nlayer_discriminator_forward.9} parent=0 // pred_fallthru
    _
  // Predicated region
  $region6: #{nlayer_discriminator_forward.9} parent=0 // pred_check
    _
  $region7: #{nlayer_discriminator_forward.9} parent=0 // pred_check_branch
    %12 = sbr.rel (0) target = $region9
  $region8: #{nlayer_discriminator_forward.9} parent=0 // pred_region
    _
  $region9: #{nlayer_discriminator_forward.9} parent=0 // pred_fallthru
    _
  %v13 = vld [vmem:[%s0] sm:$0xf]
  %v14 = vld [vmem:[%s0 + $0x4] sm:$0xf]
  %v15 = vld [vmem:[%s0 + $0x8] sm:$0xf]
  %v16 = vld [vmem:[%s0 + $0xc] sm:$0xf]
  %v17 = vld [vmem:[%s0 + $0x10] sm:$0xf]
  %v18 = vld [vmem:[%s0 + $0x14] sm:$0xf]
  %v19 = vld [vmem:[%s0 + $0x18] sm:$0xf]
  %v20 = vld [vmem:[%s0 + $0x1c] sm:$0xf]
  %v21 = vld [vmem:[%s0 + $0x20] sm:$0xf]
  %v22 = vld [vmem:[%s0 + $0x24] sm:$0xf]
  %v23 = vld [vmem:[%s0 + $0x28] sm:$0xf]
  %v24 = vld [vmem:[%s0 + $0x2c] sm:$0xf]
  %v25 = vld [vmem:[%s0 + $0x30] sm:$0xf]
  %v26 = vld [vmem:[%s0 + $0x34] sm:$0xf]
  %v27 = vld [vmem:[%s0 + $0x38] sm:$0xf]
  %v28 = vld [vmem:[%s0 + $0x3c] sm:$0xf]
  %v29 = vld [vmem:[%s1] sm:$0xf]
  %v30 = vld [vmem:[%s1 + $0x4] sm:$0xf]
  %v31 = vld [vmem:[%s1 + $0x8] sm:$0xf]
  %v32 = vld [vmem:[%s1 + $0xc] sm:$0xf]
  %v33 = vld [vmem:[%s1 + $0x10] sm:$0xf]
  %v34 = vld [vmem:[%s1 + $0x14] sm:$0xf]
  %v35 = vld [vmem:[%s1 + $0x18] sm:$0xf]
  %v36 = vld [vmem:[%s1 + $0x1c] sm:$0xf]
  %v37 = vld [vmem:[%s1 + $0x20] sm:$0xf]
  %v38 = vld [vmem:[%s1 + $0x24] sm:$0xf]
  %v39 = vld [vmem:[%s1 + $0x28] sm:$0xf]
  %v40 = vld [vmem:[%s1 + $0x2c] sm:$0xf]
  %v41 = vld [vmem:[%s1 + $0x30] sm:$0xf]
  %v42 = vld [vmem:[%s1 + $0x34] sm:$0xf]
  %v43 = vld [vmem:[%s1 + $0x38] sm:$0xf]
  %v44 = vld [vmem:[%s1 + $0x3c] sm:$0xf]
  %v61 = vunpack.c.l.b16 %v13
  %v62 = vunpack.c.l.b16 %v14
  %v63 = vunpack.c.l.b16 %v15
  %v64 = vunpack.c.l.b16 %v16
  %v65 = vunpack.c.l.b16 %v17
  %v66 = vunpack.c.l.b16 %v18
  %v67 = vunpack.c.l.b16 %v19
  %v68 = vunpack.c.l.b16 %v20
  %v69 = vunpack.c.l.b16 %v21
  %v70 = vunpack.c.l.b16 %v22
  %v71 = vunpack.c.l.b16 %v23
  %v72 = vunpack.c.l.b16 %v24
  %v73 = vunpack.c.l.b16 %v25
  %v74 = vunpack.c.l.b16 %v26
  %v75 = vunpack.c.l.b16 %v27
  %v76 = vunpack.c.l.b16 %v28
  %v77 = vpack.c.b16 %v62, %v61
  %v78 = vpack.c.b16 %v64, %v63
  %v79 = vpack.c.b16 %v66, %v65
  %v80 = vpack.c.b16 %v68, %v67
  %v81 = vpack.c.b16 %v70, %v69
  %v82 = vpack.c.b16 %v72, %v71
  %v83 = vpack.c.b16 %v74, %v73
  %v84 = vpack.c.b16 %v76, %v75
  %v109 = vunpack.c.l.b16 %v29
  %v110 = vunpack.c.l.b16 %v30
  %v111 = vunpack.c.l.b16 %v31
  %v112 = vunpack.c.l.b16 %v32
  %v113 = vunpack.c.l.b16 %v33
  %v114 = vunpack.c.l.b16 %v34
  %v115 = vunpack.c.l.b16 %v35
  %v116 = vunpack.c.l.b16 %v36
  %v117 = vunpack.c.l.b16 %v37
  %v118 = vunpack.c.l.b16 %v38
  %v119 = vunpack.c.l.b16 %v39
  %v120 = vunpack.c.l.b16 %v40
  %v121 = vunpack.c.l.b16 %v41
  %v122 = vunpack.c.l.b16 %v42
  %v123 = vunpack.c.l.b16 %v43
  %v124 = vunpack.c.l.b16 %v44
  %v125 = vpack.c.b16 %v110, %v109
  %v126 = vpack.c.b16 %v112, %v111
  %v127 = vpack.c.b16 %v114, %v113
  %v128 = vpack.c.b16 %v116, %v115
  %v129 = vpack.c.b16 %v118, %v117
  %v130 = vpack.c.b16 %v120, %v119
  %v131 = vpack.c.b16 %v122, %v121
  %v132 = vpack.c.b16 %v124, %v123
  %141 = vmatpush.bf16.msra.mxu0 %v132
  %142 = vmatpush.bf16.msra.mxu0 %v131
  %143 = vmatpush.bf16.msra.mxu0 %v130
  %144 = vmatpush.bf16.msra.mxu0 %v129
  %145 = vmatpush.bf16.msra.mxu0 %v128
  %146 = vmatpush.bf16.msra.mxu0 %v127
  %147 = vmatpush.bf16.msra.mxu0 %v126
  %148 = vmatpush.bf16.msra.mxu0 %v125
  %149 = vmatmul.bf16.gmra.mxu0 %v77
  %v150 = vpop.f32.mrf.mxu0
  %v151 = vadd.f32 0.0, %v150
  %v152 = vpop.f32.mrf.mxu0
  %v153 = vadd.f32 0.0, %v152
  %154 = vmatmul.bf16.gmra.mxu0 %v78
  %v155 = vpop.f32.mrf.mxu0
  %v156 = vadd.f32 0.0, %v155
  %v157 = vpop.f32.mrf.mxu0
  %v158 = vadd.f32 0.0, %v157
  %159 = vmatmul.bf16.gmra.mxu0 %v79
  %v160 = vpop.f32.mrf.mxu0
  %v161 = vadd.f32 0.0, %v160
  %v162 = vpop.f32.mrf.mxu0
  %v163 = vadd.f32 0.0, %v162
  %164 = vmatmul.bf16.gmra.mxu0 %v80
  %v165 = vpop.f32.mrf.mxu0
  %v166 = vadd.f32 0.0, %v165
  %v167 = vpop.f32.mrf.mxu0
  %v168 = vadd.f32 0.0, %v167
  %169 = vmatmul.bf16.gmra.mxu0 %v81
  %v170 = vpop.f32.mrf.mxu0
  %v171 = vadd.f32 0.0, %v170
  %v172 = vpop.f32.mrf.mxu0
  %v173 = vadd.f32 0.0, %v172
  %174 = vmatmul.bf16.gmra.mxu0 %v82
  %v175 = vpop.f32.mrf.mxu0
  %v176 = vadd.f32 0.0, %v175
  %v177 = vpop.f32.mrf.mxu0
  %v178 = vadd.f32 0.0, %v177
  %179 = vmatmul.bf16.gmra.mxu0 %v83
  %v180 = vpop.f32.mrf.mxu0
  %v181 = vadd.f32 0.0, %v180
  %v182 = vpop.f32.mrf.mxu0
  %v183 = vadd.f32 0.0, %v182
  %184 = vmatmul.bf16.gmra.mxu0 %v84
  %v185 = vpop.f32.mrf.mxu0
  %v186 = vadd.f32 0.0, %v185
  %v187 = vpop.f32.mrf.mxu0
  %v188 = vadd.f32 0.0, %v187
  %189 = vdwg.mxu0
  %v190 = vadd.f32 %v151, %v153
  %v191 = vadd.f32 %v190, %v156
  %v192 = vadd.f32 %v191, %v158
  %v193 = vadd.f32 %v192, %v161
  %v194 = vadd.f32 %v193, %v163
  %v195 = vadd.f32 %v194, %v166
  %v196 = vadd.f32 %v195, %v168
  %v197 = vadd.f32 %v196, %v171
  %v198 = vadd.f32 %v197, %v173
  %v199 = vadd.f32 %v198, %v176
  %v200 = vadd.f32 %v199, %v178
  %v201 = vadd.f32 %v200, %v181
  %v202 = vadd.f32 %v201, %v183
  %v203 = vadd.f32 %v202, %v186
  %v204 = vadd.f32 %v203, %v188
  %v205 = vrot.slane %v204, 4
  %v206 = vadd.f32 %v204, %v205
  %v207 = vrot.slane %v206, 2
  %v208 = vadd.f32 %v206, %v207
  %v209 = vrot.slane %v208, 1
  %v210 = vadd.f32 %v208, %v209
  %v211 = vmul.f32 %v151, %v151
  %v212 = vmul.f32 %v153, %v153
  %v213 = vmul.f32 %v156, %v156
  %v214 = vmul.f32 %v158, %v158
  %v215 = vmul.f32 %v161, %v161
  %v216 = vmul.f32 %v163, %v163
  %v217 = vmul.f32 %v166, %v166
  %v218 = vmul.f32 %v168, %v168
  %v219 = vmul.f32 %v171, %v171
  %v220 = vmul.f32 %v173, %v173
  %v221 = vmul.f32 %v176, %v176
  %v222 = vmul.f32 %v178, %v178
  %v223 = vmul.f32 %v181, %v181
  %v224 = vmul.f32 %v183, %v183
  %v225 = vmul.f32 %v186, %v186
  %v226 = vmul.f32 %v188, %v188
  %v227 = vadd.f32 %v211, %v212
  %v228 = vadd.f32 %v227, %v213
  %v229 = vadd.f32 %v228, %v214
  %v230 = vadd.f32 %v229, %v215
  %v231 = vadd.f32 %v230, %v216
  %v232 = vadd.f32 %v231, %v217
  %v233 = vadd.f32 %v232, %v218
  %v234 = vadd.f32 %v233, %v219
  %v235 = vadd.f32 %v234, %v220
  %v236 = vadd.f32 %v235, %v221
  %v237 = vadd.f32 %v236, %v222
  %v238 = vadd.f32 %v237, %v223
  %v239 = vadd.f32 %v238, %v224
  %v240 = vadd.f32 %v239, %v225
  %v241 = vadd.f32 %v240, %v226
  %v242 = vrot.slane %v241, 4
  %v243 = vadd.f32 %v241, %v242
  %v244 = vrot.slane %v243, 2
  %v245 = vadd.f32 %v243, %v244
  %v246 = vrot.slane %v245, 1
  %v247 = vadd.f32 %v245, %v246
  %vm248 = vcmask 1040384
  %v249 = vsel %vm248, %v210, %v247
  %250 = vst [vmem:[%s3] sm:$0x3] %v249
  %251 = vst [vmem:[%s2] sm:$0xff] %v151
  %252 = vst [vmem:[%s2 + $0x8] sm:$0xff] %v153
  %253 = vst [vmem:[%s2 + $0x10] sm:$0xff] %v156
  %254 = vst [vmem:[%s2 + $0x18] sm:$0xff] %v158
  %255 = vst [vmem:[%s2 + $0x20] sm:$0xff] %v161
  %256 = vst [vmem:[%s2 + $0x28] sm:$0xff] %v163
  %257 = vst [vmem:[%s2 + $0x30] sm:$0xff] %v166
  %258 = vst [vmem:[%s2 + $0x38] sm:$0xff] %v168
  %259 = vst [vmem:[%s2 + $0x40] sm:$0xff] %v171
  %260 = vst [vmem:[%s2 + $0x48] sm:$0xff] %v173
  %261 = vst [vmem:[%s2 + $0x50] sm:$0xff] %v176
  %262 = vst [vmem:[%s2 + $0x58] sm:$0xff] %v178
  %263 = vst [vmem:[%s2 + $0x60] sm:$0xff] %v181
  %264 = vst [vmem:[%s2 + $0x68] sm:$0xff] %v183
  %265 = vst [vmem:[%s2 + $0x70] sm:$0xff] %v186
  %266 = vst [vmem:[%s2 + $0x78] sm:$0xff] %v188
  // Predicated region
  $region10: #{nlayer_discriminator_forward.9} parent=0 // pred_check
    _
  $region11: #{nlayer_discriminator_forward.9} parent=0 // pred_check_branch
    %268 = sbr.rel (0) target = $region13
  $region12: #{nlayer_discriminator_forward.9} parent=0 // pred_region
    _
  $region13: #{nlayer_discriminator_forward.9} parent=0 // pred_fallthru
    _
  // Predicated region
  $region14: #{nlayer_discriminator_forward.9} parent=0 // pred_check
    _
  $region15: #{nlayer_discriminator_forward.9} parent=0 // pred_check_branch
    %270 = sbr.rel (0) target = $region17
  $region16: #{nlayer_discriminator_forward.9} parent=0 // pred_region
    _
  $region17: #{nlayer_discriminator_forward.9} parent=0 // pred_fallthru
    _
  // Predicated region
  $region18: #{nlayer_discriminator_forward.9} parent=0 // pred_check
    _
  $region19: #{nlayer_discriminator_forward.9} parent=0 // pred_check_branch
    %272 = sbr.rel (0) target = $region21
  $region20: #{nlayer_discriminator_forward.9} parent=0 // pred_region
    _
  $region21: #{nlayer_discriminator_forward.9} parent=0 // pred_fallthru
    _
  // Predicated region
  $region22: #{nlayer_discriminator_forward.9} parent=0 // pred_check
    _
  $region23: #{nlayer_discriminator_forward.9} parent=0 // pred_check_branch
    %274 = sbr.rel (0) target = $region25
  $region24: #{nlayer_discriminator_forward.9} parent=0 // pred_region
    _
  $region25: #{nlayer_discriminator_forward.9} parent=0 // pred_fallthru
    _

// kernel: nlayer_discriminator_forward.10
$region0: #{nlayer_discriminator_forward.10}
  #allocation0 [shape = 'u32[]', space=smem, size = 0x4, offset = 0x4, fixed_abs, tag = 'smem constant byte address 0x4 - core index']
  #allocation1 [shape = 'u32[72,128]{1,0:T(1,128)}', space=vmem, size = 0x9000, scoped, tag = 'internal scratch']
  %s0 = inlined_call_operand.vmem [shape: f32[128,128], index: 0, kind: input, shape index: {}]
  %s1 = inlined_call_operand.vmem [shape: f32[1,128], index: 1, kind: input, shape index: {}]
  %s2 = inlined_call_operand.vmem [shape: f32[1,128], index: 2, kind: input, shape index: {}]
  %s3 = inlined_call_operand.vmem [shape: f32[128,128], index: 3, kind: output, shape index: {}]
  %s4 = sld [smem:[#allocation0]]
  $region22: #{nlayer_discriminator_forward.10} parent=0
    _
  %s6 = ssub.s32 1, %s4
  %s7 = scalar_select 0, %s6, %s4
  // Predicated region
  $region2: #{nlayer_discriminator_forward.10} parent=0 // pred_check
    _
  $region3: #{nlayer_discriminator_forward.10} parent=0 // pred_check_branch
    %9 = sbr.rel (0) target = $region5
  $region4: #{nlayer_discriminator_forward.10} parent=0 // pred_region
    _
  $region5: #{nlayer_discriminator_forward.10} parent=0 // pred_fallthru
    _
  // Predicated region
  $region6: #{nlayer_discriminator_forward.10} parent=0 // pred_check
    _
  $region7: #{nlayer_discriminator_forward.10} parent=0 // pred_check_branch
    %11 = sbr.rel (0) target = $region9
  $region8: #{nlayer_discriminator_forward.10} parent=0 // pred_region
    _
  $region9: #{nlayer_discriminator_forward.10} parent=0 // pred_fallthru
    _
  // Predicated region
  $region10: #{nlayer_discriminator_forward.10} parent=0 // pred_check
    _
  $region11: #{nlayer_discriminator_forward.10} parent=0 // pred_check_branch
    %13 = sbr.rel (0) target = $region13
  $region12: #{nlayer_discriminator_forward.10} parent=0 // pred_region
    _
  $region13: #{nlayer_discriminator_forward.10} parent=0 // pred_fallthru
    _
  %v14 = vld [vmem:[%s0] sm:$0xff]
  %v15 = vld [vmem:[%s0 + $0x8] sm:$0xff]
  %v16 = vld [vmem:[%s0 + $0x10] sm:$0xff]
  %v17 = vld [vmem:[%s0 + $0x18] sm:$0xff]
  %v18 = vld [vmem:[%s0 + $0x20] sm:$0xff]
  %v19 = vld [vmem:[%s0 + $0x28] sm:$0xff]
  %v20 = vld [vmem:[%s0 + $0x30] sm:$0xff]
  %v21 = vld [vmem:[%s0 + $0x38] sm:$0xff]
  %v22 = vld [vmem:[%s0 + $0x40] sm:$0xff]
  %v23 = vld [vmem:[%s0 + $0x48] sm:$0xff]
  %v24 = vld [vmem:[%s0 + $0x50] sm:$0xff]
  %v25 = vld [vmem:[%s0 + $0x58] sm:$0xff]
  %v26 = vld [vmem:[%s0 + $0x60] sm:$0xff]
  %v27 = vld [vmem:[%s0 + $0x68] sm:$0xff]
  %v28 = vld [vmem:[%s0 + $0x70] sm:$0xff]
  %v29 = vld [vmem:[%s0 + $0x78] sm:$0xff]
  %v30 = vld [vmem:[%s1] sm:$0x1]
  %v32 = vperm.slane %v30, 0
  %v34 = vmul.f32 %v14, %v32
  %v35 = vmul.f32 %v15, %v32
  %v36 = vmul.f32 %v16, %v32
  %v37 = vmul.f32 %v17, %v32
  %v38 = vmul.f32 %v18, %v32
  %v39 = vmul.f32 %v19, %v32
  %v40 = vmul.f32 %v20, %v32
  %v41 = vmul.f32 %v21, %v32
  %v42 = vmul.f32 %v22, %v32
  %v43 = vmul.f32 %v23, %v32
  %v44 = vmul.f32 %v24, %v32
  %v45 = vmul.f32 %v25, %v32
  %v46 = vmul.f32 %v26, %v32
  %v47 = vmul.f32 %v27, %v32
  %v48 = vmul.f32 %v28, %v32
  %v49 = vmul.f32 %v29, %v32
  %v50 = vld [vmem:[%s2] sm:$0x1]
  %v52 = vperm.slane %v50, 0
  %v54 = vadd.f32 %v34, %v52
  %v55 = vadd.f32 %v35, %v52
  %v56 = vadd.f32 %v36, %v52
  %v57 = vadd.f32 %v37, %v52
  %v58 = vadd.f32 %v38, %v52
  %v59 = vadd.f32 %v39, %v52
  %v60 = vadd.f32 %v40, %v52
  %v61 = vadd.f32 %v41, %v52
  %v62 = vadd.f32 %v42, %v52
  %v63 = vadd.f32 %v43, %v52
  %v64 = vadd.f32 %v44, %v52
  %v65 = vadd.f32 %v45, %v52
  %v66 = vadd.f32 %v46, %v52
  %v67 = vadd.f32 %v47, %v52
  %v68 = vadd.f32 %v48, %v52
  %v69 = vadd.f32 %v49, %v52
  %vm70 = vcmp.ge.f32.partialorder %v54, 0.0
  %vm71 = vcmp.ge.f32.partialorder %v55, 0.0
  %vm72 = vcmp.ge.f32.partialorder %v56, 0.0
  %vm73 = vcmp.ge.f32.partialorder %v57, 0.0
  %vm74 = vcmp.ge.f32.partialorder %v58, 0.0
  %vm75 = vcmp.ge.f32.partialorder %v59, 0.0
  %vm76 = vcmp.ge.f32.partialorder %v60, 0.0
  %vm77 = vcmp.ge.f32.partialorder %v61, 0.0
  %vm78 = vcmp.ge.f32.partialorder %v62, 0.0
  %vm79 = vcmp.ge.f32.partialorder %v63, 0.0
  %vm80 = vcmp.ge.f32.partialorder %v64, 0.0
  %vm81 = vcmp.ge.f32.partialorder %v65, 0.0
  %vm82 = vcmp.ge.f32.partialorder %v66, 0.0
  %vm83 = vcmp.ge.f32.partialorder %v67, 0.0
  %vm84 = vcmp.ge.f32.partialorder %v68, 0.0
  %vm85 = vcmp.ge.f32.partialorder %v69, 0.0
  %v86 = vmul.f32 %v54, 0.2
  %v87 = vmul.f32 %v55, 0.2
  %v88 = vmul.f32 %v56, 0.2
  %v89 = vmul.f32 %v57, 0.2
  %v90 = vmul.f32 %v58, 0.2
  %v91 = vmul.f32 %v59, 0.2
  %v92 = vmul.f32 %v60, 0.2
  %v93 = vmul.f32 %v61, 0.2
  %v94 = vmul.f32 %v62, 0.2
  %v95 = vmul.f32 %v63, 0.2
  %v96 = vmul.f32 %v64, 0.2
  %v97 = vmul.f32 %v65, 0.2
  %v98 = vmul.f32 %v66, 0.2
  %v99 = vmul.f32 %v67, 0.2
  %v100 = vmul.f32 %v68, 0.2
  %v101 = vmul.f32 %v69, 0.2
  %v102 = vsel %vm70, %v54, %v86
  %v103 = vsel %vm71, %v55, %v87
  %v104 = vsel %vm72, %v56, %v88
  %v105 = vsel %vm73, %v57, %v89
  %v106 = vsel %vm74, %v58, %v90
  %v107 = vsel %vm75, %v59, %v91
  %v108 = vsel %vm76, %v60, %v92
  %v109 = vsel %vm77, %v61, %v93
  %v110 = vsel %vm78, %v62, %v94
  %v111 = vsel %vm79, %v63, %v95
  %v112 = vsel %vm80, %v64, %v96
  %v113 = vsel %vm81, %v65, %v97
  %v114 = vsel %vm82, %v66, %v98
  %v115 = vsel %vm83, %v67, %v99
  %v116 = vsel %vm84, %v68, %v100
  %v117 = vsel %vm85, %v69, %v101
  %118 = vst [vmem:[%s3] sm:$0xff] %v102
  %119 = vst [vmem:[%s3 + $0x8] sm:$0xff] %v103
  %120 = vst [vmem:[%s3 + $0x10] sm:$0xff] %v104
  %121 = vst [vmem:[%s3 + $0x18] sm:$0xff] %v105
  %122 = vst [vmem:[%s3 + $0x20] sm:$0xff] %v106
  %123 = vst [vmem:[%s3 + $0x28] sm:$0xff] %v107
  %124 = vst [vmem:[%s3 + $0x30] sm:$0xff] %v108
  %125 = vst [vmem:[%s3 + $0x38] sm:$0xff] %v109
  %126 = vst [vmem:[%s3 + $0x40] sm:$0xff] %v110
  %127 = vst [vmem:[%s3 + $0x48] sm:$0xff] %v111
  %128 = vst [vmem:[%s3 + $0x50] sm:$0xff] %v112
  %129 = vst [vmem:[%s3 + $0x58] sm:$0xff] %v113
  %130 = vst [vmem:[%s3 + $0x60] sm:$0xff] %v114
  %131 = vst [vmem:[%s3 + $0x68] sm:$0xff] %v115
  %132 = vst [vmem:[%s3 + $0x70] sm:$0xff] %v116
  %133 = vst [vmem:[%s3 + $0x78] sm:$0xff] %v117
  // Predicated region
  $region14: #{nlayer_discriminator_forward.10} parent=0 // pred_check
    _
  $region15: #{nlayer_discriminator_forward.10} parent=0 // pred_check_branch
    %135 = sbr.rel (0) target = $region17
  $region16: #{nlayer_discriminator_forward.10} parent=0 // pred_region
    _
  $region17: #{nlayer_discriminator_forward.10} parent=0 // pred_fallthru
    _
  // Predicated region
  $region18: #{nlayer_discriminator_forward.10} parent=0 // pred_check
    _
  $region19: #{nlayer_discriminator_forward.10} parent=0 // pred_check_branch
    %137 = sbr.rel (0) target = $region21
  $region20: #{nlayer_discriminator_forward.10} parent=0 // pred_region
    _
  $region21: #{nlayer_discriminator_forward.10} parent=0 // pred_fallthru
    _

// kernel: nlayer_discriminator_forward.11
$region0: #{nlayer_discriminator_forward.11}
  #allocation0 [shape = 'u32[]', space=smem, size = 0x4, offset = 0x4, fixed_abs, tag = 'smem constant byte address 0x4 - core index']
  #allocation1 [shape = 'u32[72,128]{1,0:T(1,128)}', space=vmem, size = 0x9000, scoped, tag = 'internal scratch']
  %s0 = inlined_call_operand.vmem [shape: bf16[128,256], index: 0, kind: input, shape index: {}]
  %s1 = inlined_call_operand.vmem [shape: bf16[256,128], index: 1, kind: input, shape index: {}]
  %s2 = inlined_call_operand.vmem [shape: f32[128,128], index: 2, kind: output, shape index: {0}]
  %s3 = inlined_call_operand.vmem [shape: f32[1,2,128], index: 3, kind: output, shape index: {1}]
  %4 = xla_tuple %s2, %s3
  %s5 = sld [smem:[#allocation0]]
  $region26: #{nlayer_discriminator_forward.11} parent=0
    _
  %s7 = ssub.s32 1, %s5
  %s8 = scalar_select 0, %s7, %s5
  // Predicated region
  $region2: #{nlayer_discriminator_forward.11} parent=0 // pred_check
    _
  $region3: #{nlayer_discriminator_forward.11} parent=0 // pred_check_branch
    %10 = sbr.rel (0) target = $region5
  $region4: #{nlayer_discriminator_forward.11} parent=0 // pred_region
    _
  $region5: #{nlayer_discriminator_forward.11} parent=0 // pred_fallthru
    _
  // Predicated region
  $region6: #{nlayer_discriminator_forward.11} parent=0 // pred_check
    _
  $region7: #{nlayer_discriminator_forward.11} parent=0 // pred_check_branch
    %12 = sbr.rel (0) target = $region9
  $region8: #{nlayer_discriminator_forward.11} parent=0 // pred_region
    _
  $region9: #{nlayer_discriminator_forward.11} parent=0 // pred_fallthru
    _
  %v13 = vld [vmem:[%s0] sm:$0xff]
  %v14 = vld [vmem:[%s0 + $0x8] sm:$0xff]
  %v15 = vld [vmem:[%s0 + $0x10] sm:$0xff]
  %v16 = vld [vmem:[%s0 + $0x18] sm:$0xff]
  %v17 = vld [vmem:[%s0 + $0x20] sm:$0xff]
  %v18 = vld [vmem:[%s0 + $0x28] sm:$0xff]
  %v19 = vld [vmem:[%s0 + $0x30] sm:$0xff]
  %v20 = vld [vmem:[%s0 + $0x38] sm:$0xff]
  %v21 = vld [vmem:[%s0 + $0x40] sm:$0xff]
  %v22 = vld [vmem:[%s0 + $0x48] sm:$0xff]
  %v23 = vld [vmem:[%s0 + $0x50] sm:$0xff]
  %v24 = vld [vmem:[%s0 + $0x58] sm:$0xff]
  %v25 = vld [vmem:[%s0 + $0x60] sm:$0xff]
  %v26 = vld [vmem:[%s0 + $0x68] sm:$0xff]
  %v27 = vld [vmem:[%s0 + $0x70] sm:$0xff]
  %v28 = vld [vmem:[%s0 + $0x78] sm:$0xff]
  %v29 = vld [vmem:[%s1] sm:$0xf]
  %v30 = vld [vmem:[%s1 + $0x4] sm:$0xf]
  %v31 = vld [vmem:[%s1 + $0x8] sm:$0xf]
  %v32 = vld [vmem:[%s1 + $0xc] sm:$0xf]
  %v33 = vld [vmem:[%s1 + $0x10] sm:$0xf]
  %v34 = vld [vmem:[%s1 + $0x14] sm:$0xf]
  %v35 = vld [vmem:[%s1 + $0x18] sm:$0xf]
  %v36 = vld [vmem:[%s1 + $0x1c] sm:$0xf]
  %v37 = vld [vmem:[%s1 + $0x20] sm:$0xf]
  %v38 = vld [vmem:[%s1 + $0x24] sm:$0xf]
  %v39 = vld [vmem:[%s1 + $0x28] sm:$0xf]
  %v40 = vld [vmem:[%s1 + $0x2c] sm:$0xf]
  %v41 = vld [vmem:[%s1 + $0x30] sm:$0xf]
  %v42 = vld [vmem:[%s1 + $0x34] sm:$0xf]
  %v43 = vld [vmem:[%s1 + $0x38] sm:$0xf]
  %v44 = vld [vmem:[%s1 + $0x3c] sm:$0xf]
  %v45 = vld [vmem:[%s1 + $0x40] sm:$0xf]
  %v46 = vld [vmem:[%s1 + $0x44] sm:$0xf]
  %v47 = vld [vmem:[%s1 + $0x48] sm:$0xf]
  %v48 = vld [vmem:[%s1 + $0x4c] sm:$0xf]
  %v49 = vld [vmem:[%s1 + $0x50] sm:$0xf]
  %v50 = vld [vmem:[%s1 + $0x54] sm:$0xf]
  %v51 = vld [vmem:[%s1 + $0x58] sm:$0xf]
  %v52 = vld [vmem:[%s1 + $0x5c] sm:$0xf]
  %v53 = vld [vmem:[%s1 + $0x60] sm:$0xf]
  %v54 = vld [vmem:[%s1 + $0x64] sm:$0xf]
  %v55 = vld [vmem:[%s1 + $0x68] sm:$0xf]
  %v56 = vld [vmem:[%s1 + $0x6c] sm:$0xf]
  %v57 = vld [vmem:[%s1 + $0x70] sm:$0xf]
  %v58 = vld [vmem:[%s1 + $0x74] sm:$0xf]
  %v59 = vld [vmem:[%s1 + $0x78] sm:$0xf]
  %v60 = vld [vmem:[%s1 + $0x7c] sm:$0xf]
  %v77 = vunpack.c.l.b16 %v13
  %v78 = vunpack.c.h.b16 %v13
  %v79 = vunpack.c.l.b16 %v14
  %v80 = vunpack.c.h.b16 %v14
  %v81 = vunpack.c.l.b16 %v15
  %v82 = vunpack.c.h.b16 %v15
  %v83 = vunpack.c.l.b16 %v16
  %v84 = vunpack.c.h.b16 %v16
  %v85 = vunpack.c.l.b16 %v17
  %v86 = vunpack.c.h.b16 %v17
  %v87 = vunpack.c.l.b16 %v18
  %v88 = vunpack.c.h.b16 %v18
  %v89 = vunpack.c.l.b16 %v19
  %v90 = vunpack.c.h.b16 %v19
  %v91 = vunpack.c.l.b16 %v20
  %v92 = vunpack.c.h.b16 %v20
  %v93 = vunpack.c.l.b16 %v21
  %v94 = vunpack.c.h.b16 %v21
  %v95 = vunpack.c.l.b16 %v22
  %v96 = vunpack.c.h.b16 %v22
  %v97 = vunpack.c.l.b16 %v23
  %v98 = vunpack.c.h.b16 %v23
  %v99 = vunpack.c.l.b16 %v24
  %v100 = vunpack.c.h.b16 %v24
  %v101 = vunpack.c.l.b16 %v25
  %v102 = vunpack.c.h.b16 %v25
  %v103 = vunpack.c.l.b16 %v26
  %v104 = vunpack.c.h.b16 %v26
  %v105 = vunpack.c.l.b16 %v27
  %v106 = vunpack.c.h.b16 %v27
  %v107 = vunpack.c.l.b16 %v28
  %v108 = vunpack.c.h.b16 %v28
  %v109 = vpack.c.b16 %v79, %v77
  %v110 = vpack.c.b16 %v80, %v78
  %v111 = vpack.c.b16 %v83, %v81
  %v112 = vpack.c.b16 %v84, %v82
  %v113 = vpack.c.b16 %v87, %v85
  %v114 = vpack.c.b16 %v88, %v86
  %v115 = vpack.c.b16 %v91, %v89
  %v116 = vpack.c.b16 %v92, %v90
  %v117 = vpack.c.b16 %v95, %v93
  %v118 = vpack.c.b16 %v96, %v94
  %v119 = vpack.c.b16 %v99, %v97
  %v120 = vpack.c.b16 %v100, %v98
  %v121 = vpack.c.b16 %v103, %v101
  %v122 = vpack.c.b16 %v104, %v102
  %v123 = vpack.c.b16 %v107, %v105
  %v124 = vpack.c.b16 %v108, %v106
  %v173 = vunpack.c.l.b16 %v29
  %v174 = vunpack.c.l.b16 %v30
  %v175 = vunpack.c.l.b16 %v31
  %v176 = vunpack.c.l.b16 %v32
  %v177 = vunpack.c.l.b16 %v33
  %v178 = vunpack.c.l.b16 %v34
  %v179 = vunpack.c.l.b16 %v35
  %v180 = vunpack.c.l.b16 %v36
  %v181 = vunpack.c.l.b16 %v37
  %v182 = vunpack.c.l.b16 %v38
  %v183 = vunpack.c.l.b16 %v39
  %v184 = vunpack.c.l.b16 %v40
  %v185 = vunpack.c.l.b16 %v41
  %v186 = vunpack.c.l.b16 %v42
  %v187 = vunpack.c.l.b16 %v43
  %v188 = vunpack.c.l.b16 %v44
  %v189 = vunpack.c.l.b16 %v45
  %v190 = vunpack.c.l.b16 %v46
  %v191 = vunpack.c.l.b16 %v47
  %v192 = vunpack.c.l.b16 %v48
  %v193 = vunpack.c.l.b16 %v49
  %v194 = vunpack.c.l.b16 %v50
  %v195 = vunpack.c.l.b16 %v51
  %v196 = vunpack.c.l.b16 %v52
  %v197 = vunpack.c.l.b16 %v53
  %v198 = vunpack.c.l.b16 %v54
  %v199 = vunpack.c.l.b16 %v55
  %v200 = vunpack.c.l.b16 %v56
  %v201 = vunpack.c.l.b16 %v57
  %v202 = vunpack.c.l.b16 %v58
  %v203 = vunpack.c.l.b16 %v59
  %v204 = vunpack.c.l.b16 %v60
  %v205 = vpack.c.b16 %v174, %v173
  %v206 = vpack.c.b16 %v176, %v175
  %v207 = vpack.c.b16 %v178, %v177
  %v208 = vpack.c.b16 %v180, %v179
  %v209 = vpack.c.b16 %v182, %v181
  %v210 = vpack.c.b16 %v184, %v183
  %v211 = vpack.c.b16 %v186, %v185
  %v212 = vpack.c.b16 %v188, %v187
  %v213 = vpack.c.b16 %v190, %v189
  %v214 = vpack.c.b16 %v192, %v191
  %v215 = vpack.c.b16 %v194, %v193
  %v216 = vpack.c.b16 %v196, %v195
  %v217 = vpack.c.b16 %v198, %v197
  %v218 = vpack.c.b16 %v200, %v199
  %v219 = vpack.c.b16 %v202, %v201
  %v220 = vpack.c.b16 %v204, %v203
  %237 = vmatpush.bf16.msra.mxu0 %v212
  %238 = vmatpush.bf16.msra.mxu0 %v211
  %239 = vmatpush.bf16.msra.mxu0 %v210
  %240 = vmatpush.bf16.msra.mxu0 %v209
  %241 = vmatpush.bf16.msra.mxu0 %v208
  %242 = vmatpush.bf16.msra.mxu0 %v207
  %243 = vmatpush.bf16.msra.mxu0 %v206
  %244 = vmatpush.bf16.msra.mxu0 %v205
  %245 = vmatmul.bf16.gmra.mxu0 %v109
  %v246 = vpop.f32.mrf.mxu0
  %v247 = vadd.f32 0.0, %v246
  %v248 = vpop.f32.mrf.mxu0
  %v249 = vadd.f32 0.0, %v248
  %250 = vmatmul.bf16.gmra.mxu0 %v111
  %v251 = vpop.f32.mrf.mxu0
  %v252 = vadd.f32 0.0, %v251
  %v253 = vpop.f32.mrf.mxu0
  %v254 = vadd.f32 0.0, %v253
  %255 = vmatmul.bf16.gmra.mxu0 %v113
  %v256 = vpop.f32.mrf.mxu0
  %v257 = vadd.f32 0.0, %v256
  %v258 = vpop.f32.mrf.mxu0
  %v259 = vadd.f32 0.0, %v258
  %260 = vmatmul.bf16.gmra.mxu0 %v115
  %v261 = vpop.f32.mrf.mxu0
  %v262 = vadd.f32 0.0, %v261
  %v263 = vpop.f32.mrf.mxu0
  %v264 = vadd.f32 0.0, %v263
  %265 = vmatmul.bf16.gmra.mxu0 %v117
  %v266 = vpop.f32.mrf.mxu0
  %v267 = vadd.f32 0.0, %v266
  %v268 = vpop.f32.mrf.mxu0
  %v269 = vadd.f32 0.0, %v268
  %270 = vmatmul.bf16.gmra.mxu0 %v119
  %v271 = vpop.f32.mrf.mxu0
  %v272 = vadd.f32 0.0, %v271
  %v273 = vpop.f32.mrf.mxu0
  %v274 = vadd.f32 0.0, %v273
  %275 = vmatmul.bf16.gmra.mxu0 %v121
  %v276 = vpop.f32.mrf.mxu0
  %v277 = vadd.f32 0.0, %v276
  %v278 = vpop.f32.mrf.mxu0
  %v279 = vadd.f32 0.0, %v278
  %280 = vmatmul.bf16.gmra.mxu0 %v123
  %v281 = vpop.f32.mrf.mxu0
  %v282 = vadd.f32 0.0, %v281
  %v283 = vpop.f32.mrf.mxu0
  %v284 = vadd.f32 0.0, %v283
  %285 = vdwg.mxu0
  %286 = vmatpush.bf16.msra.mxu0 %v220
  %287 = vmatpush.bf16.msra.mxu0 %v219
  %288 = vmatpush.bf16.msra.mxu0 %v218
  %289 = vmatpush.bf16.msra.mxu0 %v217
  %290 = vmatpush.bf16.msra.mxu0 %v216
  %291 = vmatpush.bf16.msra.mxu0 %v215
  %292 = vmatpush.bf16.msra.mxu0 %v214
  %293 = vmatpush.bf16.msra.mxu0 %v213
  %294 = vmatmul.bf16.gmra.mxu0 %v110
  %v295 = vpop.f32.mrf.mxu0
  %v296 = vadd.f32 %v247, %v295
  %v297 = vpop.f32.mrf.mxu0
  %v298 = vadd.f32 %v249, %v297
  %299 = vmatmul.bf16.gmra.mxu0 %v112
  %v300 = vpop.f32.mrf.mxu0
  %v301 = vadd.f32 %v252, %v300
  %v302 = vpop.f32.mrf.mxu0
  %v303 = vadd.f32 %v254, %v302
  %304 = vmatmul.bf16.gmra.mxu0 %v114
  %v305 = vpop.f32.mrf.mxu0
  %v306 = vadd.f32 %v257, %v305
  %v307 = vpop.f32.mrf.mxu0
  %v308 = vadd.f32 %v259, %v307
  %309 = vmatmul.bf16.gmra.mxu0 %v116
  %v310 = vpop.f32.mrf.mxu0
  %v311 = vadd.f32 %v262, %v310
  %v312 = vpop.f32.mrf.mxu0
  %v313 = vadd.f32 %v264, %v312
  %314 = vmatmul.bf16.gmra.mxu0 %v118
  %v315 = vpop.f32.mrf.mxu0
  %v316 = vadd.f32 %v267, %v315
  %v317 = vpop.f32.mrf.mxu0
  %v318 = vadd.f32 %v269, %v317
  %319 = vmatmul.bf16.gmra.mxu0 %v120
  %v320 = vpop.f32.mrf.mxu0
  %v321 = vadd.f32 %v272, %v320
  %v322 = vpop.f32.mrf.mxu0
  %v323 = vadd.f32 %v274, %v322
  %324 = vmatmul.bf16.gmra.mxu0 %v122
  %v325 = vpop.f32.mrf.mxu0
  %v326 = vadd.f32 %v277, %v325
  %v327 = vpop.f32.mrf.mxu0
  %v328 = vadd.f32 %v279, %v327
  %329 = vmatmul.bf16.gmra.mxu0 %v124
  %v330 = vpop.f32.mrf.mxu0
  %v331 = vadd.f32 %v282, %v330
  %v332 = vpop.f32.mrf.mxu0
  %v333 = vadd.f32 %v284, %v332
  %334 = vdwg.mxu0
  %v335 = vadd.f32 %v296, %v298
  %v336 = vadd.f32 %v335, %v301
  %v337 = vadd.f32 %v336, %v303
  %v338 = vadd.f32 %v337, %v306
  %v339 = vadd.f32 %v338, %v308
  %v340 = vadd.f32 %v339, %v311
  %v341 = vadd.f32 %v340, %v313
  %v342 = vadd.f32 %v341, %v316
  %v343 = vadd.f32 %v342, %v318
  %v344 = vadd.f32 %v343, %v321
  %v345 = vadd.f32 %v344, %v323
  %v346 = vadd.f32 %v345, %v326
  %v347 = vadd.f32 %v346, %v328
  %v348 = vadd.f32 %v347, %v331
  %v349 = vadd.f32 %v348, %v333
  %v350 = vrot.slane %v349, 4
  %v351 = vadd.f32 %v349, %v350
  %v352 = vrot.slane %v351, 2
  %v353 = vadd.f32 %v351, %v352
  %v354 = vrot.slane %v353, 1
  %v355 = vadd.f32 %v353, %v354
  %v356 = vmul.f32 %v296, %v296
  %v357 = vmul.f32 %v298, %v298
  %v358 = vmul.f32 %v301, %v301
  %v359 = vmul.f32 %v303, %v303
  %v360 = vmul.f32 %v306, %v306
  %v361 = vmul.f32 %v308, %v308
  %v362 = vmul.f32 %v311, %v311
  %v363 = vmul.f32 %v313, %v313
  %v364 = vmul.f32 %v316, %v316
  %v365 = vmul.f32 %v318, %v318
  %v366 = vmul.f32 %v321, %v321
  %v367 = vmul.f32 %v323, %v323
  %v368 = vmul.f32 %v326, %v326
  %v369 = vmul.f32 %v328, %v328
  %v370 = vmul.f32 %v331, %v331
  %v371 = vmul.f32 %v333, %v333
  %v372 = vadd.f32 %v356, %v357
  %v373 = vadd.f32 %v372, %v358
  %v374 = vadd.f32 %v373, %v359
  %v375 = vadd.f32 %v374, %v360
  %v376 = vadd.f32 %v375, %v361
  %v377 = vadd.f32 %v376, %v362
  %v378 = vadd.f32 %v377, %v363
  %v379 = vadd.f32 %v378, %v364
  %v380 = vadd.f32 %v379, %v365
  %v381 = vadd.f32 %v380, %v366
  %v382 = vadd.f32 %v381, %v367
  %v383 = vadd.f32 %v382, %v368
  %v384 = vadd.f32 %v383, %v369
  %v385 = vadd.f32 %v384, %v370
  %v386 = vadd.f32 %v385, %v371
  %v387 = vrot.slane %v386, 4
  %v388 = vadd.f32 %v386, %v387
  %v389 = vrot.slane %v388, 2
  %v390 = vadd.f32 %v388, %v389
  %v391 = vrot.slane %v390, 1
  %v392 = vadd.f32 %v390, %v391
  %vm393 = vcmask 1040384
  %v394 = vsel %vm393, %v355, %v392
  %395 = vst [vmem:[%s3] sm:$0x3] %v394
  %396 = vst [vmem:[%s2] sm:$0xff] %v296
  %397 = vst [vmem:[%s2 + $0x8] sm:$0xff] %v298
  %398 = vst [vmem:[%s2 + $0x10] sm:$0xff] %v301
  %399 = vst [vmem:[%s2 + $0x18] sm:$0xff] %v303
  %400 = vst [vmem:[%s2 + $0x20] sm:$0xff] %v306
  %401 = vst [vmem:[%s2 + $0x28] sm:$0xff] %v308
  %402 = vst [vmem:[%s2 + $0x30] sm:$0xff] %v311
  %403 = vst [vmem:[%s2 + $0x38] sm:$0xff] %v313
  %404 = vst [vmem:[%s2 + $0x40] sm:$0xff] %v316
  %405 = vst [vmem:[%s2 + $0x48] sm:$0xff] %v318
  %406 = vst [vmem:[%s2 + $0x50] sm:$0xff] %v321
  %407 = vst [vmem:[%s2 + $0x58] sm:$0xff] %v323
  %408 = vst [vmem:[%s2 + $0x60] sm:$0xff] %v326
  %409 = vst [vmem:[%s2 + $0x68] sm:$0xff] %v328
  %410 = vst [vmem:[%s2 + $0x70] sm:$0xff] %v331
  %411 = vst [vmem:[%s2 + $0x78] sm:$0xff] %v333
  // Predicated region
  $region10: #{nlayer_discriminator_forward.11} parent=0 // pred_check
    _
  $region11: #{nlayer_discriminator_forward.11} parent=0 // pred_check_branch
    %413 = sbr.rel (0) target = $region13
  $region12: #{nlayer_discriminator_forward.11} parent=0 // pred_region
    _
  $region13: #{nlayer_discriminator_forward.11} parent=0 // pred_fallthru
    _
  // Predicated region
  $region14: #{nlayer_discriminator_forward.11} parent=0 // pred_check
    _
  $region15: #{nlayer_discriminator_forward.11} parent=0 // pred_check_branch
    %415 = sbr.rel (0) target = $region17
  $region16: #{nlayer_discriminator_forward.11} parent=0 // pred_region
    _
  $region17: #{nlayer_discriminator_forward.11} parent=0 // pred_fallthru
    _
  // Predicated region
  $region18: #{nlayer_discriminator_forward.11} parent=0 // pred_check
    _
  $region19: #{nlayer_discriminator_forward.11} parent=0 // pred_check_branch
    %417 = sbr.rel (0) target = $region21
  $region20: #{nlayer_discriminator_forward.11} parent=0 // pred_region
    _
  $region21: #{nlayer_discriminator_forward.11} parent=0 // pred_fallthru
    _
  // Predicated region
  $region22: #{nlayer_discriminator_forward.11} parent=0 // pred_check
    _
  $region23: #{nlayer_discriminator_forward.11} parent=0 // pred_check_branch
    %419 = sbr.rel (0) target = $region25
  $region24: #{nlayer_discriminator_forward.11} parent=0 // pred_region
    _
  $region25: #{nlayer_discriminator_forward.11} parent=0 // pred_fallthru
    _

// kernel: nlayer_discriminator_forward.13
$region0: #{nlayer_discriminator_forward.13}
  #allocation0 [shape = 'u32[]', space=smem, size = 0x4, offset = 0x4, fixed_abs, tag = 'smem constant byte address 0x4 - core index']
  #allocation1 [shape = 'u32[72,128]{1,0:T(1,128)}', space=vmem, size = 0x9000, scoped, tag = 'internal scratch']
  %s0 = inlined_call_operand.vmem [shape: bf16[128,512], index: 0, kind: input, shape index: {}]
  %s1 = inlined_call_operand.vmem [shape: bf16[512,128], index: 1, kind: input, shape index: {}]
  %s2 = inlined_call_operand.vmem [shape: f32[128,128], index: 2, kind: output, shape index: {0}]
  %s3 = inlined_call_operand.vmem [shape: f32[1,2,128], index: 3, kind: output, shape index: {1}]
  %4 = xla_tuple %s2, %s3
  %s5 = sld [smem:[#allocation0]]
  $region26: #{nlayer_discriminator_forward.13} parent=0
    _
  %s7 = ssub.s32 1, %s5
  %s8 = scalar_select 0, %s7, %s5
  // Predicated region
  $region2: #{nlayer_discriminator_forward.13} parent=0 // pred_check
    _
  $region3: #{nlayer_discriminator_forward.13} parent=0 // pred_check_branch
    %10 = sbr.rel (0) target = $region5
  $region4: #{nlayer_discriminator_forward.13} parent=0 // pred_region
    _
  $region5: #{nlayer_discriminator_forward.13} parent=0 // pred_fallthru
    _
  // Predicated region
  $region6: #{nlayer_discriminator_forward.13} parent=0 // pred_check
    _
  $region7: #{nlayer_discriminator_forward.13} parent=0 // pred_check_branch
    %12 = sbr.rel (0) target = $region9
  $region8: #{nlayer_discriminator_forward.13} parent=0 // pred_region
    _
  $region9: #{nlayer_discriminator_forward.13} parent=0 // pred_fallthru
    _
  %v13 = vld [vmem:[%s0] sm:$0xff]
  %v14 = vld [vmem:[%s0 + $0x8] sm:$0xff]
  %v15 = vld [vmem:[%s0 + $0x10] sm:$0xff]
  %v16 = vld [vmem:[%s0 + $0x18] sm:$0xff]
  %v17 = vld [vmem:[%s0 + $0x20] sm:$0xff]
  %v18 = vld [vmem:[%s0 + $0x28] sm:$0xff]
  %v19 = vld [vmem:[%s0 + $0x30] sm:$0xff]
  %v20 = vld [vmem:[%s0 + $0x38] sm:$0xff]
  %v21 = vld [vmem:[%s0 + $0x40] sm:$0xff]
  %v22 = vld [vmem:[%s0 + $0x48] sm:$0xff]
  %v23 = vld [vmem:[%s0 + $0x50] sm:$0xff]
  %v24 = vld [vmem:[%s0 + $0x58] sm:$0xff]
  %v25 = vld [vmem:[%s0 + $0x60] sm:$0xff]
  %v26 = vld [vmem:[%s0 + $0x68] sm:$0xff]
  %v27 = vld [vmem:[%s0 + $0x70] sm:$0xff]
  %v28 = vld [vmem:[%s0 + $0x78] sm:$0xff]
  %v29 = vld [vmem:[%s0 + $0x80] sm:$0xff]
  %v30 = vld [vmem:[%s0 + $0x88] sm:$0xff]
  %v31 = vld [vmem:[%s0 + $0x90] sm:$0xff]
  %v32 = vld [vmem:[%s0 + $0x98] sm:$0xff]
  %v33 = vld [vmem:[%s0 + $0xa0] sm:$0xff]
  %v34 = vld [vmem:[%s0 + $0xa8] sm:$0xff]
  %v35 = vld [vmem:[%s0 + $0xb0] sm:$0xff]
  %v36 = vld [vmem:[%s0 + $0xb8] sm:$0xff]
  %v37 = vld [vmem:[%s0 + $0xc0] sm:$0xff]
  %v38 = vld [vmem:[%s0 + $0xc8] sm:$0xff]
  %v39 = vld [vmem:[%s0 + $0xd0] sm:$0xff]
  %v40 = vld [vmem:[%s0 + $0xd8] sm:$0xff]
  %v41 = vld [vmem:[%s0 + $0xe0] sm:$0xff]
  %v42 = vld [vmem:[%s0 + $0xe8] sm:$0xff]
  %v43 = vld [vmem:[%s0 + $0xf0] sm:$0xff]
  %v44 = vld [vmem:[%s0 + $0xf8] sm:$0xff]
  %v45 = vld [vmem:[%s1] sm:$0xf]
  %v46 = vld [vmem:[%s1 + $0x4] sm:$0xf]
  %v47 = vld [vmem:[%s1 + $0x8] sm:$0xf]
  %v48 = vld [vmem:[%s1 + $0xc] sm:$0xf]
  %v49 = vld [vmem:[%s1 + $0x10] sm:$0xf]
  %v50 = vld [vmem:[%s1 + $0x14] sm:$0xf]
  %v51 = vld [vmem:[%s1 + $0x18] sm:$0xf]
  %v52 = vld [vmem:[%s1 + $0x1c] sm:$0xf]
  %v53 = vld [vmem:[%s1 + $0x20] sm:$0xf]
  %v54 = vld [vmem:[%s1 + $0x24] sm:$0xf]
  %v55 = vld [vmem:[%s1 + $0x28] sm:$0xf]
  %v56 = vld [vmem:[%s1 + $0x2c] sm:$0xf]
  %v57 = vld [vmem:[%s1 + $0x30] sm:$0xf]
  %v58 = vld [vmem:[%s1 + $0x34] sm:$0xf]
  %v59 = vld [vmem:[%s1 + $0x38] sm:$0xf]
  %v60 = vld [vmem:[%s1 + $0x3c] sm:$0xf]
  %v61 = vld [vmem:[%s1 + $0x40] sm:$0xf]
  %v62 = vld [vmem:[%s1 + $0x44] sm:$0xf]
  %v63 = vld [vmem:[%s1 + $0x48] sm:$0xf]
  %v64 = vld [vmem:[%s1 + $0x4c] sm:$0xf]
  %v65 = vld [vmem:[%s1 + $0x50] sm:$0xf]
  %v66 = vld [vmem:[%s1 + $0x54] sm:$0xf]
  %v67 = vld [vmem:[%s1 + $0x58] sm:$0xf]
  %v68 = vld [vmem:[%s1 + $0x5c] sm:$0xf]
  %v69 = vld [vmem:[%s1 + $0x60] sm:$0xf]
  %v70 = vld [vmem:[%s1 + $0x64] sm:$0xf]
  %v71 = vld [vmem:[%s1 + $0x68] sm:$0xf]
  %v72 = vld [vmem:[%s1 + $0x6c] sm:$0xf]
  %v73 = vld [vmem:[%s1 + $0x70] sm:$0xf]
  %v74 = vld [vmem:[%s1 + $0x74] sm:$0xf]
  %v75 = vld [vmem:[%s1 + $0x78] sm:$0xf]
  %v76 = vld [vmem:[%s1 + $0x7c] sm:$0xf]
  %v77 = vld [vmem:[%s1 + $0x80] sm:$0xf]
  %v78 = vld [vmem:[%s1 + $0x84] sm:$0xf]
  %v79 = vld [vmem:[%s1 + $0x88] sm:$0xf]
  %v80 = vld [vmem:[%s1 + $0x8c] sm:$0xf]
  %v81 = vld [vmem:[%s1 + $0x90] sm:$0xf]
  %v82 = vld [vmem:[%s1 + $0x94] sm:$0xf]
  %v83 = vld [vmem:[%s1 + $0x98] sm:$0xf]
  %v84 = vld [vmem:[%s1 + $0x9c] sm:$0xf]
  %v85 = vld [vmem:[%s1 + $0xa0] sm:$0xf]
  %v86 = vld [vmem:[%s1 + $0xa4] sm:$0xf]
  %v87 = vld [vmem:[%s1 + $0xa8] sm:$0xf]
  %v88 = vld [vmem:[%s1 + $0xac] sm:$0xf]
  %v89 = vld [vmem:[%s1 + $0xb0] sm:$0xf]
  %v90 = vld [vmem:[%s1 + $0xb4] sm:$0xf]
  %v91 = vld [vmem:[%s1 + $0xb8] sm:$0xf]
  %v92 = vld [vmem:[%s1 + $0xbc] sm:$0xf]
  %v93 = vld [vmem:[%s1 + $0xc0] sm:$0xf]
  %v94 = vld [vmem:[%s1 + $0xc4] sm:$0xf]
  %v95 = vld [vmem:[%s1 + $0xc8] sm:$0xf]
  %v96 = vld [vmem:[%s1 + $0xcc] sm:$0xf]
  %v97 = vld [vmem:[%s1 + $0xd0] sm:$0xf]
  %v98 = vld [vmem:[%s1 + $0xd4] sm:$0xf]
  %v99 = vld [vmem:[%s1 + $0xd8] sm:$0xf]
  %v100 = vld [vmem:[%s1 + $0xdc] sm:$0xf]
  %v101 = vld [vmem:[%s1 + $0xe0] sm:$0xf]
  %v102 = vld [vmem:[%s1 + $0xe4] sm:$0xf]
  %v103 = vld [vmem:[%s1 + $0xe8] sm:$0xf]
  %v104 = vld [vmem:[%s1 + $0xec] sm:$0xf]
  %v105 = vld [vmem:[%s1 + $0xf0] sm:$0xf]
  %v106 = vld [vmem:[%s1 + $0xf4] sm:$0xf]
  %v107 = vld [vmem:[%s1 + $0xf8] sm:$0xf]
  %v108 = vld [vmem:[%s1 + $0xfc] sm:$0xf]
  %v141 = vunpack.c.l.b16 %v13
  %v142 = vunpack.c.h.b16 %v13
  %v143 = vunpack.c.l.b16 %v14
  %v144 = vunpack.c.h.b16 %v14
  %v145 = vunpack.c.l.b16 %v15
  %v146 = vunpack.c.h.b16 %v15
  %v147 = vunpack.c.l.b16 %v16
  %v148 = vunpack.c.h.b16 %v16
  %v149 = vunpack.c.l.b16 %v17
  %v150 = vunpack.c.h.b16 %v17
  %v151 = vunpack.c.l.b16 %v18
  %v152 = vunpack.c.h.b16 %v18
  %v153 = vunpack.c.l.b16 %v19
  %v154 = vunpack.c.h.b16 %v19
  %v155 = vunpack.c.l.b16 %v20
  %v156 = vunpack.c.h.b16 %v20
  %v157 = vunpack.c.l.b16 %v21
  %v158 = vunpack.c.h.b16 %v21
  %v159 = vunpack.c.l.b16 %v22
  %v160 = vunpack.c.h.b16 %v22
  %v161 = vunpack.c.l.b16 %v23
  %v162 = vunpack.c.h.b16 %v23
  %v163 = vunpack.c.l.b16 %v24
  %v164 = vunpack.c.h.b16 %v24
  %v165 = vunpack.c.l.b16 %v25
  %v166 = vunpack.c.h.b16 %v25
  %v167 = vunpack.c.l.b16 %v26
  %v168 = vunpack.c.h.b16 %v26
  %v169 = vunpack.c.l.b16 %v27
  %v170 = vunpack.c.h.b16 %v27
  %v171 = vunpack.c.l.b16 %v28
  %v172 = vunpack.c.h.b16 %v28
  %v173 = vunpack.c.l.b16 %v29
  %v174 = vunpack.c.h.b16 %v29
  %v175 = vunpack.c.l.b16 %v30
  %v176 = vunpack.c.h.b16 %v30
  %v177 = vunpack.c.l.b16 %v31
  %v178 = vunpack.c.h.b16 %v31
  %v179 = vunpack.c.l.b16 %v32
  %v180 = vunpack.c.h.b16 %v32
  %v181 = vunpack.c.l.b16 %v33
  %v182 = vunpack.c.h.b16 %v33
  %v183 = vunpack.c.l.b16 %v34
  %v184 = vunpack.c.h.b16 %v34
  %v185 = vunpack.c.l.b16 %v35
  %v186 = vunpack.c.h.b16 %v35
  %v187 = vunpack.c.l.b16 %v36
  %v188 = vunpack.c.h.b16 %v36
  %v189 = vunpack.c.l.b16 %v37
  %v190 = vunpack.c.h.b16 %v37
  %v191 = vunpack.c.l.b16 %v38
  %v192 = vunpack.c.h.b16 %v38
  %v193 = vunpack.c.l.b16 %v39
  %v194 = vunpack.c.h.b16 %v39
  %v195 = vunpack.c.l.b16 %v40
  %v196 = vunpack.c.h.b16 %v40
  %v197 = vunpack.c.l.b16 %v41
  %v198 = vunpack.c.h.b16 %v41
  %v199 = vunpack.c.l.b16 %v42
  %v200 = vunpack.c.h.b16 %v42
  %v201 = vunpack.c.l.b16 %v43
  %v202 = vunpack.c.h.b16 %v43
  %v203 = vunpack.c.l.b16 %v44
  %v204 = vunpack.c.h.b16 %v44
  %v205 = vpack.c.b16 %v145, %v141
  %v206 = vpack.c.b16 %v146, %v142
  %v207 = vpack.c.b16 %v147, %v143
  %v208 = vpack.c.b16 %v148, %v144
  %v209 = vpack.c.b16 %v153, %v149
  %v210 = vpack.c.b16 %v154, %v150
  %v211 = vpack.c.b16 %v155, %v151
  %v212 = vpack.c.b16 %v156, %v152
  %v213 = vpack.c.b16 %v161, %v157
  %v214 = vpack.c.b16 %v162, %v158
  %v215 = vpack.c.b16 %v163, %v159
  %v216 = vpack.c.b16 %v164, %v160
  %v217 = vpack.c.b16 %v169, %v165
  %v218 = vpack.c.b16 %v170, %v166
  %v219 = vpack.c.b16 %v171, %v167
  %v220 = vpack.c.b16 %v172, %v168
  %v221 = vpack.c.b16 %v177, %v173
  %v222 = vpack.c.b16 %v178, %v174
  %v223 = vpack.c.b16 %v179, %v175
  %v224 = vpack.c.b16 %v180, %v176
  %v225 = vpack.c.b16 %v185, %v181
  %v226 = vpack.c.b16 %v186, %v182
  %v227 = vpack.c.b16 %v187, %v183
  %v228 = vpack.c.b16 %v188, %v184
  %v229 = vpack.c.b16 %v193, %v189
  %v230 = vpack.c.b16 %v194, %v190
  %v231 = vpack.c.b16 %v195, %v191
  %v232 = vpack.c.b16 %v196, %v192
  %v233 = vpack.c.b16 %v201, %v197
  %v234 = vpack.c.b16 %v202, %v198
  %v235 = vpack.c.b16 %v203, %v199
  %v236 = vpack.c.b16 %v204, %v200
  %v333 = vunpack.c.l.b16 %v45
  %v334 = vunpack.c.l.b16 %v46
  %v335 = vunpack.c.l.b16 %v47
  %v336 = vunpack.c.l.b16 %v48
  %v337 = vunpack.c.l.b16 %v49
  %v338 = vunpack.c.l.b16 %v50
  %v339 = vunpack.c.l.b16 %v51
  %v340 = vunpack.c.l.b16 %v52
  %v341 = vunpack.c.l.b16 %v53
  %v342 = vunpack.c.l.b16 %v54
  %v343 = vunpack.c.l.b16 %v55
  %v344 = vunpack.c.l.b16 %v56
  %v345 = vunpack.c.l.b16 %v57
  %v346 = vunpack.c.l.b16 %v58
  %v347 = vunpack.c.l.b16 %v59
  %v348 = vunpack.c.l.b16 %v60
  %v349 = vunpack.c.l.b16 %v61
  %v350 = vunpack.c.l.b16 %v62
  %v351 = vunpack.c.l.b16 %v63
  %v352 = vunpack.c.l.b16 %v64
  %v353 = vunpack.c.l.b16 %v65
  %v354 = vunpack.c.l.b16 %v66
  %v355 = vunpack.c.l.b16 %v67
  %v356 = vunpack.c.l.b16 %v68
  %v357 = vunpack.c.l.b16 %v69
  %v358 = vunpack.c.l.b16 %v70
  %v359 = vunpack.c.l.b16 %v71
  %v360 = vunpack.c.l.b16 %v72
  %v361 = vunpack.c.l.b16 %v73
  %v362 = vunpack.c.l.b16 %v74
  %v363 = vunpack.c.l.b16 %v75
  %v364 = vunpack.c.l.b16 %v76
  %v365 = vunpack.c.l.b16 %v77
  %v366 = vunpack.c.l.b16 %v78
  %v367 = vunpack.c.l.b16 %v79
  %v368 = vunpack.c.l.b16 %v80
  %v369 = vunpack.c.l.b16 %v81
  %v370 = vunpack.c.l.b16 %v82
  %v371 = vunpack.c.l.b16 %v83
  %v372 = vunpack.c.l.b16 %v84
  %v373 = vunpack.c.l.b16 %v85
  %v374 = vunpack.c.l.b16 %v86
  %v375 = vunpack.c.l.b16 %v87
  %v376 = vunpack.c.l.b16 %v88
  %v377 = vunpack.c.l.b16 %v89
  %v378 = vunpack.c.l.b16 %v90
  %v379 = vunpack.c.l.b16 %v91
  %v380 = vunpack.c.l.b16 %v92
  %v381 = vunpack.c.l.b16 %v93
  %v382 = vunpack.c.l.b16 %v94
  %v383 = vunpack.c.l.b16 %v95
  %v384 = vunpack.c.l.b16 %v96
  %v385 = vunpack.c.l.b16 %v97
  %v386 = vunpack.c.l.b16 %v98
  %v387 = vunpack.c.l.b16 %v99
  %v388 = vunpack.c.l.b16 %v100
  %v389 = vunpack.c.l.b16 %v101
  %v390 = vunpack.c.l.b16 %v102
  %v391 = vunpack.c.l.b16 %v103
  %v392 = vunpack.c.l.b16 %v104
  %v393 = vunpack.c.l.b16 %v105
  %v394 = vunpack.c.l.b16 %v106
  %v395 = vunpack.c.l.b16 %v107
  %v396 = vunpack.c.l.b16 %v108
  %v397 = vpack.c.b16 %v334, %v333
  %v398 = vpack.c.b16 %v336, %v335
  %v399 = vpack.c.b16 %v338, %v337
  %v400 = vpack.c.b16 %v340, %v339
  %v401 = vpack.c.b16 %v342, %v341
  %v402 = vpack.c.b16 %v344, %v343
  %v403 = vpack.c.b16 %v346, %v345
  %v404 = vpack.c.b16 %v348, %v347
  %v405 = vpack.c.b16 %v350, %v349
  %v406 = vpack.c.b16 %v352, %v351
  %v407 = vpack.c.b16 %v354, %v353
  %v408 = vpack.c.b16 %v356, %v355
  %v409 = vpack.c.b16 %v358, %v357
  %v410 = vpack.c.b16 %v360, %v359
  %v411 = vpack.c.b16 %v362, %v361
  %v412 = vpack.c.b16 %v364, %v363
  %v413 = vpack.c.b16 %v366, %v365
  %v414 = vpack.c.b16 %v368, %v367
  %v415 = vpack.c.b16 %v370, %v369
  %v416 = vpack.c.b16 %v372, %v371
  %v417 = vpack.c.b16 %v374, %v373
  %v418 = vpack.c.b16 %v376, %v375
  %v419 = vpack.c.b16 %v378, %v377
  %v420 = vpack.c.b16 %v380, %v379
  %v421 = vpack.c.b16 %v382, %v381
  %v422 = vpack.c.b16 %v384, %v383
  %v423 = vpack.c.b16 %v386, %v385
  %v424 = vpack.c.b16 %v388, %v387
  %v425 = vpack.c.b16 %v390, %v389
  %v426 = vpack.c.b16 %v392, %v391
  %v427 = vpack.c.b16 %v394, %v393
  %v428 = vpack.c.b16 %v396, %v395
  %461 = vmatpush.bf16.msra.mxu0 %v404
  %462 = vmatpush.bf16.msra.mxu0 %v403
  %463 = vmatpush.bf16.msra.mxu0 %v402
  %464 = vmatpush.bf16.msra.mxu0 %v401
  %465 = vmatpush.bf16.msra.mxu0 %v400
  %466 = vmatpush.bf16.msra.mxu0 %v399
  %467 = vmatpush.bf16.msra.mxu0 %v398
  %468 = vmatpush.bf16.msra.mxu0 %v397
  %469 = vmatmul.bf16.gmra.mxu0 %v205
  %v470 = vpop.f32.mrf.mxu0
  %v471 = vadd.f32 0.0, %v470
  %v472 = vpop.f32.mrf.mxu0
  %v473 = vadd.f32 0.0, %v472
  %474 = vmatmul.bf16.gmra.mxu0 %v209
  %v475 = vpop.f32.mrf.mxu0
  %v476 = vadd.f32 0.0, %v475
  %v477 = vpop.f32.mrf.mxu0
  %v478 = vadd.f32 0.0, %v477
  %479 = vmatmul.bf16.gmra.mxu0 %v213
  %v480 = vpop.f32.mrf.mxu0
  %v481 = vadd.f32 0.0, %v480
  %v482 = vpop.f32.mrf.mxu0
  %v483 = vadd.f32 0.0, %v482
  %484 = vmatmul.bf16.gmra.mxu0 %v217
  %v485 = vpop.f32.mrf.mxu0
  %v486 = vadd.f32 0.0, %v485
  %v487 = vpop.f32.mrf.mxu0
  %v488 = vadd.f32 0.0, %v487
  %489 = vmatmul.bf16.gmra.mxu0 %v221
  %v490 = vpop.f32.mrf.mxu0
  %v491 = vadd.f32 0.0, %v490
  %v492 = vpop.f32.mrf.mxu0
  %v493 = vadd.f32 0.0, %v492
  %494 = vmatmul.bf16.gmra.mxu0 %v225
  %v495 = vpop.f32.mrf.mxu0
  %v496 = vadd.f32 0.0, %v495
  %v497 = vpop.f32.mrf.mxu0
  %v498 = vadd.f32 0.0, %v497
  %499 = vmatmul.bf16.gmra.mxu0 %v229
  %v500 = vpop.f32.mrf.mxu0
  %v501 = vadd.f32 0.0, %v500
  %v502 = vpop.f32.mrf.mxu0
  %v503 = vadd.f32 0.0, %v502
  %504 = vmatmul.bf16.gmra.mxu0 %v233
  %v505 = vpop.f32.mrf.mxu0
  %v506 = vadd.f32 0.0, %v505
  %v507 = vpop.f32.mrf.mxu0
  %v508 = vadd.f32 0.0, %v507
  %509 = vdwg.mxu0
  %510 = vmatpush.bf16.msra.mxu0 %v412
  %511 = vmatpush.bf16.msra.mxu0 %v411
  %512 = vmatpush.bf16.msra.mxu0 %v410
  %513 = vmatpush.bf16.msra.mxu0 %v409
  %514 = vmatpush.bf16.msra.mxu0 %v408
  %515 = vmatpush.bf16.msra.mxu0 %v407
  %516 = vmatpush.bf16.msra.mxu0 %v406
  %517 = vmatpush.bf16.msra.mxu0 %v405
  %518 = vmatmul.bf16.gmra.mxu0 %v206
  %v519 = vpop.f32.mrf.mxu0
  %v520 = vadd.f32 %v471, %v519
  %v521 = vpop.f32.mrf.mxu0
  %v522 = vadd.f32 %v473, %v521
  %523 = vmatmul.bf16.gmra.mxu0 %v210
  %v524 = vpop.f32.mrf.mxu0
  %v525 = vadd.f32 %v476, %v524
  %v526 = vpop.f32.mrf.mxu0
  %v527 = vadd.f32 %v478, %v526
  %528 = vmatmul.bf16.gmra.mxu0 %v214
  %v529 = vpop.f32.mrf.mxu0
  %v530 = vadd.f32 %v481, %v529
  %v531 = vpop.f32.mrf.mxu0
  %v532 = vadd.f32 %v483, %v531
  %533 = vmatmul.bf16.gmra.mxu0 %v218
  %v534 = vpop.f32.mrf.mxu0
  %v535 = vadd.f32 %v486, %v534
  %v536 = vpop.f32.mrf.mxu0
  %v537 = vadd.f32 %v488, %v536
  %538 = vmatmul.bf16.gmra.mxu0 %v222
  %v539 = vpop.f32.mrf.mxu0
  %v540 = vadd.f32 %v491, %v539
  %v541 = vpop.f32.mrf.mxu0
  %v542 = vadd.f32 %v493, %v541
  %543 = vmatmul.bf16.gmra.mxu0 %v226
  %v544 = vpop.f32.mrf.mxu0
  %v545 = vadd.f32 %v496, %v544
  %v546 = vpop.f32.mrf.mxu0
  %v547 = vadd.f32 %v498, %v546
  %548 = vmatmul.bf16.gmra.mxu0 %v230
  %v549 = vpop.f32.mrf.mxu0
  %v550 = vadd.f32 %v501, %v549
  %v551 = vpop.f32.mrf.mxu0
  %v552 = vadd.f32 %v503, %v551
  %553 = vmatmul.bf16.gmra.mxu0 %v234
  %v554 = vpop.f32.mrf.mxu0
  %v555 = vadd.f32 %v506, %v554
  %v556 = vpop.f32.mrf.mxu0
  %v557 = vadd.f32 %v508, %v556
  %558 = vdwg.mxu0
  %559 = vmatpush.bf16.msra.mxu0 %v420
  %560 = vmatpush.bf16.msra.mxu0 %v419
  %561 = vmatpush.bf16.msra.mxu0 %v418
  %562 = vmatpush.bf16.msra.mxu0 %v417
  %563 = vmatpush.bf16.msra.mxu0 %v416
  %564 = vmatpush.bf16.msra.mxu0 %v415
  %565 = vmatpush.bf16.msra.mxu0 %v414
  %566 = vmatpush.bf16.msra.mxu0 %v413
  %567 = vmatmul.bf16.gmra.mxu0 %v207
  %v568 = vpop.f32.mrf.mxu0
  %v569 = vadd.f32 %v520, %v568
  %v570 = vpop.f32.mrf.mxu0
  %v571 = vadd.f32 %v522, %v570
  %572 = vmatmul.bf16.gmra.mxu0 %v211
  %v573 = vpop.f32.mrf.mxu0
  %v574 = vadd.f32 %v525, %v573
  %v575 = vpop.f32.mrf.mxu0
  %v576 = vadd.f32 %v527, %v575
  %577 = vmatmul.bf16.gmra.mxu0 %v215
  %v578 = vpop.f32.mrf.mxu0
  %v579 = vadd.f32 %v530, %v578
  %v580 = vpop.f32.mrf.mxu0
  %v581 = vadd.f32 %v532, %v580
  %582 = vmatmul.bf16.gmra.mxu0 %v219
  %v583 = vpop.f32.mrf.mxu0
  %v584 = vadd.f32 %v535, %v583
  %v585 = vpop.f32.mrf.mxu0
  %v586 = vadd.f32 %v537, %v585
  %587 = vmatmul.bf16.gmra.mxu0 %v223
  %v588 = vpop.f32.mrf.mxu0
  %v589 = vadd.f32 %v540, %v588
  %v590 = vpop.f32.mrf.mxu0
  %v591 = vadd.f32 %v542, %v590
  %592 = vmatmul.bf16.gmra.mxu0 %v227
  %v593 = vpop.f32.mrf.mxu0
  %v594 = vadd.f32 %v545, %v593
  %v595 = vpop.f32.mrf.mxu0
  %v596 = vadd.f32 %v547, %v595
  %597 = vmatmul.bf16.gmra.mxu0 %v231
  %v598 = vpop.f32.mrf.mxu0
  %v599 = vadd.f32 %v550, %v598
  %v600 = vpop.f32.mrf.mxu0
  %v601 = vadd.f32 %v552, %v600
  %602 = vmatmul.bf16.gmra.mxu0 %v235
  %v603 = vpop.f32.mrf.mxu0
  %v604 = vadd.f32 %v555, %v603
  %v605 = vpop.f32.mrf.mxu0
  %v606 = vadd.f32 %v557, %v605
  %607 = vdwg.mxu0
  %608 = vmatpush.bf16.msra.mxu0 %v428
  %609 = vmatpush.bf16.msra.mxu0 %v427
  %610 = vmatpush.bf16.msra.mxu0 %v426
  %611 = vmatpush.bf16.msra.mxu0 %v425
  %612 = vmatpush.bf16.msra.mxu0 %v424
  %613 = vmatpush.bf16.msra.mxu0 %v423
  %614 = vmatpush.bf16.msra.mxu0 %v422
  %615 = vmatpush.bf16.msra.mxu0 %v421
  %616 = vmatmul.bf16.gmra.mxu0 %v208
  %v617 = vpop.f32.mrf.mxu0
  %v618 = vadd.f32 %v569, %v617
  %v619 = vpop.f32.mrf.mxu0
  %v620 = vadd.f32 %v571, %v619
  %621 = vmatmul.bf16.gmra.mxu0 %v212
  %v622 = vpop.f32.mrf.mxu0
  %v623 = vadd.f32 %v574, %v622
  %v624 = vpop.f32.mrf.mxu0
  %v625 = vadd.f32 %v576, %v624
  %626 = vmatmul.bf16.gmra.mxu0 %v216
  %v627 = vpop.f32.mrf.mxu0
  %v628 = vadd.f32 %v579, %v627
  %v629 = vpop.f32.mrf.mxu0
  %v630 = vadd.f32 %v581, %v629
  %631 = vmatmul.bf16.gmra.mxu0 %v220
  %v632 = vpop.f32.mrf.mxu0
  %v633 = vadd.f32 %v584, %v632
  %v634 = vpop.f32.mrf.mxu0
  %v635 = vadd.f32 %v586, %v634
  %636 = vmatmul.bf16.gmra.mxu0 %v224
  %v637 = vpop.f32.mrf.mxu0
  %v638 = vadd.f32 %v589, %v637
  %v639 = vpop.f32.mrf.mxu0
  %v640 = vadd.f32 %v591, %v639
  %641 = vmatmul.bf16.gmra.mxu0 %v228
  %v642 = vpop.f32.mrf.mxu0
  %v643 = vadd.f32 %v594, %v642
  %v644 = vpop.f32.mrf.mxu0
  %v645 = vadd.f32 %v596, %v644
  %646 = vmatmul.bf16.gmra.mxu0 %v232
  %v647 = vpop.f32.mrf.mxu0
  %v648 = vadd.f32 %v599, %v647
  %v649 = vpop.f32.mrf.mxu0
  %v650 = vadd.f32 %v601, %v649
  %651 = vmatmul.bf16.gmra.mxu0 %v236
  %v652 = vpop.f32.mrf.mxu0
  %v653 = vadd.f32 %v604, %v652
  %v654 = vpop.f32.mrf.mxu0
  %v655 = vadd.f32 %v606, %v654
  %656 = vdwg.mxu0
  %v657 = vadd.f32 %v618, %v620
  %v658 = vadd.f32 %v657, %v623
  %v659 = vadd.f32 %v658, %v625
  %v660 = vadd.f32 %v659, %v628
  %v661 = vadd.f32 %v660, %v630
  %v662 = vadd.f32 %v661, %v633
  %v663 = vadd.f32 %v662, %v635
  %v664 = vadd.f32 %v663, %v638
  %v665 = vadd.f32 %v664, %v640
  %v666 = vadd.f32 %v665, %v643
  %v667 = vadd.f32 %v666, %v645
  %v668 = vadd.f32 %v667, %v648
  %v669 = vadd.f32 %v668, %v650
  %v670 = vadd.f32 %v669, %v653
  %v671 = vadd.f32 %v670, %v655
  %v672 = vrot.slane %v671, 4
  %v673 = vadd.f32 %v671, %v672
  %v674 = vrot.slane %v673, 2
  %v675 = vadd.f32 %v673, %v674
  %v676 = vrot.slane %v675, 1
  %v677 = vadd.f32 %v675, %v676
  %v678 = vmul.f32 %v618, %v618
  %v679 = vmul.f32 %v620, %v620
  %v680 = vmul.f32 %v623, %v623
  %v681 = vmul.f32 %v625, %v625
  %v682 = vmul.f32 %v628, %v628
  %v683 = vmul.f32 %v630, %v630
  %v684 = vmul.f32 %v633, %v633
  %v685 = vmul.f32 %v635, %v635
  %v686 = vmul.f32 %v638, %v638
  %v687 = vmul.f32 %v640, %v640
  %v688 = vmul.f32 %v643, %v643
  %v689 = vmul.f32 %v645, %v645
  %v690 = vmul.f32 %v648, %v648
  %v691 = vmul.f32 %v650, %v650
  %v692 = vmul.f32 %v653, %v653
  %v693 = vmul.f32 %v655, %v655
  %v694 = vadd.f32 %v678, %v679
  %v695 = vadd.f32 %v694, %v680
  %v696 = vadd.f32 %v695, %v681
  %v697 = vadd.f32 %v696, %v682
  %v698 = vadd.f32 %v697, %v683
  %v699 = vadd.f32 %v698, %v684
  %v700 = vadd.f32 %v699, %v685
  %v701 = vadd.f32 %v700, %v686
  %v702 = vadd.f32 %v701, %v687
  %v703 = vadd.f32 %v702, %v688
  %v704 = vadd.f32 %v703, %v689
  %v705 = vadd.f32 %v704, %v690
  %v706 = vadd.f32 %v705, %v691
  %v707 = vadd.f32 %v706, %v692
  %v708 = vadd.f32 %v707, %v693
  %v709 = vrot.slane %v708, 4
  %v710 = vadd.f32 %v708, %v709
  %v711 = vrot.slane %v710, 2
  %v712 = vadd.f32 %v710, %v711
  %v713 = vrot.slane %v712, 1
  %v714 = vadd.f32 %v712, %v713
  %vm715 = vcmask 1040384
  %v716 = vsel %vm715, %v677, %v714
  %717 = vst [vmem:[%s3] sm:$0x3] %v716
  %718 = vst [vmem:[%s2] sm:$0xff] %v618
  %719 = vst [vmem:[%s2 + $0x8] sm:$0xff] %v620
  %720 = vst [vmem:[%s2 + $0x10] sm:$0xff] %v623
  %721 = vst [vmem:[%s2 + $0x18] sm:$0xff] %v625
  %722 = vst [vmem:[%s2 + $0x20] sm:$0xff] %v628
  %723 = vst [vmem:[%s2 + $0x28] sm:$0xff] %v630
  %724 = vst [vmem:[%s2 + $0x30] sm:$0xff] %v633
  %725 = vst [vmem:[%s2 + $0x38] sm:$0xff] %v635
  %726 = vst [vmem:[%s2 + $0x40] sm:$0xff] %v638
  %727 = vst [vmem:[%s2 + $0x48] sm:$0xff] %v640
  %728 = vst [vmem:[%s2 + $0x50] sm:$0xff] %v643
  %729 = vst [vmem:[%s2 + $0x58] sm:$0xff] %v645
  %730 = vst [vmem:[%s2 + $0x60] sm:$0xff] %v648
  %731 = vst [vmem:[%s2 + $0x68] sm:$0xff] %v650
  %732 = vst [vmem:[%s2 + $0x70] sm:$0xff] %v653
  %733 = vst [vmem:[%s2 + $0x78] sm:$0xff] %v655
  // Predicated region
  $region10: #{nlayer_discriminator_forward.13} parent=0 // pred_check
    _
  $region11: #{nlayer_discriminator_forward.13} parent=0 // pred_check_branch
    %735 = sbr.rel (0) target = $region13
  $region12: #{nlayer_discriminator_forward.13} parent=0 // pred_region
    _
  $region13: #{nlayer_discriminator_forward.13} parent=0 // pred_fallthru
    _
  // Predicated region
  $region14: #{nlayer_discriminator_forward.13} parent=0 // pred_check
    _
  $region15: #{nlayer_discriminator_forward.13} parent=0 // pred_check_branch
    %737 = sbr.rel (0) target = $region17
  $region16: #{nlayer_discriminator_forward.13} parent=0 // pred_region
    _
  $region17: #{nlayer_discriminator_forward.13} parent=0 // pred_fallthru
    _
  // Predicated region
  $region18: #{nlayer_discriminator_forward.13} parent=0 // pred_check
    _
  $region19: #{nlayer_discriminator_forward.13} parent=0 // pred_check_branch
    %739 = sbr.rel (0) target = $region21
  $region20: #{nlayer_discriminator_forward.13} parent=0 // pred_region
    _
  $region21: #{nlayer_discriminator_forward.13} parent=0 // pred_fallthru
    _
  // Predicated region
  $region22: #{nlayer_discriminator_forward.13} parent=0 // pred_check
    _
  $region23: #{nlayer_discriminator_forward.13} parent=0 // pred_check_branch
    %741 = sbr.rel (0) target = $region25
  $region24: #{nlayer_discriminator_forward.13} parent=0 // pred_region
    _
  $region25: #{nlayer_discriminator_forward.13} parent=0 // pred_fallthru
    _

// kernel: nlayer_discriminator_forward.15
$region0: #{nlayer_discriminator_forward.15}
  #allocation0 [shape = 'u32[]', space=smem, size = 0x4, offset = 0x4, fixed_abs, tag = 'smem constant byte address 0x4 - core index']
  #allocation1 [shape = 'u32[72,128]{1,0:T(1,128)}', space=vmem, size = 0x9000, scoped, tag = 'internal scratch']
  %s0 = inlined_call_operand.vmem [shape: bf16[128,1024], index: 0, kind: input, shape index: {}]
  %s1 = inlined_call_operand.vmem [shape: bf16[1024,128], index: 1, kind: input, shape index: {}]
  %s2 = inlined_call_operand.vmem [shape: f32[1,128], index: 2, kind: input, shape index: {}]
  %s3 = inlined_call_operand.vmem [shape: f32[128,128], index: 3, kind: output, shape index: {}]
  %s4 = sld [smem:[#allocation0]]
  $region22: #{nlayer_discriminator_forward.15} parent=0
    _
  %s6 = ssub.s32 1, %s4
  %s7 = scalar_select 0, %s6, %s4
  // Predicated region
  $region2: #{nlayer_discriminator_forward.15} parent=0 // pred_check
    _
  $region3: #{nlayer_discriminator_forward.15} parent=0 // pred_check_branch
    %9 = sbr.rel (0) target = $region5
  $region4: #{nlayer_discriminator_forward.15} parent=0 // pred_region
    _
  $region5: #{nlayer_discriminator_forward.15} parent=0 // pred_fallthru
    _
  // Predicated region
  $region6: #{nlayer_discriminator_forward.15} parent=0 // pred_check
    _
  $region7: #{nlayer_discriminator_forward.15} parent=0 // pred_check_branch
    %11 = sbr.rel (0) target = $region9
  $region8: #{nlayer_discriminator_forward.15} parent=0 // pred_region
    _
  $region9: #{nlayer_discriminator_forward.15} parent=0 // pred_fallthru
    _
  // Predicated region
  $region10: #{nlayer_discriminator_forward.15} parent=0 // pred_check
    _
  $region11: #{nlayer_discriminator_forward.15} parent=0 // pred_check_branch
    %13 = sbr.rel (0) target = $region13
  $region12: #{nlayer_discriminator_forward.15} parent=0 // pred_region
    _
  $region13: #{nlayer_discriminator_forward.15} parent=0 // pred_fallthru
    _
  %v14 = vld [vmem:[%s0] sm:$0xff]
  %v15 = vld [vmem:[%s0 + $0x8] sm:$0xff]
  %v16 = vld [vmem:[%s0 + $0x10] sm:$0xff]
  %v17 = vld [vmem:[%s0 + $0x18] sm:$0xff]
  %v18 = vld [vmem:[%s0 + $0x20] sm:$0xff]
  %v19 = vld [vmem:[%s0 + $0x28] sm:$0xff]
  %v20 = vld [vmem:[%s0 + $0x30] sm:$0xff]
  %v21 = vld [vmem:[%s0 + $0x38] sm:$0xff]
  %v22 = vld [vmem:[%s0 + $0x40] sm:$0xff]
  %v23 = vld [vmem:[%s0 + $0x48] sm:$0xff]
  %v24 = vld [vmem:[%s0 + $0x50] sm:$0xff]
  %v25 = vld [vmem:[%s0 + $0x58] sm:$0xff]
  %v26 = vld [vmem:[%s0 + $0x60] sm:$0xff]
  %v27 = vld [vmem:[%s0 + $0x68] sm:$0xff]
  %v28 = vld [vmem:[%s0 + $0x70] sm:$0xff]
  %v29 = vld [vmem:[%s0 + $0x78] sm:$0xff]
  %v30 = vld [vmem:[%s0 + $0x80] sm:$0xff]
  %v31 = vld [vmem:[%s0 + $0x88] sm:$0xff]
  %v32 = vld [vmem:[%s0 + $0x90] sm:$0xff]
  %v33 = vld [vmem:[%s0 + $0x98] sm:$0xff]
  %v34 = vld [vmem:[%s0 + $0xa0] sm:$0xff]
  %v35 = vld [vmem:[%s0 + $0xa8] sm:$0xff]
  %v36 = vld [vmem:[%s0 + $0xb0] sm:$0xff]
  %v37 = vld [vmem:[%s0 + $0xb8] sm:$0xff]
  %v38 = vld [vmem:[%s0 + $0xc0] sm:$0xff]
  %v39 = vld [vmem:[%s0 + $0xc8] sm:$0xff]
  %v40 = vld [vmem:[%s0 + $0xd0] sm:$0xff]
  %v41 = vld [vmem:[%s0 + $0xd8] sm:$0xff]
  %v42 = vld [vmem:[%s0 + $0xe0] sm:$0xff]
  %v43 = vld [vmem:[%s0 + $0xe8] sm:$0xff]
  %v44 = vld [vmem:[%s0 + $0xf0] sm:$0xff]
  %v45 = vld [vmem:[%s0 + $0xf8] sm:$0xff]
  %v46 = vld [vmem:[%s0 + $0x100] sm:$0xff]
  %v47 = vld [vmem:[%s0 + $0x108] sm:$0xff]
  %v48 = vld [vmem:[%s0 + $0x110] sm:$0xff]
  %v49 = vld [vmem:[%s0 + $0x118] sm:$0xff]
  %v50 = vld [vmem:[%s0 + $0x120] sm:$0xff]
  %v51 = vld [vmem:[%s0 + $0x128] sm:$0xff]
  %v52 = vld [vmem:[%s0 + $0x130] sm:$0xff]
  %v53 = vld [vmem:[%s0 + $0x138] sm:$0xff]
  %v54 = vld [vmem:[%s0 + $0x140] sm:$0xff]
  %v55 = vld [vmem:[%s0 + $0x148] sm:$0xff]
  %v56 = vld [vmem:[%s0 + $0x150] sm:$0xff]
  %v57 = vld [vmem:[%s0 + $0x158] sm:$0xff]
  %v58 = vld [vmem:[%s0 + $0x160] sm:$0xff]
  %v59 = vld [vmem:[%s0 + $0x168] sm:$0xff]
  %v60 = vld [vmem:[%s0 + $0x170] sm:$0xff]
  %v61 = vld [vmem:[%s0 + $0x178] sm:$0xff]
  %v62 = vld [vmem:[%s0 + $0x180] sm:$0xff]
  %v63 = vld [vmem:[%s0 + $0x188] sm:$0xff]
  %v64 = vld [vmem:[%s0 + $0x190] sm:$0xff]
  %v65 = vld [vmem:[%s0 + $0x198] sm:$0xff]
  %v66 = vld [vmem:[%s0 + $0x1a0] sm:$0xff]
  %v67 = vld [vmem:[%s0 + $0x1a8] sm:$0xff]
  %v68 = vld [vmem:[%s0 + $0x1b0] sm:$0xff]
  %v69 = vld [vmem:[%s0 + $0x1b8] sm:$0xff]
  %v70 = vld [vmem:[%s0 + $0x1c0] sm:$0xff]
  %v71 = vld [vmem:[%s0 + $0x1c8] sm:$0xff]
  %v72 = vld [vmem:[%s0 + $0x1d0] sm:$0xff]
  %v73 = vld [vmem:[%s0 + $0x1d8] sm:$0xff]
  %v74 = vld [vmem:[%s0 + $0x1e0] sm:$0xff]
  %v75 = vld [vmem:[%s0 + $0x1e8] sm:$0xff]
  %v76 = vld [vmem:[%s0 + $0x1f0] sm:$0xff]
  %v77 = vld [vmem:[%s0 + $0x1f8] sm:$0xff]
  %v78 = vld [vmem:[%s1] sm:$0xf]
  %v79 = vld [vmem:[%s1 + $0x4] sm:$0xf]
  %v80 = vld [vmem:[%s1 + $0x8] sm:$0xf]
  %v81 = vld [vmem:[%s1 + $0xc] sm:$0xf]
  %v82 = vld [vmem:[%s1 + $0x10] sm:$0xf]
  %v83 = vld [vmem:[%s1 + $0x14] sm:$0xf]
  %v84 = vld [vmem:[%s1 + $0x18] sm:$0xf]
  %v85 = vld [vmem:[%s1 + $0x1c] sm:$0xf]
  %v86 = vld [vmem:[%s1 + $0x20] sm:$0xf]
  %v87 = vld [vmem:[%s1 + $0x24] sm:$0xf]
  %v88 = vld [vmem:[%s1 + $0x28] sm:$0xf]
  %v89 = vld [vmem:[%s1 + $0x2c] sm:$0xf]
  %v90 = vld [vmem:[%s1 + $0x30] sm:$0xf]
  %v91 = vld [vmem:[%s1 + $0x34] sm:$0xf]
  %v92 = vld [vmem:[%s1 + $0x38] sm:$0xf]
  %v93 = vld [vmem:[%s1 + $0x3c] sm:$0xf]
  %v94 = vld [vmem:[%s1 + $0x40] sm:$0xf]
  %v95 = vld [vmem:[%s1 + $0x44] sm:$0xf]
  %v96 = vld [vmem:[%s1 + $0x48] sm:$0xf]
  %v97 = vld [vmem:[%s1 + $0x4c] sm:$0xf]
  %v98 = vld [vmem:[%s1 + $0x50] sm:$0xf]
  %v99 = vld [vmem:[%s1 + $0x54] sm:$0xf]
  %v100 = vld [vmem:[%s1 + $0x58] sm:$0xf]
  %v101 = vld [vmem:[%s1 + $0x5c] sm:$0xf]
  %v102 = vld [vmem:[%s1 + $0x60] sm:$0xf]
  %v103 = vld [vmem:[%s1 + $0x64] sm:$0xf]
  %v104 = vld [vmem:[%s1 + $0x68] sm:$0xf]
  %v105 = vld [vmem:[%s1 + $0x6c] sm:$0xf]
  %v106 = vld [vmem:[%s1 + $0x70] sm:$0xf]
  %v107 = vld [vmem:[%s1 + $0x74] sm:$0xf]
  %v108 = vld [vmem:[%s1 + $0x78] sm:$0xf]
  %v109 = vld [vmem:[%s1 + $0x7c] sm:$0xf]
  %v110 = vld [vmem:[%s1 + $0x80] sm:$0xf]
  %v111 = vld [vmem:[%s1 + $0x84] sm:$0xf]
  %v112 = vld [vmem:[%s1 + $0x88] sm:$0xf]
  %v113 = vld [vmem:[%s1 + $0x8c] sm:$0xf]
  %v114 = vld [vmem:[%s1 + $0x90] sm:$0xf]
  %v115 = vld [vmem:[%s1 + $0x94] sm:$0xf]
  %v116 = vld [vmem:[%s1 + $0x98] sm:$0xf]
  %v117 = vld [vmem:[%s1 + $0x9c] sm:$0xf]
  %v118 = vld [vmem:[%s1 + $0xa0] sm:$0xf]
  %v119 = vld [vmem:[%s1 + $0xa4] sm:$0xf]
  %v120 = vld [vmem:[%s1 + $0xa8] sm:$0xf]
  %v121 = vld [vmem:[%s1 + $0xac] sm:$0xf]
  %v122 = vld [vmem:[%s1 + $0xb0] sm:$0xf]
  %v123 = vld [vmem:[%s1 + $0xb4] sm:$0xf]
  %v124 = vld [vmem:[%s1 + $0xb8] sm:$0xf]
  %v125 = vld [vmem:[%s1 + $0xbc] sm:$0xf]
  %v126 = vld [vmem:[%s1 + $0xc0] sm:$0xf]
  %v127 = vld [vmem:[%s1 + $0xc4] sm:$0xf]
  %v128 = vld [vmem:[%s1 + $0xc8] sm:$0xf]
  %v129 = vld [vmem:[%s1 + $0xcc] sm:$0xf]
  %v130 = vld [vmem:[%s1 + $0xd0] sm:$0xf]
  %v131 = vld [vmem:[%s1 + $0xd4] sm:$0xf]
  %v132 = vld [vmem:[%s1 + $0xd8] sm:$0xf]
  %v133 = vld [vmem:[%s1 + $0xdc] sm:$0xf]
  %v134 = vld [vmem:[%s1 + $0xe0] sm:$0xf]
  %v135 = vld [vmem:[%s1 + $0xe4] sm:$0xf]
  %v136 = vld [vmem:[%s1 + $0xe8] sm:$0xf]
  %v137 = vld [vmem:[%s1 + $0xec] sm:$0xf]
  %v138 = vld [vmem:[%s1 + $0xf0] sm:$0xf]
  %v139 = vld [vmem:[%s1 + $0xf4] sm:$0xf]
  %v140 = vld [vmem:[%s1 + $0xf8] sm:$0xf]
  %v141 = vld [vmem:[%s1 + $0xfc] sm:$0xf]
  %v142 = vld [vmem:[%s1 + $0x100] sm:$0xf]
  %v143 = vld [vmem:[%s1 + $0x104] sm:$0xf]
  %v144 = vld [vmem:[%s1 + $0x108] sm:$0xf]
  %v145 = vld [vmem:[%s1 + $0x10c] sm:$0xf]
  %v146 = vld [vmem:[%s1 + $0x110] sm:$0xf]
  %v147 = vld [vmem:[%s1 + $0x114] sm:$0xf]
  %v148 = vld [vmem:[%s1 + $0x118] sm:$0xf]
  %v149 = vld [vmem:[%s1 + $0x11c] sm:$0xf]
  %v150 = vld [vmem:[%s1 + $0x120] sm:$0xf]
  %v151 = vld [vmem:[%s1 + $0x124] sm:$0xf]
  %v152 = vld [vmem:[%s1 + $0x128] sm:$0xf]
  %v153 = vld [vmem:[%s1 + $0x12c] sm:$0xf]
  %v154 = vld [vmem:[%s1 + $0x130] sm:$0xf]
  %v155 = vld [vmem:[%s1 + $0x134] sm:$0xf]
  %v156 = vld [vmem:[%s1 + $0x138] sm:$0xf]
  %v157 = vld [vmem:[%s1 + $0x13c] sm:$0xf]
  %v158 = vld [vmem:[%s1 + $0x140] sm:$0xf]
  %v159 = vld [vmem:[%s1 + $0x144] sm:$0xf]
  %v160 = vld [vmem:[%s1 + $0x148] sm:$0xf]
  %v161 = vld [vmem:[%s1 + $0x14c] sm:$0xf]
  %v162 = vld [vmem:[%s1 + $0x150] sm:$0xf]
  %v163 = vld [vmem:[%s1 + $0x154] sm:$0xf]
  %v164 = vld [vmem:[%s1 + $0x158] sm:$0xf]
  %v165 = vld [vmem:[%s1 + $0x15c] sm:$0xf]
  %v166 = vld [vmem:[%s1 + $0x160] sm:$0xf]
  %v167 = vld [vmem:[%s1 + $0x164] sm:$0xf]
  %v168 = vld [vmem:[%s1 + $0x168] sm:$0xf]
  %v169 = vld [vmem:[%s1 + $0x16c] sm:$0xf]
  %v170 = vld [vmem:[%s1 + $0x170] sm:$0xf]
  %v171 = vld [vmem:[%s1 + $0x174] sm:$0xf]
  %v172 = vld [vmem:[%s1 + $0x178] sm:$0xf]
  %v173 = vld [vmem:[%s1 + $0x17c] sm:$0xf]
  %v174 = vld [vmem:[%s1 + $0x180] sm:$0xf]
  %v175 = vld [vmem:[%s1 + $0x184] sm:$0xf]
  %v176 = vld [vmem:[%s1 + $0x188] sm:$0xf]
  %v177 = vld [vmem:[%s1 + $0x18c] sm:$0xf]
  %v178 = vld [vmem:[%s1 + $0x190] sm:$0xf]
  %v179 = vld [vmem:[%s1 + $0x194] sm:$0xf]
  %v180 = vld [vmem:[%s1 + $0x198] sm:$0xf]
  %v181 = vld [vmem:[%s1 + $0x19c] sm:$0xf]
  %v182 = vld [vmem:[%s1 + $0x1a0] sm:$0xf]
  %v183 = vld [vmem:[%s1 + $0x1a4] sm:$0xf]
  %v184 = vld [vmem:[%s1 + $0x1a8] sm:$0xf]
  %v185 = vld [vmem:[%s1 + $0x1ac] sm:$0xf]
  %v186 = vld [vmem:[%s1 + $0x1b0] sm:$0xf]
  %v187 = vld [vmem:[%s1 + $0x1b4] sm:$0xf]
  %v188 = vld [vmem:[%s1 + $0x1b8] sm:$0xf]
  %v189 = vld [vmem:[%s1 + $0x1bc] sm:$0xf]
  %v190 = vld [vmem:[%s1 + $0x1c0] sm:$0xf]
  %v191 = vld [vmem:[%s1 + $0x1c4] sm:$0xf]
  %v192 = vld [vmem:[%s1 + $0x1c8] sm:$0xf]
  %v193 = vld [vmem:[%s1 + $0x1cc] sm:$0xf]
  %v194 = vld [vmem:[%s1 + $0x1d0] sm:$0xf]
  %v195 = vld [vmem:[%s1 + $0x1d4] sm:$0xf]
  %v196 = vld [vmem:[%s1 + $0x1d8] sm:$0xf]
  %v197 = vld [vmem:[%s1 + $0x1dc] sm:$0xf]
  %v198 = vld [vmem:[%s1 + $0x1e0] sm:$0xf]
  %v199 = vld [vmem:[%s1 + $0x1e4] sm:$0xf]
  %v200 = vld [vmem:[%s1 + $0x1e8] sm:$0xf]
  %v201 = vld [vmem:[%s1 + $0x1ec] sm:$0xf]
  %v202 = vld [vmem:[%s1 + $0x1f0] sm:$0xf]
  %v203 = vld [vmem:[%s1 + $0x1f4] sm:$0xf]
  %v204 = vld [vmem:[%s1 + $0x1f8] sm:$0xf]
  %v205 = vld [vmem:[%s1 + $0x1fc] sm:$0xf]
  %v206 = vld [vmem:[%s2] sm:$0x1]
  %v208 = vperm.slane %v206, 0
  %v274 = vunpack.c.l.b16 %v14
  %v275 = vunpack.c.h.b16 %v14
  %v276 = vunpack.c.l.b16 %v15
  %v277 = vunpack.c.h.b16 %v15
  %v278 = vunpack.c.l.b16 %v16
  %v279 = vunpack.c.h.b16 %v16
  %v280 = vunpack.c.l.b16 %v17
  %v281 = vunpack.c.h.b16 %v17
  %v282 = vunpack.c.l.b16 %v18
  %v283 = vunpack.c.h.b16 %v18
  %v284 = vunpack.c.l.b16 %v19
  %v285 = vunpack.c.h.b16 %v19
  %v286 = vunpack.c.l.b16 %v20
  %v287 = vunpack.c.h.b16 %v20
  %v288 = vunpack.c.l.b16 %v21
  %v289 = vunpack.c.h.b16 %v21
  %v290 = vunpack.c.l.b16 %v22
  %v291 = vunpack.c.h.b16 %v22
  %v292 = vunpack.c.l.b16 %v23
  %v293 = vunpack.c.h.b16 %v23
  %v294 = vunpack.c.l.b16 %v24
  %v295 = vunpack.c.h.b16 %v24
  %v296 = vunpack.c.l.b16 %v25
  %v297 = vunpack.c.h.b16 %v25
  %v298 = vunpack.c.l.b16 %v26
  %v299 = vunpack.c.h.b16 %v26
  %v300 = vunpack.c.l.b16 %v27
  %v301 = vunpack.c.h.b16 %v27
  %v302 = vunpack.c.l.b16 %v28
  %v303 = vunpack.c.h.b16 %v28
  %v304 = vunpack.c.l.b16 %v29
  %v305 = vunpack.c.h.b16 %v29
  %v306 = vunpack.c.l.b16 %v30
  %v307 = vunpack.c.h.b16 %v30
  %v308 = vunpack.c.l.b16 %v31
  %v309 = vunpack.c.h.b16 %v31
  %v310 = vunpack.c.l.b16 %v32
  %v311 = vunpack.c.h.b16 %v32
  %v312 = vunpack.c.l.b16 %v33
  %v313 = vunpack.c.h.b16 %v33
  %v314 = vunpack.c.l.b16 %v34
  %v315 = vunpack.c.h.b16 %v34
  %v316 = vunpack.c.l.b16 %v35
  %v317 = vunpack.c.h.b16 %v35
  %v318 = vunpack.c.l.b16 %v36
  %v319 = vunpack.c.h.b16 %v36
  %v320 = vunpack.c.l.b16 %v37
  %v321 = vunpack.c.h.b16 %v37
  %v322 = vunpack.c.l.b16 %v38
  %v323 = vunpack.c.h.b16 %v38
  %v324 = vunpack.c.l.b16 %v39
  %v325 = vunpack.c.h.b16 %v39
  %v326 = vunpack.c.l.b16 %v40
  %v327 = vunpack.c.h.b16 %v40
  %v328 = vunpack.c.l.b16 %v41
  %v329 = vunpack.c.h.b16 %v41
  %v330 = vunpack.c.l.b16 %v42
  %v331 = vunpack.c.h.b16 %v42
  %v332 = vunpack.c.l.b16 %v43
  %v333 = vunpack.c.h.b16 %v43
  %v334 = vunpack.c.l.b16 %v44
  %v335 = vunpack.c.h.b16 %v44
  %v336 = vunpack.c.l.b16 %v45
  %v337 = vunpack.c.h.b16 %v45
  %v338 = vunpack.c.l.b16 %v46
  %v339 = vunpack.c.h.b16 %v46
  %v340 = vunpack.c.l.b16 %v47
  %v341 = vunpack.c.h.b16 %v47
  %v342 = vunpack.c.l.b16 %v48
  %v343 = vunpack.c.h.b16 %v48
  %v344 = vunpack.c.l.b16 %v49
  %v345 = vunpack.c.h.b16 %v49
  %v346 = vunpack.c.l.b16 %v50
  %v347 = vunpack.c.h.b16 %v50
  %v348 = vunpack.c.l.b16 %v51
  %v349 = vunpack.c.h.b16 %v51
  %v350 = vunpack.c.l.b16 %v52
  %v351 = vunpack.c.h.b16 %v52
  %v352 = vunpack.c.l.b16 %v53
  %v353 = vunpack.c.h.b16 %v53
  %v354 = vunpack.c.l.b16 %v54
  %v355 = vunpack.c.h.b16 %v54
  %v356 = vunpack.c.l.b16 %v55
  %v357 = vunpack.c.h.b16 %v55
  %v358 = vunpack.c.l.b16 %v56
  %v359 = vunpack.c.h.b16 %v56
  %v360 = vunpack.c.l.b16 %v57
  %v361 = vunpack.c.h.b16 %v57
  %v362 = vunpack.c.l.b16 %v58
  %v363 = vunpack.c.h.b16 %v58
  %v364 = vunpack.c.l.b16 %v59
  %v365 = vunpack.c.h.b16 %v59
  %v366 = vunpack.c.l.b16 %v60
  %v367 = vunpack.c.h.b16 %v60
  %v368 = vunpack.c.l.b16 %v61
  %v369 = vunpack.c.h.b16 %v61
  %v370 = vunpack.c.l.b16 %v62
  %v371 = vunpack.c.h.b16 %v62
  %v372 = vunpack.c.l.b16 %v63
  %v373 = vunpack.c.h.b16 %v63
  %v374 = vunpack.c.l.b16 %v64
  %v375 = vunpack.c.h.b16 %v64
  %v376 = vunpack.c.l.b16 %v65
  %v377 = vunpack.c.h.b16 %v65
  %v378 = vunpack.c.l.b16 %v66
  %v379 = vunpack.c.h.b16 %v66
  %v380 = vunpack.c.l.b16 %v67
  %v381 = vunpack.c.h.b16 %v67
  %v382 = vunpack.c.l.b16 %v68
  %v383 = vunpack.c.h.b16 %v68
  %v384 = vunpack.c.l.b16 %v69
  %v385 = vunpack.c.h.b16 %v69
  %v386 = vunpack.c.l.b16 %v70
  %v387 = vunpack.c.h.b16 %v70
  %v388 = vunpack.c.l.b16 %v71
  %v389 = vunpack.c.h.b16 %v71
  %v390 = vunpack.c.l.b16 %v72
  %v391 = vunpack.c.h.b16 %v72
  %v392 = vunpack.c.l.b16 %v73
  %v393 = vunpack.c.h.b16 %v73
  %v394 = vunpack.c.l.b16 %v74
  %v395 = vunpack.c.h.b16 %v74
  %v396 = vunpack.c.l.b16 %v75
  %v397 = vunpack.c.h.b16 %v75
  %v398 = vunpack.c.l.b16 %v76
  %v399 = vunpack.c.h.b16 %v76
  %v400 = vunpack.c.l.b16 %v77
  %v401 = vunpack.c.h.b16 %v77
  %v402 = vpack.c.b16 %v282, %v274
  %v403 = vpack.c.b16 %v283, %v275
  %v404 = vpack.c.b16 %v284, %v276
  %v405 = vpack.c.b16 %v285, %v277
  %v406 = vpack.c.b16 %v286, %v278
  %v407 = vpack.c.b16 %v287, %v279
  %v408 = vpack.c.b16 %v288, %v280
  %v409 = vpack.c.b16 %v289, %v281
  %v410 = vpack.c.b16 %v298, %v290
  %v411 = vpack.c.b16 %v299, %v291
  %v412 = vpack.c.b16 %v300, %v292
  %v413 = vpack.c.b16 %v301, %v293
  %v414 = vpack.c.b16 %v302, %v294
  %v415 = vpack.c.b16 %v303, %v295
  %v416 = vpack.c.b16 %v304, %v296
  %v417 = vpack.c.b16 %v305, %v297
  %v418 = vpack.c.b16 %v314, %v306
  %v419 = vpack.c.b16 %v315, %v307
  %v420 = vpack.c.b16 %v316, %v308
  %v421 = vpack.c.b16 %v317, %v309
  %v422 = vpack.c.b16 %v318, %v310
  %v423 = vpack.c.b16 %v319, %v311
  %v424 = vpack.c.b16 %v320, %v312
  %v425 = vpack.c.b16 %v321, %v313
  %v426 = vpack.c.b16 %v330, %v322
  %v427 = vpack.c.b16 %v331, %v323
  %v428 = vpack.c.b16 %v332, %v324
  %v429 = vpack.c.b16 %v333, %v325
  %v430 = vpack.c.b16 %v334, %v326
  %v431 = vpack.c.b16 %v335, %v327
  %v432 = vpack.c.b16 %v336, %v328
  %v433 = vpack.c.b16 %v337, %v329
  %v434 = vpack.c.b16 %v346, %v338
  %v435 = vpack.c.b16 %v347, %v339
  %v436 = vpack.c.b16 %v348, %v340
  %v437 = vpack.c.b16 %v349, %v341
  %v438 = vpack.c.b16 %v350, %v342
  %v439 = vpack.c.b16 %v351, %v343
  %v440 = vpack.c.b16 %v352, %v344
  %v441 = vpack.c.b16 %v353, %v345
  %v442 = vpack.c.b16 %v362, %v354
  %v443 = vpack.c.b16 %v363, %v355
  %v444 = vpack.c.b16 %v364, %v356
  %v445 = vpack.c.b16 %v365, %v357
  %v446 = vpack.c.b16 %v366, %v358
  %v447 = vpack.c.b16 %v367, %v359
  %v448 = vpack.c.b16 %v368, %v360
  %v449 = vpack.c.b16 %v369, %v361
  %v450 = vpack.c.b16 %v378, %v370
  %v451 = vpack.c.b16 %v379, %v371
  %v452 = vpack.c.b16 %v380, %v372
  %v453 = vpack.c.b16 %v381, %v373
  %v454 = vpack.c.b16 %v382, %v374
  %v455 = vpack.c.b16 %v383, %v375
  %v456 = vpack.c.b16 %v384, %v376
  %v457 = vpack.c.b16 %v385, %v377
  %v458 = vpack.c.b16 %v394, %v386
  %v459 = vpack.c.b16 %v395, %v387
  %v460 = vpack.c.b16 %v396, %v388
  %v461 = vpack.c.b16 %v397, %v389
  %v462 = vpack.c.b16 %v398, %v390
  %v463 = vpack.c.b16 %v399, %v391
  %v464 = vpack.c.b16 %v400, %v392
  %v465 = vpack.c.b16 %v401, %v393
  %v658 = vunpack.c.l.b16 %v78
  %v659 = vunpack.c.l.b16 %v79
  %v660 = vunpack.c.l.b16 %v80
  %v661 = vunpack.c.l.b16 %v81
  %v662 = vunpack.c.l.b16 %v82
  %v663 = vunpack.c.l.b16 %v83
  %v664 = vunpack.c.l.b16 %v84
  %v665 = vunpack.c.l.b16 %v85
  %v666 = vunpack.c.l.b16 %v86
  %v667 = vunpack.c.l.b16 %v87
  %v668 = vunpack.c.l.b16 %v88
  %v669 = vunpack.c.l.b16 %v89
  %v670 = vunpack.c.l.b16 %v90
  %v671 = vunpack.c.l.b16 %v91
  %v672 = vunpack.c.l.b16 %v92
  %v673 = vunpack.c.l.b16 %v93
  %v674 = vunpack.c.l.b16 %v94
  %v675 = vunpack.c.l.b16 %v95
  %v676 = vunpack.c.l.b16 %v96
  %v677 = vunpack.c.l.b16 %v97
  %v678 = vunpack.c.l.b16 %v98
  %v679 = vunpack.c.l.b16 %v99
  %v680 = vunpack.c.l.b16 %v100
  %v681 = vunpack.c.l.b16 %v101
  %v682 = vunpack.c.l.b16 %v102
  %v683 = vunpack.c.l.b16 %v103
  %v684 = vunpack.c.l.b16 %v104
  %v685 = vunpack.c.l.b16 %v105
  %v686 = vunpack.c.l.b16 %v106
  %v687 = vunpack.c.l.b16 %v107
  %v688 = vunpack.c.l.b16 %v108
  %v689 = vunpack.c.l.b16 %v109
  %v690 = vunpack.c.l.b16 %v110
  %v691 = vunpack.c.l.b16 %v111
  %v692 = vunpack.c.l.b16 %v112
  %v693 = vunpack.c.l.b16 %v113
  %v694 = vunpack.c.l.b16 %v114
  %v695 = vunpack.c.l.b16 %v115
  %v696 = vunpack.c.l.b16 %v116
  %v697 = vunpack.c.l.b16 %v117
  %v698 = vunpack.c.l.b16 %v118
  %v699 = vunpack.c.l.b16 %v119
  %v700 = vunpack.c.l.b16 %v120
  %v701 = vunpack.c.l.b16 %v121
  %v702 = vunpack.c.l.b16 %v122
  %v703 = vunpack.c.l.b16 %v123
  %v704 = vunpack.c.l.b16 %v124
  %v705 = vunpack.c.l.b16 %v125
  %v706 = vunpack.c.l.b16 %v126
  %v707 = vunpack.c.l.b16 %v127
  %v708 = vunpack.c.l.b16 %v128
  %v709 = vunpack.c.l.b16 %v129
  %v710 = vunpack.c.l.b16 %v130
  %v711 = vunpack.c.l.b16 %v131
  %v712 = vunpack.c.l.b16 %v132
  %v713 = vunpack.c.l.b16 %v133
  %v714 = vunpack.c.l.b16 %v134
  %v715 = vunpack.c.l.b16 %v135
  %v716 = vunpack.c.l.b16 %v136
  %v717 = vunpack.c.l.b16 %v137
  %v718 = vunpack.c.l.b16 %v138
  %v719 = vunpack.c.l.b16 %v139
  %v720 = vunpack.c.l.b16 %v140
  %v721 = vunpack.c.l.b16 %v141
  %v722 = vunpack.c.l.b16 %v142
  %v723 = vunpack.c.l.b16 %v143
  %v724 = vunpack.c.l.b16 %v144
  %v725 = vunpack.c.l.b16 %v145
  %v726 = vunpack.c.l.b16 %v146
  %v727 = vunpack.c.l.b16 %v147
  %v728 = vunpack.c.l.b16 %v148
  %v729 = vunpack.c.l.b16 %v149
  %v730 = vunpack.c.l.b16 %v150
  %v731 = vunpack.c.l.b16 %v151
  %v732 = vunpack.c.l.b16 %v152
  %v733 = vunpack.c.l.b16 %v153
  %v734 = vunpack.c.l.b16 %v154
  %v735 = vunpack.c.l.b16 %v155
  %v736 = vunpack.c.l.b16 %v156
  %v737 = vunpack.c.l.b16 %v157
  %v738 = vunpack.c.l.b16 %v158
  %v739 = vunpack.c.l.b16 %v159
  %v740 = vunpack.c.l.b16 %v160
  %v741 = vunpack.c.l.b16 %v161
  %v742 = vunpack.c.l.b16 %v162
  %v743 = vunpack.c.l.b16 %v163
  %v744 = vunpack.c.l.b16 %v164
  %v745 = vunpack.c.l.b16 %v165
  %v746 = vunpack.c.l.b16 %v166
  %v747 = vunpack.c.l.b16 %v167
  %v748 = vunpack.c.l.b16 %v168
  %v749 = vunpack.c.l.b16 %v169
  %v750 = vunpack.c.l.b16 %v170
  %v751 = vunpack.c.l.b16 %v171
  %v752 = vunpack.c.l.b16 %v172
  %v753 = vunpack.c.l.b16 %v173
  %v754 = vunpack.c.l.b16 %v174
  %v755 = vunpack.c.l.b16 %v175
  %v756 = vunpack.c.l.b16 %v176
  %v757 = vunpack.c.l.b16 %v177
  %v758 = vunpack.c.l.b16 %v178
  %v759 = vunpack.c.l.b16 %v179
  %v760 = vunpack.c.l.b16 %v180
  %v761 = vunpack.c.l.b16 %v181
  %v762 = vunpack.c.l.b16 %v182
  %v763 = vunpack.c.l.b16 %v183
  %v764 = vunpack.c.l.b16 %v184
  %v765 = vunpack.c.l.b16 %v185
  %v766 = vunpack.c.l.b16 %v186
  %v767 = vunpack.c.l.b16 %v187
  %v768 = vunpack.c.l.b16 %v188
  %v769 = vunpack.c.l.b16 %v189
  %v770 = vunpack.c.l.b16 %v190
  %v771 = vunpack.c.l.b16 %v191
  %v772 = vunpack.c.l.b16 %v192
  %v773 = vunpack.c.l.b16 %v193
  %v774 = vunpack.c.l.b16 %v194
  %v775 = vunpack.c.l.b16 %v195
  %v776 = vunpack.c.l.b16 %v196
  %v777 = vunpack.c.l.b16 %v197
  %v778 = vunpack.c.l.b16 %v198
  %v779 = vunpack.c.l.b16 %v199
  %v780 = vunpack.c.l.b16 %v200
  %v781 = vunpack.c.l.b16 %v201
  %v782 = vunpack.c.l.b16 %v202
  %v783 = vunpack.c.l.b16 %v203
  %v784 = vunpack.c.l.b16 %v204
  %v785 = vunpack.c.l.b16 %v205
  %v786 = vpack.c.b16 %v659, %v658
  %v787 = vpack.c.b16 %v661, %v660
  %v788 = vpack.c.b16 %v663, %v662
  %v789 = vpack.c.b16 %v665, %v664
  %v790 = vpack.c.b16 %v667, %v666
  %v791 = vpack.c.b16 %v669, %v668
  %v792 = vpack.c.b16 %v671, %v670
  %v793 = vpack.c.b16 %v673, %v672
  %v794 = vpack.c.b16 %v675, %v674
  %v795 = vpack.c.b16 %v677, %v676
  %v796 = vpack.c.b16 %v679, %v678
  %v797 = vpack.c.b16 %v681, %v680
  %v798 = vpack.c.b16 %v683, %v682
  %v799 = vpack.c.b16 %v685, %v684
  %v800 = vpack.c.b16 %v687, %v686
  %v801 = vpack.c.b16 %v689, %v688
  %v802 = vpack.c.b16 %v691, %v690
  %v803 = vpack.c.b16 %v693, %v692
  %v804 = vpack.c.b16 %v695, %v694
  %v805 = vpack.c.b16 %v697, %v696
  %v806 = vpack.c.b16 %v699, %v698
  %v807 = vpack.c.b16 %v701, %v700
  %v808 = vpack.c.b16 %v703, %v702
  %v809 = vpack.c.b16 %v705, %v704
  %v810 = vpack.c.b16 %v707, %v706
  %v811 = vpack.c.b16 %v709, %v708
  %v812 = vpack.c.b16 %v711, %v710
  %v813 = vpack.c.b16 %v713, %v712
  %v814 = vpack.c.b16 %v715, %v714
  %v815 = vpack.c.b16 %v717, %v716
  %v816 = vpack.c.b16 %v719, %v718
  %v817 = vpack.c.b16 %v721, %v720
  %v818 = vpack.c.b16 %v723, %v722
  %v819 = vpack.c.b16 %v725, %v724
  %v820 = vpack.c.b16 %v727, %v726
  %v821 = vpack.c.b16 %v729, %v728
  %v822 = vpack.c.b16 %v731, %v730
  %v823 = vpack.c.b16 %v733, %v732
  %v824 = vpack.c.b16 %v735, %v734
  %v825 = vpack.c.b16 %v737, %v736
  %v826 = vpack.c.b16 %v739, %v738
  %v827 = vpack.c.b16 %v741, %v740
  %v828 = vpack.c.b16 %v743, %v742
  %v829 = vpack.c.b16 %v745, %v744
  %v830 = vpack.c.b16 %v747, %v746
  %v831 = vpack.c.b16 %v749, %v748
  %v832 = vpack.c.b16 %v751, %v750
  %v833 = vpack.c.b16 %v753, %v752
  %v834 = vpack.c.b16 %v755, %v754
  %v835 = vpack.c.b16 %v757, %v756
  %v836 = vpack.c.b16 %v759, %v758
  %v837 = vpack.c.b16 %v761, %v760
  %v838 = vpack.c.b16 %v763, %v762
  %v839 = vpack.c.b16 %v765, %v764
  %v840 = vpack.c.b16 %v767, %v766
  %v841 = vpack.c.b16 %v769, %v768
  %v842 = vpack.c.b16 %v771, %v770
  %v843 = vpack.c.b16 %v773, %v772
  %v844 = vpack.c.b16 %v775, %v774
  %v845 = vpack.c.b16 %v777, %v776
  %v846 = vpack.c.b16 %v779, %v778
  %v847 = vpack.c.b16 %v781, %v780
  %v848 = vpack.c.b16 %v783, %v782
  %v849 = vpack.c.b16 %v785, %v784
  %914 = vmatpush.bf16.msra.mxu0 %v793
  %915 = vmatpush.bf16.msra.mxu0 %v792
  %916 = vmatpush.bf16.msra.mxu0 %v791
  %917 = vmatpush.bf16.msra.mxu0 %v790
  %918 = vmatpush.bf16.msra.mxu0 %v789
  %919 = vmatpush.bf16.msra.mxu0 %v788
  %920 = vmatpush.bf16.msra.mxu0 %v787
  %921 = vmatpush.bf16.msra.mxu0 %v786
  %922 = vmatmul.bf16.gmra.mxu0 %v402
  %v923 = vpop.f32.mrf.mxu0
  %v924 = vadd.f32 %v208, %v923
  %v925 = vpop.f32.mrf.mxu0
  %v926 = vadd.f32 %v208, %v925
  %927 = vmatmul.bf16.gmra.mxu0 %v410
  %v928 = vpop.f32.mrf.mxu0
  %v929 = vadd.f32 %v208, %v928
  %v930 = vpop.f32.mrf.mxu0
  %v931 = vadd.f32 %v208, %v930
  %932 = vmatmul.bf16.gmra.mxu0 %v418
  %v933 = vpop.f32.mrf.mxu0
  %v934 = vadd.f32 %v208, %v933
  %v935 = vpop.f32.mrf.mxu0
  %v936 = vadd.f32 %v208, %v935
  %937 = vmatmul.bf16.gmra.mxu0 %v426
  %v938 = vpop.f32.mrf.mxu0
  %v939 = vadd.f32 %v208, %v938
  %v940 = vpop.f32.mrf.mxu0
  %v941 = vadd.f32 %v208, %v940
  %942 = vmatmul.bf16.gmra.mxu0 %v434
  %v943 = vpop.f32.mrf.mxu0
  %v944 = vadd.f32 %v208, %v943
  %v945 = vpop.f32.mrf.mxu0
  %v946 = vadd.f32 %v208, %v945
  %947 = vmatmul.bf16.gmra.mxu0 %v442
  %v948 = vpop.f32.mrf.mxu0
  %v949 = vadd.f32 %v208, %v948
  %v950 = vpop.f32.mrf.mxu0
  %v951 = vadd.f32 %v208, %v950
  %952 = vmatmul.bf16.gmra.mxu0 %v450
  %v953 = vpop.f32.mrf.mxu0
  %v954 = vadd.f32 %v208, %v953
  %v955 = vpop.f32.mrf.mxu0
  %v956 = vadd.f32 %v208, %v955
  %957 = vmatmul.bf16.gmra.mxu0 %v458
  %v958 = vpop.f32.mrf.mxu0
  %v959 = vadd.f32 %v208, %v958
  %v960 = vpop.f32.mrf.mxu0
  %v961 = vadd.f32 %v208, %v960
  %962 = vdwg.mxu0
  %963 = vmatpush.bf16.msra.mxu0 %v801
  %964 = vmatpush.bf16.msra.mxu0 %v800
  %965 = vmatpush.bf16.msra.mxu0 %v799
  %966 = vmatpush.bf16.msra.mxu0 %v798
  %967 = vmatpush.bf16.msra.mxu0 %v797
  %968 = vmatpush.bf16.msra.mxu0 %v796
  %969 = vmatpush.bf16.msra.mxu0 %v795
  %970 = vmatpush.bf16.msra.mxu0 %v794
  %971 = vmatmul.bf16.gmra.mxu0 %v403
  %v972 = vpop.f32.mrf.mxu0
  %v973 = vadd.f32 %v924, %v972
  %v974 = vpop.f32.mrf.mxu0
  %v975 = vadd.f32 %v926, %v974
  %976 = vmatmul.bf16.gmra.mxu0 %v411
  %v977 = vpop.f32.mrf.mxu0
  %v978 = vadd.f32 %v929, %v977
  %v979 = vpop.f32.mrf.mxu0
  %v980 = vadd.f32 %v931, %v979
  %981 = vmatmul.bf16.gmra.mxu0 %v419
  %v982 = vpop.f32.mrf.mxu0
  %v983 = vadd.f32 %v934, %v982
  %v984 = vpop.f32.mrf.mxu0
  %v985 = vadd.f32 %v936, %v984
  %986 = vmatmul.bf16.gmra.mxu0 %v427
  %v987 = vpop.f32.mrf.mxu0
  %v988 = vadd.f32 %v939, %v987
  %v989 = vpop.f32.mrf.mxu0
  %v990 = vadd.f32 %v941, %v989
  %991 = vmatmul.bf16.gmra.mxu0 %v435
  %v992 = vpop.f32.mrf.mxu0
  %v993 = vadd.f32 %v944, %v992
  %v994 = vpop.f32.mrf.mxu0
  %v995 = vadd.f32 %v946, %v994
  %996 = vmatmul.bf16.gmra.mxu0 %v443
  %v997 = vpop.f32.mrf.mxu0
  %v998 = vadd.f32 %v949, %v997
  %v999 = vpop.f32.mrf.mxu0
  %v1000 = vadd.f32 %v951, %v999
  %1001 = vmatmul.bf16.gmra.mxu0 %v451
  %v1002 = vpop.f32.mrf.mxu0
  %v1003 = vadd.f32 %v954, %v1002
  %v1004 = vpop.f32.mrf.mxu0
  %v1005 = vadd.f32 %v956, %v1004
  %1006 = vmatmul.bf16.gmra.mxu0 %v459
  %v1007 = vpop.f32.mrf.mxu0
  %v1008 = vadd.f32 %v959, %v1007
  %v1009 = vpop.f32.mrf.mxu0
  %v1010 = vadd.f32 %v961, %v1009
  %1011 = vdwg.mxu0
  %1012 = vmatpush.bf16.msra.mxu0 %v809
  %1013 = vmatpush.bf16.msra.mxu0 %v808
  %1014 = vmatpush.bf16.msra.mxu0 %v807
  %1015 = vmatpush.bf16.msra.mxu0 %v806
  %1016 = vmatpush.bf16.msra.mxu0 %v805
  %1017 = vmatpush.bf16.msra.mxu0 %v804
  %1018 = vmatpush.bf16.msra.mxu0 %v803
  %1019 = vmatpush.bf16.msra.mxu0 %v802
  %1020 = vmatmul.bf16.gmra.mxu0 %v404
  %v1021 = vpop.f32.mrf.mxu0
  %v1022 = vadd.f32 %v973, %v1021
  %v1023 = vpop.f32.mrf.mxu0
  %v1024 = vadd.f32 %v975, %v1023
  %1025 = vmatmul.bf16.gmra.mxu0 %v412
  %v1026 = vpop.f32.mrf.mxu0
  %v1027 = vadd.f32 %v978, %v1026
  %v1028 = vpop.f32.mrf.mxu0
  %v1029 = vadd.f32 %v980, %v1028
  %1030 = vmatmul.bf16.gmra.mxu0 %v420
  %v1031 = vpop.f32.mrf.mxu0
  %v1032 = vadd.f32 %v983, %v1031
  %v1033 = vpop.f32.mrf.mxu0
  %v1034 = vadd.f32 %v985, %v1033
  %1035 = vmatmul.bf16.gmra.mxu0 %v428
  %v1036 = vpop.f32.mrf.mxu0
  %v1037 = vadd.f32 %v988, %v1036
  %v1038 = vpop.f32.mrf.mxu0
  %v1039 = vadd.f32 %v990, %v1038
  %1040 = vmatmul.bf16.gmra.mxu0 %v436
  %v1041 = vpop.f32.mrf.mxu0
  %v1042 = vadd.f32 %v993, %v1041
  %v1043 = vpop.f32.mrf.mxu0
  %v1044 = vadd.f32 %v995, %v1043
  %1045 = vmatmul.bf16.gmra.mxu0 %v444
  %v1046 = vpop.f32.mrf.mxu0
  %v1047 = vadd.f32 %v998, %v1046
  %v1048 = vpop.f32.mrf.mxu0
  %v1049 = vadd.f32 %v1000, %v1048
  %1050 = vmatmul.bf16.gmra.mxu0 %v452
  %v1051 = vpop.f32.mrf.mxu0
  %v1052 = vadd.f32 %v1003, %v1051
  %v1053 = vpop.f32.mrf.mxu0
  %v1054 = vadd.f32 %v1005, %v1053
  %1055 = vmatmul.bf16.gmra.mxu0 %v460
  %v1056 = vpop.f32.mrf.mxu0
  %v1057 = vadd.f32 %v1008, %v1056
  %v1058 = vpop.f32.mrf.mxu0
  %v1059 = vadd.f32 %v1010, %v1058
  %1060 = vdwg.mxu0
  %1061 = vmatpush.bf16.msra.mxu0 %v817
  %1062 = vmatpush.bf16.msra.mxu0 %v816
  %1063 = vmatpush.bf16.msra.mxu0 %v815
  %1064 = vmatpush.bf16.msra.mxu0 %v814
  %1065 = vmatpush.bf16.msra.mxu0 %v813
  %1066 = vmatpush.bf16.msra.mxu0 %v812
  %1067 = vmatpush.bf16.msra.mxu0 %v811
  %1068 = vmatpush.bf16.msra.mxu0 %v810
  %1069 = vmatmul.bf16.gmra.mxu0 %v405
  %v1070 = vpop.f32.mrf.mxu0
  %v1071 = vadd.f32 %v1022, %v1070
  %v1072 = vpop.f32.mrf.mxu0
  %v1073 = vadd.f32 %v1024, %v1072
  %1074 = vmatmul.bf16.gmra.mxu0 %v413
  %v1075 = vpop.f32.mrf.mxu0
  %v1076 = vadd.f32 %v1027, %v1075
  %v1077 = vpop.f32.mrf.mxu0
  %v1078 = vadd.f32 %v1029, %v1077
  %1079 = vmatmul.bf16.gmra.mxu0 %v421
  %v1080 = vpop.f32.mrf.mxu0
  %v1081 = vadd.f32 %v1032, %v1080
  %v1082 = vpop.f32.mrf.mxu0
  %v1083 = vadd.f32 %v1034, %v1082
  %1084 = vmatmul.bf16.gmra.mxu0 %v429
  %v1085 = vpop.f32.mrf.mxu0
  %v1086 = vadd.f32 %v1037, %v1085
  %v1087 = vpop.f32.mrf.mxu0
  %v1088 = vadd.f32 %v1039, %v1087
  %1089 = vmatmul.bf16.gmra.mxu0 %v437
  %v1090 = vpop.f32.mrf.mxu0
  %v1091 = vadd.f32 %v1042, %v1090
  %v1092 = vpop.f32.mrf.mxu0
  %v1093 = vadd.f32 %v1044, %v1092
  %1094 = vmatmul.bf16.gmra.mxu0 %v445
  %v1095 = vpop.f32.mrf.mxu0
  %v1096 = vadd.f32 %v1047, %v1095
  %v1097 = vpop.f32.mrf.mxu0
  %v1098 = vadd.f32 %v1049, %v1097
  %1099 = vmatmul.bf16.gmra.mxu0 %v453
  %v1100 = vpop.f32.mrf.mxu0
  %v1101 = vadd.f32 %v1052, %v1100
  %v1102 = vpop.f32.mrf.mxu0
  %v1103 = vadd.f32 %v1054, %v1102
  %1104 = vmatmul.bf16.gmra.mxu0 %v461
  %v1105 = vpop.f32.mrf.mxu0
  %v1106 = vadd.f32 %v1057, %v1105
  %v1107 = vpop.f32.mrf.mxu0
  %v1108 = vadd.f32 %v1059, %v1107
  %1109 = vdwg.mxu0
  %1110 = vmatpush.bf16.msra.mxu0 %v825
  %1111 = vmatpush.bf16.msra.mxu0 %v824
  %1112 = vmatpush.bf16.msra.mxu0 %v823
  %1113 = vmatpush.bf16.msra.mxu0 %v822
  %1114 = vmatpush.bf16.msra.mxu0 %v821
  %1115 = vmatpush.bf16.msra.mxu0 %v820
  %1116 = vmatpush.bf16.msra.mxu0 %v819
  %1117 = vmatpush.bf16.msra.mxu0 %v818
  %1118 = vmatmul.bf16.gmra.mxu0 %v406
  %v1119 = vpop.f32.mrf.mxu0
  %v1120 = vadd.f32 %v1071, %v1119
  %v1121 = vpop.f32.mrf.mxu0
  %v1122 = vadd.f32 %v1073, %v1121
  %1123 = vmatmul.bf16.gmra.mxu0 %v414
  %v1124 = vpop.f32.mrf.mxu0
  %v1125 = vadd.f32 %v1076, %v1124
  %v1126 = vpop.f32.mrf.mxu0
  %v1127 = vadd.f32 %v1078, %v1126
  %1128 = vmatmul.bf16.gmra.mxu0 %v422
  %v1129 = vpop.f32.mrf.mxu0
  %v1130 = vadd.f32 %v1081, %v1129
  %v1131 = vpop.f32.mrf.mxu0
  %v1132 = vadd.f32 %v1083, %v1131
  %1133 = vmatmul.bf16.gmra.mxu0 %v430
  %v1134 = vpop.f32.mrf.mxu0
  %v1135 = vadd.f32 %v1086, %v1134
  %v1136 = vpop.f32.mrf.mxu0
  %v1137 = vadd.f32 %v1088, %v1136
  %1138 = vmatmul.bf16.gmra.mxu0 %v438
  %v1139 = vpop.f32.mrf.mxu0
  %v1140 = vadd.f32 %v1091, %v1139
  %v1141 = vpop.f32.mrf.mxu0
  %v1142 = vadd.f32 %v1093, %v1141
  %1143 = vmatmul.bf16.gmra.mxu0 %v446
  %v1144 = vpop.f32.mrf.mxu0
  %v1145 = vadd.f32 %v1096, %v1144
  %v1146 = vpop.f32.mrf.mxu0
  %v1147 = vadd.f32 %v1098, %v1146
  %1148 = vmatmul.bf16.gmra.mxu0 %v454
  %v1149 = vpop.f32.mrf.mxu0
  %v1150 = vadd.f32 %v1101, %v1149
  %v1151 = vpop.f32.mrf.mxu0
  %v1152 = vadd.f32 %v1103, %v1151
  %1153 = vmatmul.bf16.gmra.mxu0 %v462
  %v1154 = vpop.f32.mrf.mxu0
  %v1155 = vadd.f32 %v1106, %v1154
  %v1156 = vpop.f32.mrf.mxu0
  %v1157 = vadd.f32 %v1108, %v1156
  %1158 = vdwg.mxu0
  %1159 = vmatpush.bf16.msra.mxu0 %v833
  %1160 = vmatpush.bf16.msra.mxu0 %v832
  %1161 = vmatpush.bf16.msra.mxu0 %v831
  %1162 = vmatpush.bf16.msra.mxu0 %v830
  %1163 = vmatpush.bf16.msra.mxu0 %v829
  %1164 = vmatpush.bf16.msra.mxu0 %v828
  %1165 = vmatpush.bf16.msra.mxu0 %v827
  %1166 = vmatpush.bf16.msra.mxu0 %v826
  %1167 = vmatmul.bf16.gmra.mxu0 %v407
  %v1168 = vpop.f32.mrf.mxu0
  %v1169 = vadd.f32 %v1120, %v1168
  %v1170 = vpop.f32.mrf.mxu0
  %v1171 = vadd.f32 %v1122, %v1170
  %1172 = vmatmul.bf16.gmra.mxu0 %v415
  %v1173 = vpop.f32.mrf.mxu0
  %v1174 = vadd.f32 %v1125, %v1173
  %v1175 = vpop.f32.mrf.mxu0
  %v1176 = vadd.f32 %v1127, %v1175
  %1177 = vmatmul.bf16.gmra.mxu0 %v423
  %v1178 = vpop.f32.mrf.mxu0
  %v1179 = vadd.f32 %v1130, %v1178
  %v1180 = vpop.f32.mrf.mxu0
  %v1181 = vadd.f32 %v1132, %v1180
  %1182 = vmatmul.bf16.gmra.mxu0 %v431
  %v1183 = vpop.f32.mrf.mxu0
  %v1184 = vadd.f32 %v1135, %v1183
  %v1185 = vpop.f32.mrf.mxu0
  %v1186 = vadd.f32 %v1137, %v1185
  %1187 = vmatmul.bf16.gmra.mxu0 %v439
  %v1188 = vpop.f32.mrf.mxu0
  %v1189 = vadd.f32 %v1140, %v1188
  %v1190 = vpop.f32.mrf.mxu0
  %v1191 = vadd.f32 %v1142, %v1190
  %1192 = vmatmul.bf16.gmra.mxu0 %v447
  %v1193 = vpop.f32.mrf.mxu0
  %v1194 = vadd.f32 %v1145, %v1193
  %v1195 = vpop.f32.mrf.mxu0
  %v1196 = vadd.f32 %v1147, %v1195
  %1197 = vmatmul.bf16.gmra.mxu0 %v455
  %v1198 = vpop.f32.mrf.mxu0
  %v1199 = vadd.f32 %v1150, %v1198
  %v1200 = vpop.f32.mrf.mxu0
  %v1201 = vadd.f32 %v1152, %v1200
  %1202 = vmatmul.bf16.gmra.mxu0 %v463
  %v1203 = vpop.f32.mrf.mxu0
  %v1204 = vadd.f32 %v1155, %v1203
  %v1205 = vpop.f32.mrf.mxu0
  %v1206 = vadd.f32 %v1157, %v1205
  %1207 = vdwg.mxu0
  %1208 = vmatpush.bf16.msra.mxu0 %v841
  %1209 = vmatpush.bf16.msra.mxu0 %v840
  %1210 = vmatpush.bf16.msra.mxu0 %v839
  %1211 = vmatpush.bf16.msra.mxu0 %v838
  %1212 = vmatpush.bf16.msra.mxu0 %v837
  %1213 = vmatpush.bf16.msra.mxu0 %v836
  %1214 = vmatpush.bf16.msra.mxu0 %v835
  %1215 = vmatpush.bf16.msra.mxu0 %v834
  %1216 = vmatmul.bf16.gmra.mxu0 %v408
  %v1217 = vpop.f32.mrf.mxu0
  %v1218 = vadd.f32 %v1169, %v1217
  %v1219 = vpop.f32.mrf.mxu0
  %v1220 = vadd.f32 %v1171, %v1219
  %1221 = vmatmul.bf16.gmra.mxu0 %v416
  %v1222 = vpop.f32.mrf.mxu0
  %v1223 = vadd.f32 %v1174, %v1222
  %v1224 = vpop.f32.mrf.mxu0
  %v1225 = vadd.f32 %v1176, %v1224
  %1226 = vmatmul.bf16.gmra.mxu0 %v424
  %v1227 = vpop.f32.mrf.mxu0
  %v1228 = vadd.f32 %v1179, %v1227
  %v1229 = vpop.f32.mrf.mxu0
  %v1230 = vadd.f32 %v1181, %v1229
  %1231 = vmatmul.bf16.gmra.mxu0 %v432
  %v1232 = vpop.f32.mrf.mxu0
  %v1233 = vadd.f32 %v1184, %v1232
  %v1234 = vpop.f32.mrf.mxu0
  %v1235 = vadd.f32 %v1186, %v1234
  %1236 = vmatmul.bf16.gmra.mxu0 %v440
  %v1237 = vpop.f32.mrf.mxu0
  %v1238 = vadd.f32 %v1189, %v1237
  %v1239 = vpop.f32.mrf.mxu0
  %v1240 = vadd.f32 %v1191, %v1239
  %1241 = vmatmul.bf16.gmra.mxu0 %v448
  %v1242 = vpop.f32.mrf.mxu0
  %v1243 = vadd.f32 %v1194, %v1242
  %v1244 = vpop.f32.mrf.mxu0
  %v1245 = vadd.f32 %v1196, %v1244
  %1246 = vmatmul.bf16.gmra.mxu0 %v456
  %v1247 = vpop.f32.mrf.mxu0
  %v1248 = vadd.f32 %v1199, %v1247
  %v1249 = vpop.f32.mrf.mxu0
  %v1250 = vadd.f32 %v1201, %v1249
  %1251 = vmatmul.bf16.gmra.mxu0 %v464
  %v1252 = vpop.f32.mrf.mxu0
  %v1253 = vadd.f32 %v1204, %v1252
  %v1254 = vpop.f32.mrf.mxu0
  %v1255 = vadd.f32 %v1206, %v1254
  %1256 = vdwg.mxu0
  %1257 = vmatpush.bf16.msra.mxu0 %v849
  %1258 = vmatpush.bf16.msra.mxu0 %v848
  %1259 = vmatpush.bf16.msra.mxu0 %v847
  %1260 = vmatpush.bf16.msra.mxu0 %v846
  %1261 = vmatpush.bf16.msra.mxu0 %v845
  %1262 = vmatpush.bf16.msra.mxu0 %v844
  %1263 = vmatpush.bf16.msra.mxu0 %v843
  %1264 = vmatpush.bf16.msra.mxu0 %v842
  %1265 = vmatmul.bf16.gmra.mxu0 %v409
  %v1266 = vpop.f32.mrf.mxu0
  %v1267 = vadd.f32 %v1218, %v1266
  %v1268 = vpop.f32.mrf.mxu0
  %v1269 = vadd.f32 %v1220, %v1268
  %1270 = vmatmul.bf16.gmra.mxu0 %v417
  %v1271 = vpop.f32.mrf.mxu0
  %v1272 = vadd.f32 %v1223, %v1271
  %v1273 = vpop.f32.mrf.mxu0
  %v1274 = vadd.f32 %v1225, %v1273
  %1275 = vmatmul.bf16.gmra.mxu0 %v425
  %v1276 = vpop.f32.mrf.mxu0
  %v1277 = vadd.f32 %v1228, %v1276
  %v1278 = vpop.f32.mrf.mxu0
  %v1279 = vadd.f32 %v1230, %v1278
  %1280 = vmatmul.bf16.gmra.mxu0 %v433
  %v1281 = vpop.f32.mrf.mxu0
  %v1282 = vadd.f32 %v1233, %v1281
  %v1283 = vpop.f32.mrf.mxu0
  %v1284 = vadd.f32 %v1235, %v1283
  %1285 = vmatmul.bf16.gmra.mxu0 %v441
  %v1286 = vpop.f32.mrf.mxu0
  %v1287 = vadd.f32 %v1238, %v1286
  %v1288 = vpop.f32.mrf.mxu0
  %v1289 = vadd.f32 %v1240, %v1288
  %1290 = vmatmul.bf16.gmra.mxu0 %v449
  %v1291 = vpop.f32.mrf.mxu0
  %v1292 = vadd.f32 %v1243, %v1291
  %v1293 = vpop.f32.mrf.mxu0
  %v1294 = vadd.f32 %v1245, %v1293
  %1295 = vmatmul.bf16.gmra.mxu0 %v457
  %v1296 = vpop.f32.mrf.mxu0
  %v1297 = vadd.f32 %v1248, %v1296
  %v1298 = vpop.f32.mrf.mxu0
  %v1299 = vadd.f32 %v1250, %v1298
  %1300 = vmatmul.bf16.gmra.mxu0 %v465
  %v1301 = vpop.f32.mrf.mxu0
  %v1302 = vadd.f32 %v1253, %v1301
  %v1303 = vpop.f32.mrf.mxu0
  %v1304 = vadd.f32 %v1255, %v1303
  %1305 = vdwg.mxu0
  %1306 = vst [vmem:[%s3] sm:$0xff] %v1267
  %1307 = vst [vmem:[%s3 + $0x8] sm:$0xff] %v1269
  %1308 = vst [vmem:[%s3 + $0x10] sm:$0xff] %v1272
  %1309 = vst [vmem:[%s3 + $0x18] sm:$0xff] %v1274
  %1310 = vst [vmem:[%s3 + $0x20] sm:$0xff] %v1277
  %1311 = vst [vmem:[%s3 + $0x28] sm:$0xff] %v1279
  %1312 = vst [vmem:[%s3 + $0x30] sm:$0xff] %v1282
  %1313 = vst [vmem:[%s3 + $0x38] sm:$0xff] %v1284
  %1314 = vst [vmem:[%s3 + $0x40] sm:$0xff] %v1287
  %1315 = vst [vmem:[%s3 + $0x48] sm:$0xff] %v1289
  %1316 = vst [vmem:[%s3 + $0x50] sm:$0xff] %v1292
  %1317 = vst [vmem:[%s3 + $0x58] sm:$0xff] %v1294
  %1318 = vst [vmem:[%s3 + $0x60] sm:$0xff] %v1297
  %1319 = vst [vmem:[%s3 + $0x68] sm:$0xff] %v1299
  %1320 = vst [vmem:[%s3 + $0x70] sm:$0xff] %v1302
  %1321 = vst [vmem:[%s3 + $0x78] sm:$0xff] %v1304
  // Predicated region
  $region14: #{nlayer_discriminator_forward.15} parent=0 // pred_check
    _
  $region15: #{nlayer_discriminator_forward.15} parent=0 // pred_check_branch
    %1323 = sbr.rel (0) target = $region17
  $region16: #{nlayer_discriminator_forward.15} parent=0 // pred_region
    _
  $region17: #{nlayer_discriminator_forward.15} parent=0 // pred_fallthru
    _
  // Predicated region
  $region18: #{nlayer_discriminator_forward.15} parent=0 // pred_check
    _
  $region19: #{nlayer_discriminator_forward.15} parent=0 // pred_check_branch
    %1325 = sbr.rel (0) target = $region21
  $region20: #{nlayer_discriminator_forward.15} parent=0 // pred_region
    _
  $region21: #{nlayer_discriminator_forward.15} parent=0 // pred_fallthru
    _

</llo_original>
